<compile_context>
chip_gen: v5e
topology: v5e:2x2
jax: 0.10.0
libtpu: 0.0.40
codegen_flags: <defaults>
</compile_context>

<pallas_src>
import jax
import jax.numpy as jnp
from jax.experimental import pallas as pl
from jax.experimental.pallas import tpu as pltpu


def _fused_mlp_kernel(x_ref, w1_ref, b1_ref, w2_ref, b2_ref,
                      w3_ref, b3_ref, w4_ref, b4_ref, o_ref):
    """Whole MLP forward for one batch tile; activations stay on-chip."""
    h = jnp.dot(x_ref[...], w1_ref[...], preferred_element_type=jnp.float32)
    h = jnp.maximum(h + b1_ref[...], 0.0)                      # hidden1 + ReLU
    h = jnp.dot(h, w2_ref[...], preferred_element_type=jnp.float32)
    h = jnp.maximum(h + b2_ref[...], 0.0)                      # hidden2 + ReLU
    h = jnp.dot(h, w3_ref[...], preferred_element_type=jnp.float32)
    h = h + b3_ref[...]                                        # hidden3 (no act)
    y = jnp.dot(h, w4_ref[...], preferred_element_type=jnp.float32)
    o_ref[...] = (y + b4_ref[...]).astype(o_ref.dtype)         # output layer


def _round_up(a, b):
    return ((a + b - 1) // b) * b


def fused_mlp_forward(x, params, *, max_batch_tile=256):
    """Run the 4-layer MLP in one pallas_call.

    x:      (M, K) f32
    params: [(w_t, b)] x 4, with w_t already transposed to (in, out).
    """
    (w1, b1), (w2, b2), (w3, b3), (w4, b4) = params
    M, K = x.shape
    H = w1.shape[1]
    N = w4.shape[1]

    # Lane-dense final output: pad out_features up to a multiple of 128 and
    # slice back afterwards (avoids masked vst on a narrow output block).
    Np = _round_up(max(N, 128), 128)
    if Np != N:
        w4 = jnp.zeros((H, Np), w4.dtype).at[:, :N].set(w4)
        b4 = jnp.zeros((Np,), b4.dtype).at[:N].set(b4)

    # Batch tiling: cap the tile so VMEM stays bounded for big batches; pad
    # the batch up to a whole number of tiles (multiple of 8 sublanes).
    tm = max_batch_tile if M >= max_batch_tile else _round_up(M, 8)
    Mp = _round_up(M, tm)
    if Mp != M:
        x = jnp.zeros((Mp, K), x.dtype).at[:M].set(x)

    b1r = b1.reshape(1, H)
    b2r = b2.reshape(1, H)
    b3r = b3.reshape(1, H)
    b4r = b4.reshape(1, Np)

    grid = (Mp // tm,)

    # VMEM budget: double-buffered blocks + activation temporaries + margin.
    elem = 4  # f32
    block_elems = (2 * tm * K                  # x tile
                   + 2 * (K * H + H)           # w1, b1
                   + 4 * (H * H + H)           # w2, b2, w3, b3
                   + 2 * (H * Np + Np)         # w4, b4 (padded)
                   + 2 * tm * Np)              # output tile
    vmem_limit = min(block_elems * elem + 6 * tm * H * elem + (4 << 20),
                     100 << 20)

    out = pl.pallas_call(
        _fused_mlp_kernel,
        out_shape=jax.ShapeDtypeStruct((Mp, Np), x.dtype),
        grid_spec=pltpu.PrefetchScalarGridSpec(
            num_scalar_prefetch=0,
            grid=grid,
            in_specs=[
                pl.BlockSpec((tm, K), lambda i: (i, 0)),   # x batch tile
                pl.BlockSpec((K, H), lambda i: (0, 0)),    # w1 (full)
                pl.BlockSpec((1, H), lambda i: (0, 0)),    # b1
                pl.BlockSpec((H, H), lambda i: (0, 0)),    # w2 (full)
                pl.BlockSpec((1, H), lambda i: (0, 0)),    # b2
                pl.BlockSpec((H, H), lambda i: (0, 0)),    # w3 (full)
                pl.BlockSpec((1, H), lambda i: (0, 0)),    # b3
                pl.BlockSpec((H, Np), lambda i: (0, 0)),   # w4 (padded, full)
                pl.BlockSpec((1, Np), lambda i: (0, 0)),   # b4 (padded)
            ],
            out_specs=pl.BlockSpec((tm, Np), lambda i: (i, 0)),
        ),
        compiler_params=pltpu.CompilerParams(
            dimension_semantics=("parallel",),
            vmem_limit_bytes=vmem_limit,
        ),
    )(x, w1, b1r, w2, b2r, w3, b3r, w4, b4r)

    return out[:M, :N]


class PallasMLP:
    """JAX/Pallas port of the PyTorch MLP:
       Linear(in,1024) -> ReLU -> Linear(1024,1024) -> ReLU
       -> Linear(1024,1024) -> Linear(1024,out)
       (note: NO activation after hidden3, matching the reference forward).
       The entire forward pass runs as ONE fused Pallas kernel."""

    HIDDEN = 1024

    def __init__(self, input_dim, output_dim, key):
        dims = [(input_dim, self.HIDDEN),
                (self.HIDDEN, self.HIDDEN),
                (self.HIDDEN, self.HIDDEN),
                (self.HIDDEN, output_dim)]
        self.params = []
        for fan_in, fan_out in dims:
            key, kw, kb = jax.random.split(key, 3)
            bound = 1.0 / jnp.sqrt(fan_in)
            # PyTorch nn.Linear stores W as (out, in); we keep it transposed
            # as (in, out) so the kernel does x @ w_t directly.
            w_t = jax.random.uniform(
                kw, (fan_in, fan_out), jnp.float32, -bound, bound)
            b = jax.random.uniform(
                kb, (fan_out,), jnp.float32, -bound, bound)
            self.params.append((w_t, b))

    def __call__(self, x):
        return fused_mlp_forward(x, self.params)


if __name__ == "__main__":
    key = jax.random.PRNGKey(0)
    key, kx, kp = jax.random.split(key, 3)

    batch, input_dim, output_dim = 8, 32, 16
    x = jax.random.normal(kx, (batch, input_dim), jnp.float32)

    mlp = PallasMLP(input_dim, output_dim, kp)

    out = jax.block_until_ready(mlp(x))
    assert out.shape == (batch, output_dim)

    # Reference check in plain JAX (same math as the PyTorch forward).
    ref = x
    for i, (w_t, b) in enumerate(mlp.params):
        ref = ref @ w_t + b
        if i < 2:
            ref = jnp.maximum(ref, 0.0)
    assert jnp.allclose(out, ref, atol=1e-4, rtol=1e-4), (
        "max abs err = %g" % float(jnp.max(jnp.abs(out - ref))))

    print("KERNEL_OK")
</pallas_src>

<mosaic_0001>
module attributes {stable_mosaic.version = 11 : i64} {
  func.func @_fused_mlp_kernel(%arg0: i32, %arg1: memref<8x32xf32, #tpu.memory_space<vmem>>, %arg2: memref<32x1024xf32, #tpu.memory_space<vmem>>, %arg3: memref<1x1024xf32, #tpu.memory_space<vmem>>, %arg4: memref<1024x1024xf32, #tpu.memory_space<vmem>>, %arg5: memref<1x1024xf32, #tpu.memory_space<vmem>>, %arg6: memref<1024x1024xf32, #tpu.memory_space<vmem>>, %arg7: memref<1x1024xf32, #tpu.memory_space<vmem>>, %arg8: memref<1024x128xf32, #tpu.memory_space<vmem>>, %arg9: memref<1x128xf32, #tpu.memory_space<vmem>>, %arg10: memref<8x128xf32, #tpu.memory_space<vmem>>) attributes {dimension_semantics = [#tpu.dimension_semantics<parallel>], iteration_bounds = array<i64: 1>, scalar_prefetch = 0 : i64, scratch_operands = 0 : i64, tpu.core_type = #tpu.core_type<tc>, window_params = [{transform_indices = @transform_0, window_bounds = array<i64: 8, 32>}, {pipeline_mode = #tpu.pipeline_mode<synchronous>, transform_indices = @transform_1, window_bounds = array<i64: 32, 1024>}, {pipeline_mode = #tpu.pipeline_mode<synchronous>, transform_indices = @transform_2, window_bounds = array<i64: 1, 1024>}, {pipeline_mode = #tpu.pipeline_mode<synchronous>, transform_indices = @transform_3, window_bounds = array<i64: 1024, 1024>}, {pipeline_mode = #tpu.pipeline_mode<synchronous>, transform_indices = @transform_4, window_bounds = array<i64: 1, 1024>}, {pipeline_mode = #tpu.pipeline_mode<synchronous>, transform_indices = @transform_5, window_bounds = array<i64: 1024, 1024>}, {pipeline_mode = #tpu.pipeline_mode<synchronous>, transform_indices = @transform_6, window_bounds = array<i64: 1, 1024>}, {pipeline_mode = #tpu.pipeline_mode<synchronous>, transform_indices = @transform_7, window_bounds = array<i64: 1024, 128>}, {pipeline_mode = #tpu.pipeline_mode<synchronous>, transform_indices = @transform_8, window_bounds = array<i64: 1, 128>}, {transform_indices = @transform_9, window_bounds = array<i64: 8, 128>}]} {
    %c0 = arith.constant 0 : index
    %c0_0 = arith.constant 0 : index
    %0 = vector.load %arg1[%c0, %c0_0] : memref<8x32xf32, #tpu.memory_space<vmem>>, vector<8x32xf32>
    %c0_1 = arith.constant 0 : index
    %c0_2 = arith.constant 0 : index
    %1 = vector.load %arg2[%c0_1, %c0_2] : memref<32x1024xf32, #tpu.memory_space<vmem>>, vector<32x1024xf32>
    %cst = arith.constant dense<0.000000e+00> : vector<8x1024xf32>
    %2 = tpu.matmul %0, %1, %cst {dimension_numbers = #tpu.dot_dimension_numbers<[1], [0], [0], [1], [0, 0, 1, 1], [], []>} : vector<8x32xf32>, vector<32x1024xf32>, vector<8x1024xf32> -> vector<8x1024xf32>
    %c0_3 = arith.constant 0 : index
    %c0_4 = arith.constant 0 : index
    %3 = vector.load %arg3[%c0_3, %c0_4] : memref<1x1024xf32, #tpu.memory_space<vmem>>, vector<1x1024xf32>
    %4 = vector.broadcast %3 : vector<1x1024xf32> to vector<8x1024xf32>
    %5 = arith.addf %2, %4 : vector<8x1024xf32>
    %cst_5 = arith.constant 0.000000e+00 : f32
    %6 = vector.broadcast %cst_5 : f32 to vector<8x1024xf32>
    %7 = arith.maximumf %5, %6 : vector<8x1024xf32>
    %c0_6 = arith.constant 0 : index
    %c0_7 = arith.constant 0 : index
    %8 = vector.load %arg4[%c0_6, %c0_7] : memref<1024x1024xf32, #tpu.memory_space<vmem>>, vector<1024x1024xf32>
    %cst_8 = arith.constant dense<0.000000e+00> : vector<8x1024xf32>
    %9 = tpu.matmul %7, %8, %cst_8 {dimension_numbers = #tpu.dot_dimension_numbers<[1], [0], [0], [1], [0, 0, 1, 1], [], []>} : vector<8x1024xf32>, vector<1024x1024xf32>, vector<8x1024xf32> -> vector<8x1024xf32>
    %c0_9 = arith.constant 0 : index
    %c0_10 = arith.constant 0 : index
    %10 = vector.load %arg5[%c0_9, %c0_10] : memref<1x1024xf32, #tpu.memory_space<vmem>>, vector<1x1024xf32>
    %11 = vector.broadcast %10 : vector<1x1024xf32> to vector<8x1024xf32>
    %12 = arith.addf %9, %11 : vector<8x1024xf32>
    %cst_11 = arith.constant 0.000000e+00 : f32
    %13 = vector.broadcast %cst_11 : f32 to vector<8x1024xf32>
    %14 = arith.maximumf %12, %13 : vector<8x1024xf32>
    %c0_12 = arith.constant 0 : index
    %c0_13 = arith.constant 0 : index
    %15 = vector.load %arg6[%c0_12, %c0_13] : memref<1024x1024xf32, #tpu.memory_space<vmem>>, vector<1024x1024xf32>
    %cst_14 = arith.constant dense<0.000000e+00> : vector<8x1024xf32>
    %16 = tpu.matmul %14, %15, %cst_14 {dimension_numbers = #tpu.dot_dimension_numbers<[1], [0], [0], [1], [0, 0, 1, 1], [], []>} : vector<8x1024xf32>, vector<1024x1024xf32>, vector<8x1024xf32> -> vector<8x1024xf32>
    %c0_15 = arith.constant 0 : index
    %c0_16 = arith.constant 0 : index
    %17 = vector.load %arg7[%c0_15, %c0_16] : memref<1x1024xf32, #tpu.memory_space<vmem>>, vector<1x1024xf32>
    %18 = vector.broadcast %17 : vector<1x1024xf32> to vector<8x1024xf32>
    %19 = arith.addf %16, %18 : vector<8x1024xf32>
    %c0_17 = arith.constant 0 : index
    %c0_18 = arith.constant 0 : index
    %20 = vector.load %arg8[%c0_17, %c0_18] : memref<1024x128xf32, #tpu.memory_space<vmem>>, vector<1024x128xf32>
    %cst_19 = arith.constant dense<0.000000e+00> : vector<8x128xf32>
    %21 = tpu.matmul %19, %20, %cst_19 {dimension_numbers = #tpu.dot_dimension_numbers<[1], [0], [0], [1], [0, 0, 1, 1], [], []>} : vector<8x1024xf32>, vector<1024x128xf32>, vector<8x128xf32> -> vector<8x128xf32>
    %c0_20 = arith.constant 0 : index
    %c0_21 = arith.constant 0 : index
    %22 = vector.load %arg9[%c0_20, %c0_21] : memref<1x128xf32, #tpu.memory_space<vmem>>, vector<1x128xf32>
    %23 = vector.broadcast %22 : vector<1x128xf32> to vector<8x128xf32>
    %24 = arith.addf %21, %23 : vector<8x128xf32>
    %c0_22 = arith.constant 0 : index
    %c0_23 = arith.constant 0 : index
    %25 = vector.load %arg10[%c0_22, %c0_23] : memref<8x128xf32, #tpu.memory_space<vmem>>, vector<8x128xf32>
    tpu.vector_store %arg10[%c0_22, %c0_23], %24 {strides = array<i32>} : memref<8x128xf32, #tpu.memory_space<vmem>>, vector<8x128xf32>,
    return
  }
  func.func @transform_0(%arg0: i32) -> (i32, i32) {
    %c0_i32 = arith.constant 0 : i32
    %c0_i32_0 = arith.constant 0 : i32
    return %arg0, %c0_i32 : i32, i32
  }
  func.func @transform_1(%arg0: i32) -> (i32, i32) {
    %c0_i32 = arith.constant 0 : i32
    %c0_i32_0 = arith.constant 0 : i32
    %c0_i32_1 = arith.constant 0 : i32
    return %c0_i32, %c0_i32_0 : i32, i32
  }
  func.func @transform_2(%arg0: i32) -> (i32, i32) {
    %c0_i32 = arith.constant 0 : i32
    %c0_i32_0 = arith.constant 0 : i32
    %c0_i32_1 = arith.constant 0 : i32
    return %c0_i32, %c0_i32_0 : i32, i32
  }
  func.func @transform_3(%arg0: i32) -> (i32, i32) {
    %c0_i32 = arith.constant 0 : i32
    %c0_i32_0 = arith.constant 0 : i32
    %c0_i32_1 = arith.constant 0 : i32
    return %c0_i32, %c0_i32_0 : i32, i32
  }
  func.func @transform_4(%arg0: i32) -> (i32, i32) {
    %c0_i32 = arith.constant 0 : i32
    %c0_i32_0 = arith.constant 0 : i32
    %c0_i32_1 = arith.constant 0 : i32
    return %c0_i32, %c0_i32_0 : i32, i32
  }
  func.func @transform_5(%arg0: i32) -> (i32, i32) {
    %c0_i32 = arith.constant 0 : i32
    %c0_i32_0 = arith.constant 0 : i32
    %c0_i32_1 = arith.constant 0 : i32
    return %c0_i32, %c0_i32_0 : i32, i32
  }
  func.func @transform_6(%arg0: i32) -> (i32, i32) {
    %c0_i32 = arith.constant 0 : i32
    %c0_i32_0 = arith.constant 0 : i32
    %c0_i32_1 = arith.constant 0 : i32
    return %c0_i32, %c0_i32_0 : i32, i32
  }
  func.func @transform_7(%arg0: i32) -> (i32, i32) {
    %c0_i32 = arith.constant 0 : i32
    %c0_i32_0 = arith.constant 0 : i32
    %c0_i32_1 = arith.constant 0 : i32
    return %c0_i32, %c0_i32_0 : i32, i32
  }
  func.func @transform_8(%arg0: i32) -> (i32, i32) {
    %c0_i32 = arith.constant 0 : i32
    %c0_i32_0 = arith.constant 0 : i32
    %c0_i32_1 = arith.constant 0 : i32
    return %c0_i32, %c0_i32_0 : i32, i32
  }
  func.func @transform_9(%arg0: i32) -> (i32, i32) {
    %c0_i32 = arith.constant 0 : i32
    %c0_i32_0 = arith.constant 0 : i32
    return %arg0, %c0_i32 : i32, i32
  }
}

</mosaic_0001>

<llo_original>
// kernel: tpu_custom_call.1
$region0: #{tpu_custom_call.1}
  #allocation0 [shape = 'u32[]', space=smem, size = 0x4, offset = 0x4, fixed_abs, tag = 'smem constant byte address 0x4 - core index']
  #allocation1 [shape = 'u32[72,128]{1,0:T(1,128)}', space=vmem, size = 0x9000, scoped, tag = 'internal scratch']
  %s0 = inlined_call_operand.hbm [shape: f32[8,32], index: 0, kind: input, shape index: {}]
  %s1 = inlined_call_operand.hbm [shape: f32[32,1024], index: 1, kind: input, shape index: {}]
  %s2 = inlined_call_operand.hbm [shape: f32[1,1024], index: 2, kind: input, shape index: {}]
  %s3 = inlined_call_operand.hbm [shape: f32[1024,1024], index: 3, kind: input, shape index: {}]
  %s4 = inlined_call_operand.hbm [shape: f32[1,1024], index: 4, kind: input, shape index: {}]
  %s5 = inlined_call_operand.hbm [shape: f32[1024,1024], index: 5, kind: input, shape index: {}]
  %s6 = inlined_call_operand.hbm [shape: f32[1,1024], index: 6, kind: input, shape index: {}]
  %s7 = inlined_call_operand.hbm [shape: f32[1024,128], index: 7, kind: input, shape index: {}]
  %s8 = inlined_call_operand.hbm [shape: f32[1,128], index: 8, kind: input, shape index: {}]
  %s9 = inlined_call_operand.hbm [shape: f32[8,128], index: 9, kind: output, shape index: {}]
  %s10 = sld [smem:[#allocation0]]
  $region82: #{tpu_custom_call.1} parent=0
    _
  %s12 = ssub.s32 1, %s10
  %s13 = scalar_select 0, %s12, %s10
  $region1: #{tpu_custom_call.1} parent=0
    #allocation2 [shape = 'u8[4096]{0}', space=vmem, size = 0x1000, scoped, tag = 'input window, operand 0, single buffered']
    #allocation3 [shape = 's32[1]{0}', space=sflag, size = 0x4, scoped, tag = 'scoped memory for tpu_custom_call.1']
    #allocation4 [shape = 's32[1]{0}', space=sflag, size = 0x4, scoped, tag = 'scoped memory for tpu_custom_call.1']
    #allocation5 [shape = 'u8[131072]{0}', space=vmem, size = 0x20000, scoped, tag = 'input window, operand 1, single buffered']
    #allocation6 [shape = 's32[1]{0}', space=sflag, size = 0x4, scoped, tag = 'scoped memory for tpu_custom_call.1']
    #allocation7 [shape = 'u8[4096]{0}', space=vmem, size = 0x1000, scoped, tag = 'input window, operand 2, single buffered']
    #allocation8 [shape = 'u8[4194304]{0}', space=vmem, size = 0x400000, scoped, tag = 'input window, operand 3, single buffered']
    #allocation9 [shape = 's32[1]{0}', space=sflag, size = 0x4, scoped, tag = 'scoped memory for tpu_custom_call.1']
    #allocation10 [shape = 'u8[4096]{0}', space=vmem, size = 0x1000, scoped, tag = 'input window, operand 4, single buffered']
    #allocation11 [shape = 'u8[4194304]{0}', space=vmem, size = 0x400000, scoped, tag = 'input window, operand 5, single buffered']
    #allocation12 [shape = 's32[1]{0}', space=sflag, size = 0x4, scoped, tag = 'scoped memory for tpu_custom_call.1']
    #allocation13 [shape = 'u8[4096]{0}', space=vmem, size = 0x1000, scoped, tag = 'input window, operand 6, single buffered']
    #allocation14 [shape = 'u8[524288]{0}', space=vmem, size = 0x80000, scoped, tag = 'input window, operand 7, single buffered']
    #allocation15 [shape = 's32[1]{0}', space=sflag, size = 0x4, scoped, tag = 'scoped memory for tpu_custom_call.1']
    #allocation16 [shape = 'u8[512]{0}', space=vmem, size = 0x400, scoped, tag = 'input window, operand 8, single buffered']
    #allocation17 [shape = 'u8[4096]{0}', space=vmem, size = 0x1000, scoped, tag = 'output window, operand 0, single buffered']
    %14 = vsyncpa [#allocation3], 0
    %15 = vsyncpa [#allocation6], 0
    %16 = vsyncpa [#allocation9], 0
    %17 = vsyncpa [#allocation12], 0
    %18 = vsyncpa [#allocation15], 0
    %19 = vsyncpa [#allocation4], 0
    // Predicated region
    $region2: #{tpu_custom_call.1} parent=1 // pred_check
      _
    $region3: #{tpu_custom_call.1} parent=1 // pred_check_branch
      %21 = sbr.rel (0) target = $region5
    $region4: #{tpu_custom_call.1} parent=1 // pred_region
      %23 = vsyncadd [#allocation3], 0
      %s25 = sshll.u32 %s0, 4
      %s26 = int_to_ptr.hbm [resolvable:$true] %s25
      %s27 = sshll.u32 [#allocation2], 4
      %s28 = int_to_ptr.vmem [resolvable:$true] %s27
      %30 = dma.hbm_to_vmem [thread:$0]  %s26, 128, %s28, [#allocation3]
    $region5: #{tpu_custom_call.1} parent=1 // pred_fallthru
      _
    // Predicated region
    $region6: #{tpu_custom_call.1} parent=1 // pred_check
      _
    $region7: #{tpu_custom_call.1} parent=1 // pred_check_branch
      %32 = sbr.rel (0) target = $region9
    $region8: #{tpu_custom_call.1} parent=1 // pred_region
      %34 = vsyncadd [#allocation6], 0
      %s35 = sshll.u32 %s1, 4
      %s36 = int_to_ptr.hbm [resolvable:$true] %s35
      %s37 = sshll.u32 [#allocation5], 4
      %s38 = int_to_ptr.vmem [resolvable:$true] %s37
      %43 = dma.hbm_to_vmem [thread:$0]  %s36, 4096, %s38, [#allocation6], 1024, 1024, 64
    $region9: #{tpu_custom_call.1} parent=1 // pred_fallthru
      _
    // Predicated region
    $region10: #{tpu_custom_call.1} parent=1 // pred_check
      _
    $region11: #{tpu_custom_call.1} parent=1 // pred_check_branch
      %45 = sbr.rel (0) target = $region13
    $region12: #{tpu_custom_call.1} parent=1 // pred_region
      %47 = vsyncadd [#allocation6], 0
      %s49 = sshll.u32 %s2, 4
      %s50 = int_to_ptr.hbm [resolvable:$true] %s49
      %s51 = sshll.u32 [#allocation7], 4
      %s52 = int_to_ptr.vmem [resolvable:$true] %s51
      %54 = dma.hbm_to_vmem [thread:$0]  %s50, 128, %s52, [#allocation6]
    $region13: #{tpu_custom_call.1} parent=1 // pred_fallthru
      _
    // Predicated region
    $region14: #{tpu_custom_call.1} parent=1 // pred_check
      _
    $region15: #{tpu_custom_call.1} parent=1 // pred_check_branch
      %56 = sbr.rel (0) target = $region17
    $region16: #{tpu_custom_call.1} parent=1 // pred_region
      %58 = vsyncadd [#allocation9], 0
      %s59 = sshll.u32 %s3, 4
      %s60 = int_to_ptr.hbm [resolvable:$true] %s59
      %s61 = sshll.u32 [#allocation8], 4
      %s62 = int_to_ptr.vmem [resolvable:$true] %s61
      %67 = dma.hbm_to_vmem [thread:$0]  %s60, 131072, %s62, [#allocation9], 1024, 1024, 64
    $region17: #{tpu_custom_call.1} parent=1 // pred_fallthru
      _
    // Predicated region
    $region18: #{tpu_custom_call.1} parent=1 // pred_check
      _
    $region19: #{tpu_custom_call.1} parent=1 // pred_check_branch
      %69 = sbr.rel (0) target = $region21
    $region20: #{tpu_custom_call.1} parent=1 // pred_region
      %71 = vsyncadd [#allocation9], 0
      %s73 = sshll.u32 %s4, 4
      %s74 = int_to_ptr.hbm [resolvable:$true] %s73
      %s75 = sshll.u32 [#allocation10], 4
      %s76 = int_to_ptr.vmem [resolvable:$true] %s75
      %78 = dma.hbm_to_vmem [thread:$0]  %s74, 128, %s76, [#allocation9]
    $region21: #{tpu_custom_call.1} parent=1 // pred_fallthru
      _
    // Predicated region
    $region22: #{tpu_custom_call.1} parent=1 // pred_check
      _
    $region23: #{tpu_custom_call.1} parent=1 // pred_check_branch
      %80 = sbr.rel (0) target = $region25
    $region24: #{tpu_custom_call.1} parent=1 // pred_region
      %82 = vsyncadd [#allocation12], 0
      %s83 = sshll.u32 %s5, 4
      %s84 = int_to_ptr.hbm [resolvable:$true] %s83
      %s85 = sshll.u32 [#allocation11], 4
      %s86 = int_to_ptr.vmem [resolvable:$true] %s85
      %91 = dma.hbm_to_vmem [thread:$0]  %s84, 131072, %s86, [#allocation12], 1024, 1024, 64
    $region25: #{tpu_custom_call.1} parent=1 // pred_fallthru
      _
    // Predicated region
    $region26: #{tpu_custom_call.1} parent=1 // pred_check
      _
    $region27: #{tpu_custom_call.1} parent=1 // pred_check_branch
      %93 = sbr.rel (0) target = $region29
    $region28: #{tpu_custom_call.1} parent=1 // pred_region
      %95 = vsyncadd [#allocation12], 0
      %s97 = sshll.u32 %s6, 4
      %s98 = int_to_ptr.hbm [resolvable:$true] %s97
      %s99 = sshll.u32 [#allocation13], 4
      %s100 = int_to_ptr.vmem [resolvable:$true] %s99
      %102 = dma.hbm_to_vmem [thread:$0]  %s98, 128, %s100, [#allocation12]
    $region29: #{tpu_custom_call.1} parent=1 // pred_fallthru
      _
    // Predicated region
    $region30: #{tpu_custom_call.1} parent=1 // pred_check
      _
    $region31: #{tpu_custom_call.1} parent=1 // pred_check_branch
      %104 = sbr.rel (0) target = $region33
    $region32: #{tpu_custom_call.1} parent=1 // pred_region
      %106 = vsyncadd [#allocation15], 0
      %s107 = sshll.u32 %s7, 4
      %s108 = int_to_ptr.hbm [resolvable:$true] %s107
      %s109 = sshll.u32 [#allocation14], 4
      %s110 = int_to_ptr.vmem [resolvable:$true] %s109
      %115 = dma.hbm_to_vmem [thread:$0]  %s108, 16384, %s110, [#allocation15], 128, 128, 8
    $region33: #{tpu_custom_call.1} parent=1 // pred_fallthru
      _
    // Predicated region
    $region34: #{tpu_custom_call.1} parent=1 // pred_check
      _
    $region35: #{tpu_custom_call.1} parent=1 // pred_check_branch
      %117 = sbr.rel (0) target = $region37
    $region36: #{tpu_custom_call.1} parent=1 // pred_region
      %119 = vsyncadd [#allocation15], 0
      %s121 = sshll.u32 %s8, 4
      %s122 = int_to_ptr.hbm [resolvable:$true] %s121
      %s123 = sshll.u32 [#allocation16], 4
      %s124 = int_to_ptr.vmem [resolvable:$true] %s123
      %126 = dma.hbm_to_vmem [thread:$0]  %s122, 16, %s124, [#allocation15]
    $region37: #{tpu_custom_call.1} parent=1 // pred_fallthru
      _
    // Predicated region
    $region38: #{tpu_custom_call.1} parent=1 // pred_check
      _
    $region39: #{tpu_custom_call.1} parent=1 // pred_check_branch
      %128 = sbr.rel (0) target = $region41
    $region40: #{tpu_custom_call.1} parent=1 // pred_region
      %130 = dma.done [#allocation3], 128
    $region41: #{tpu_custom_call.1} parent=1 // pred_fallthru
      _
    // Predicated region
    $region42: #{tpu_custom_call.1} parent=1 // pred_check
      _
    $region43: #{tpu_custom_call.1} parent=1 // pred_check_branch
      %132 = sbr.rel (0) target = $region45
    $region44: #{tpu_custom_call.1} parent=1 // pred_region
      %134 = dma.done [#allocation6], 4096
    $region45: #{tpu_custom_call.1} parent=1 // pred_fallthru
      _
    // Predicated region
    $region46: #{tpu_custom_call.1} parent=1 // pred_check
      _
    $region47: #{tpu_custom_call.1} parent=1 // pred_check_branch
      %136 = sbr.rel (0) target = $region49
    $region48: #{tpu_custom_call.1} parent=1 // pred_region
      %138 = dma.done [#allocation6], 128
    $region49: #{tpu_custom_call.1} parent=1 // pred_fallthru
      _
    // Predicated region
    $region50: #{tpu_custom_call.1} parent=1 // pred_check
      _
    $region51: #{tpu_custom_call.1} parent=1 // pred_check_branch
      %140 = sbr.rel (0) target = $region53
    $region52: #{tpu_custom_call.1} parent=1 // pred_region
      %142 = dma.done [#allocation9], 131072
    $region53: #{tpu_custom_call.1} parent=1 // pred_fallthru
      _
    // Predicated region
    $region54: #{tpu_custom_call.1} parent=1 // pred_check
      _
    $region55: #{tpu_custom_call.1} parent=1 // pred_check_branch
      %144 = sbr.rel (0) target = $region57
    $region56: #{tpu_custom_call.1} parent=1 // pred_region
      %146 = dma.done [#allocation9], 128
    $region57: #{tpu_custom_call.1} parent=1 // pred_fallthru
      _
    // Predicated region
    $region58: #{tpu_custom_call.1} parent=1 // pred_check
      _
    $region59: #{tpu_custom_call.1} parent=1 // pred_check_branch
      %148 = sbr.rel (0) target = $region61
    $region60: #{tpu_custom_call.1} parent=1 // pred_region
      %150 = dma.done [#allocation12], 131072
    $region61: #{tpu_custom_call.1} parent=1 // pred_fallthru
      _
    // Predicated region
    $region62: #{tpu_custom_call.1} parent=1 // pred_check
      _
    $region63: #{tpu_custom_call.1} parent=1 // pred_check_branch
      %152 = sbr.rel (0) target = $region65
    $region64: #{tpu_custom_call.1} parent=1 // pred_region
      %154 = dma.done [#allocation12], 128
    $region65: #{tpu_custom_call.1} parent=1 // pred_fallthru
      _
    // Predicated region
    $region66: #{tpu_custom_call.1} parent=1 // pred_check
      _
    $region67: #{tpu_custom_call.1} parent=1 // pred_check_branch
      %156 = sbr.rel (0) target = $region69
    $region68: #{tpu_custom_call.1} parent=1 // pred_region
      %158 = dma.done [#allocation15], 16384
    $region69: #{tpu_custom_call.1} parent=1 // pred_fallthru
      _
    // Predicated region
    $region70: #{tpu_custom_call.1} parent=1 // pred_check
      _
    $region71: #{tpu_custom_call.1} parent=1 // pred_check_branch
      %160 = sbr.rel (0) target = $region73
    $region72: #{tpu_custom_call.1} parent=1 // pred_region
      %162 = dma.done [#allocation15], 16
    $region73: #{tpu_custom_call.1} parent=1 // pred_fallthru
      _
    %v163 = vld [vmem:[#allocation2] sm:$0xff]
    %v164 = vld [vmem:[#allocation5] sm:$0xff]
    %v165 = vld [vmem:[#allocation5 + $0x8] sm:$0xff]
    %v166 = vld [vmem:[#allocation5 + $0x10] sm:$0xff]
    %v167 = vld [vmem:[#allocation5 + $0x18] sm:$0xff]
    %v168 = vld [vmem:[#allocation5 + $0x20] sm:$0xff]
    %v169 = vld [vmem:[#allocation5 + $0x28] sm:$0xff]
    %v170 = vld [vmem:[#allocation5 + $0x30] sm:$0xff]
    %v171 = vld [vmem:[#allocation5 + $0x38] sm:$0xff]
    %v172 = vld [vmem:[#allocation5 + $0x40] sm:$0xff]
    %v173 = vld [vmem:[#allocation5 + $0x48] sm:$0xff]
    %v174 = vld [vmem:[#allocation5 + $0x50] sm:$0xff]
    %v175 = vld [vmem:[#allocation5 + $0x58] sm:$0xff]
    %v176 = vld [vmem:[#allocation5 + $0x60] sm:$0xff]
    %v177 = vld [vmem:[#allocation5 + $0x68] sm:$0xff]
    %v178 = vld [vmem:[#allocation5 + $0x70] sm:$0xff]
    %v179 = vld [vmem:[#allocation5 + $0x78] sm:$0xff]
    %v180 = vld [vmem:[#allocation5 + $0x80] sm:$0xff]
    %v181 = vld [vmem:[#allocation5 + $0x88] sm:$0xff]
    %v182 = vld [vmem:[#allocation5 + $0x90] sm:$0xff]
    %v183 = vld [vmem:[#allocation5 + $0x98] sm:$0xff]
    %v184 = vld [vmem:[#allocation5 + $0xa0] sm:$0xff]
    %v185 = vld [vmem:[#allocation5 + $0xa8] sm:$0xff]
    %v186 = vld [vmem:[#allocation5 + $0xb0] sm:$0xff]
    %v187 = vld [vmem:[#allocation5 + $0xb8] sm:$0xff]
    %v188 = vld [vmem:[#allocation5 + $0xc0] sm:$0xff]
    %v189 = vld [vmem:[#allocation5 + $0xc8] sm:$0xff]
    %v190 = vld [vmem:[#allocation5 + $0xd0] sm:$0xff]
    %v191 = vld [vmem:[#allocation5 + $0xd8] sm:$0xff]
    %v192 = vld [vmem:[#allocation5 + $0xe0] sm:$0xff]
    %v193 = vld [vmem:[#allocation5 + $0xe8] sm:$0xff]
    %v194 = vld [vmem:[#allocation5 + $0xf0] sm:$0xff]
    %v195 = vld [vmem:[#allocation5 + $0xf8] sm:$0xff]
    %v196 = vld [vmem:[#allocation7] sm:$0xff]
    %v198 = vperm.slane %v196, 0
    %v199 = vperm.slane %v196, 1
    %v200 = vperm.slane %v196, 2
    %v201 = vperm.slane %v196, 3
    %v202 = vperm.slane %v196, 4
    %v203 = vperm.slane %v196, 5
    %v204 = vperm.slane %v196, 6
    %v205 = vperm.slane %v196, 7
    %vm214 = vcmask 261120
    %v216 = vsel %vm214, %v163, 0
    %218 = vmatpush.msra.mxu0 0.0
    %219 = vmatpush.msra.mxu0 0.0
    %220 = vmatpush.msra.mxu0 0.0
    %221 = vmatpush.msra.mxu0 0.0
    %222 = vmatpush.msra.mxu0 0.0
    %223 = vmatpush.msra.mxu0 0.0
    %224 = vmatpush.msra.mxu0 0.0
    %225 = vmatpush.msra.mxu0 0.0
    %226 = vmatpush.msra.mxu0 0.0
    %227 = vmatpush.msra.mxu0 0.0
    %228 = vmatpush.msra.mxu0 0.0
    %229 = vmatpush.msra.mxu0 0.0
    %230 = vmatpush.msra.mxu0 %v188
    %231 = vmatpush.msra.mxu0 %v180
    %232 = vmatpush.msra.mxu0 %v172
    %233 = vmatpush.msra.mxu0 %v164
    %234 = vmatmul.f32.gmra.mxu0 %v216
    %v235 = vpop.f32.mrf.mxu0
    %v236 = vadd.f32 %v198, %v235
    %237 = vdwg.mxu0
    %238 = vmatpush.msra.mxu0 0.0
    %239 = vmatpush.msra.mxu0 0.0
    %240 = vmatpush.msra.mxu0 0.0
    %241 = vmatpush.msra.mxu0 0.0
    %242 = vmatpush.msra.mxu0 0.0
    %243 = vmatpush.msra.mxu0 0.0
    %244 = vmatpush.msra.mxu0 0.0
    %245 = vmatpush.msra.mxu0 0.0
    %246 = vmatpush.msra.mxu0 0.0
    %247 = vmatpush.msra.mxu0 0.0
    %248 = vmatpush.msra.mxu0 0.0
    %249 = vmatpush.msra.mxu0 0.0
    %250 = vmatpush.msra.mxu0 %v189
    %251 = vmatpush.msra.mxu0 %v181
    %252 = vmatpush.msra.mxu0 %v173
    %253 = vmatpush.msra.mxu0 %v165
    %254 = vmatmul.f32.gmra.mxu0 %v216
    %v255 = vpop.f32.mrf.mxu0
    %v256 = vadd.f32 %v199, %v255
    %257 = vdwg.mxu0
    %258 = vmatpush.msra.mxu0 0.0
    %259 = vmatpush.msra.mxu0 0.0
    %260 = vmatpush.msra.mxu0 0.0
    %261 = vmatpush.msra.mxu0 0.0
    %262 = vmatpush.msra.mxu0 0.0
    %263 = vmatpush.msra.mxu0 0.0
    %264 = vmatpush.msra.mxu0 0.0
    %265 = vmatpush.msra.mxu0 0.0
    %266 = vmatpush.msra.mxu0 0.0
    %267 = vmatpush.msra.mxu0 0.0
    %268 = vmatpush.msra.mxu0 0.0
    %269 = vmatpush.msra.mxu0 0.0
    %270 = vmatpush.msra.mxu0 %v190
    %271 = vmatpush.msra.mxu0 %v182
    %272 = vmatpush.msra.mxu0 %v174
    %273 = vmatpush.msra.mxu0 %v166
    %274 = vmatmul.f32.gmra.mxu0 %v216
    %v275 = vpop.f32.mrf.mxu0
    %v276 = vadd.f32 %v200, %v275
    %277 = vdwg.mxu0
    %278 = vmatpush.msra.mxu0 0.0
    %279 = vmatpush.msra.mxu0 0.0
    %280 = vmatpush.msra.mxu0 0.0
    %281 = vmatpush.msra.mxu0 0.0
    %282 = vmatpush.msra.mxu0 0.0
    %283 = vmatpush.msra.mxu0 0.0
    %284 = vmatpush.msra.mxu0 0.0
    %285 = vmatpush.msra.mxu0 0.0
    %286 = vmatpush.msra.mxu0 0.0
    %287 = vmatpush.msra.mxu0 0.0
    %288 = vmatpush.msra.mxu0 0.0
    %289 = vmatpush.msra.mxu0 0.0
    %290 = vmatpush.msra.mxu0 %v191
    %291 = vmatpush.msra.mxu0 %v183
    %292 = vmatpush.msra.mxu0 %v175
    %293 = vmatpush.msra.mxu0 %v167
    %294 = vmatmul.f32.gmra.mxu0 %v216
    %v295 = vpop.f32.mrf.mxu0
    %v296 = vadd.f32 %v201, %v295
    %297 = vdwg.mxu0
    %298 = vmatpush.msra.mxu0 0.0
    %299 = vmatpush.msra.mxu0 0.0
    %300 = vmatpush.msra.mxu0 0.0
    %301 = vmatpush.msra.mxu0 0.0
    %302 = vmatpush.msra.mxu0 0.0
    %303 = vmatpush.msra.mxu0 0.0
    %304 = vmatpush.msra.mxu0 0.0
    %305 = vmatpush.msra.mxu0 0.0
    %306 = vmatpush.msra.mxu0 0.0
    %307 = vmatpush.msra.mxu0 0.0
    %308 = vmatpush.msra.mxu0 0.0
    %309 = vmatpush.msra.mxu0 0.0
    %310 = vmatpush.msra.mxu0 %v192
    %311 = vmatpush.msra.mxu0 %v184
    %312 = vmatpush.msra.mxu0 %v176
    %313 = vmatpush.msra.mxu0 %v168
    %314 = vmatmul.f32.gmra.mxu0 %v216
    %v315 = vpop.f32.mrf.mxu0
    %v316 = vadd.f32 %v202, %v315
    %317 = vdwg.mxu0
    %318 = vmatpush.msra.mxu0 0.0
    %319 = vmatpush.msra.mxu0 0.0
    %320 = vmatpush.msra.mxu0 0.0
    %321 = vmatpush.msra.mxu0 0.0
    %322 = vmatpush.msra.mxu0 0.0
    %323 = vmatpush.msra.mxu0 0.0
    %324 = vmatpush.msra.mxu0 0.0
    %325 = vmatpush.msra.mxu0 0.0
    %326 = vmatpush.msra.mxu0 0.0
    %327 = vmatpush.msra.mxu0 0.0
    %328 = vmatpush.msra.mxu0 0.0
    %329 = vmatpush.msra.mxu0 0.0
    %330 = vmatpush.msra.mxu0 %v193
    %331 = vmatpush.msra.mxu0 %v185
    %332 = vmatpush.msra.mxu0 %v177
    %333 = vmatpush.msra.mxu0 %v169
    %334 = vmatmul.f32.gmra.mxu0 %v216
    %v335 = vpop.f32.mrf.mxu0
    %v336 = vadd.f32 %v203, %v335
    %337 = vdwg.mxu0
    %338 = vmatpush.msra.mxu0 0.0
    %339 = vmatpush.msra.mxu0 0.0
    %340 = vmatpush.msra.mxu0 0.0
    %341 = vmatpush.msra.mxu0 0.0
    %342 = vmatpush.msra.mxu0 0.0
    %343 = vmatpush.msra.mxu0 0.0
    %344 = vmatpush.msra.mxu0 0.0
    %345 = vmatpush.msra.mxu0 0.0
    %346 = vmatpush.msra.mxu0 0.0
    %347 = vmatpush.msra.mxu0 0.0
    %348 = vmatpush.msra.mxu0 0.0
    %349 = vmatpush.msra.mxu0 0.0
    %350 = vmatpush.msra.mxu0 %v194
    %351 = vmatpush.msra.mxu0 %v186
    %352 = vmatpush.msra.mxu0 %v178
    %353 = vmatpush.msra.mxu0 %v170
    %354 = vmatmul.f32.gmra.mxu0 %v216
    %v355 = vpop.f32.mrf.mxu0
    %v356 = vadd.f32 %v204, %v355
    %357 = vdwg.mxu0
    %358 = vmatpush.msra.mxu0 0.0
    %359 = vmatpush.msra.mxu0 0.0
    %360 = vmatpush.msra.mxu0 0.0
    %361 = vmatpush.msra.mxu0 0.0
    %362 = vmatpush.msra.mxu0 0.0
    %363 = vmatpush.msra.mxu0 0.0
    %364 = vmatpush.msra.mxu0 0.0
    %365 = vmatpush.msra.mxu0 0.0
    %366 = vmatpush.msra.mxu0 0.0
    %367 = vmatpush.msra.mxu0 0.0
    %368 = vmatpush.msra.mxu0 0.0
    %369 = vmatpush.msra.mxu0 0.0
    %370 = vmatpush.msra.mxu0 %v195
    %371 = vmatpush.msra.mxu0 %v187
    %372 = vmatpush.msra.mxu0 %v179
    %373 = vmatpush.msra.mxu0 %v171
    %374 = vmatmul.f32.gmra.mxu0 %v216
    %v375 = vpop.f32.mrf.mxu0
    %v376 = vadd.f32 %v205, %v375
    %377 = vdwg.mxu0
    %v378 = vmax.f32 %v236, 0.0
    %v379 = vmax.f32 %v256, 0.0
    %v380 = vmax.f32 %v276, 0.0
    %v381 = vmax.f32 %v296, 0.0
    %v382 = vmax.f32 %v316, 0.0
    %v383 = vmax.f32 %v336, 0.0
    %v384 = vmax.f32 %v356, 0.0
    %v385 = vmax.f32 %v376, 0.0
    %v386 = vld [vmem:[#allocation8] sm:$0xff]
    %v387 = vld [vmem:[#allocation8 + $0x8] sm:$0xff]
    %v388 = vld [vmem:[#allocation8 + $0x10] sm:$0xff]
    %v389 = vld [vmem:[#allocation8 + $0x18] sm:$0xff]
    %v390 = vld [vmem:[#allocation8 + $0x20] sm:$0xff]
    %v391 = vld [vmem:[#allocation8 + $0x28] sm:$0xff]
    %v392 = vld [vmem:[#allocation8 + $0x30] sm:$0xff]
    %v393 = vld [vmem:[#allocation8 + $0x38] sm:$0xff]
    %v394 = vld [vmem:[#allocation8 + $0x40] sm:$0xff]
    %v395 = vld [vmem:[#allocation8 + $0x48] sm:$0xff]
    %v396 = vld [vmem:[#allocation8 + $0x50] sm:$0xff]
    %v397 = vld [vmem:[#allocation8 + $0x58] sm:$0xff]
    %v398 = vld [vmem:[#allocation8 + $0x60] sm:$0xff]
    %v399 = vld [vmem:[#allocation8 + $0x68] sm:$0xff]
    %v400 = vld [vmem:[#allocation8 + $0x70] sm:$0xff]
    %v401 = vld [vmem:[#allocation8 + $0x78] sm:$0xff]
    %v402 = vld [vmem:[#allocation8 + $0x80] sm:$0xff]
    %v403 = vld [vmem:[#allocation8 + $0x88] sm:$0xff]
    %v404 = vld [vmem:[#allocation8 + $0x90] sm:$0xff]
    %v405 = vld [vmem:[#allocation8 + $0x98] sm:$0xff]
    %v406 = vld [vmem:[#allocation8 + $0xa0] sm:$0xff]
    %v407 = vld [vmem:[#allocation8 + $0xa8] sm:$0xff]
    %v408 = vld [vmem:[#allocation8 + $0xb0] sm:$0xff]
    %v409 = vld [vmem:[#allocation8 + $0xb8] sm:$0xff]
    %v410 = vld [vmem:[#allocation8 + $0xc0] sm:$0xff]
    %v411 = vld [vmem:[#allocation8 + $0xc8] sm:$0xff]
    %v412 = vld [vmem:[#allocation8 + $0xd0] sm:$0xff]
    %v413 = vld [vmem:[#allocation8 + $0xd8] sm:$0xff]
    %v414 = vld [vmem:[#allocation8 + $0xe0] sm:$0xff]
    %v415 = vld [vmem:[#allocation8 + $0xe8] sm:$0xff]
    %v416 = vld [vmem:[#allocation8 + $0xf0] sm:$0xff]
    %v417 = vld [vmem:[#allocation8 + $0xf8] sm:$0xff]
    %v418 = vld [vmem:[#allocation8 + $0x100] sm:$0xff]
    %v419 = vld [vmem:[#allocation8 + $0x108] sm:$0xff]
    %v420 = vld [vmem:[#allocation8 + $0x110] sm:$0xff]
    %v421 = vld [vmem:[#allocation8 + $0x118] sm:$0xff]
    %v422 = vld [vmem:[#allocation8 + $0x120] sm:$0xff]
    %v423 = vld [vmem:[#allocation8 + $0x128] sm:$0xff]
    %v424 = vld [vmem:[#allocation8 + $0x130] sm:$0xff]
    %v425 = vld [vmem:[#allocation8 + $0x138] sm:$0xff]
    %v426 = vld [vmem:[#allocation8 + $0x140] sm:$0xff]
    %v427 = vld [vmem:[#allocation8 + $0x148] sm:$0xff]
    %v428 = vld [vmem:[#allocation8 + $0x150] sm:$0xff]
    %v429 = vld [vmem:[#allocation8 + $0x158] sm:$0xff]
    %v430 = vld [vmem:[#allocation8 + $0x160] sm:$0xff]
    %v431 = vld [vmem:[#allocation8 + $0x168] sm:$0xff]
    %v432 = vld [vmem:[#allocation8 + $0x170] sm:$0xff]
    %v433 = vld [vmem:[#allocation8 + $0x178] sm:$0xff]
    %v434 = vld [vmem:[#allocation8 + $0x180] sm:$0xff]
    %v435 = vld [vmem:[#allocation8 + $0x188] sm:$0xff]
    %v436 = vld [vmem:[#allocation8 + $0x190] sm:$0xff]
    %v437 = vld [vmem:[#allocation8 + $0x198] sm:$0xff]
    %v438 = vld [vmem:[#allocation8 + $0x1a0] sm:$0xff]
    %v439 = vld [vmem:[#allocation8 + $0x1a8] sm:$0xff]
    %v440 = vld [vmem:[#allocation8 + $0x1b0] sm:$0xff]
    %v441 = vld [vmem:[#allocation8 + $0x1b8] sm:$0xff]
    %v442 = vld [vmem:[#allocation8 + $0x1c0] sm:$0xff]
    %v443 = vld [vmem:[#allocation8 + $0x1c8] sm:$0xff]
    %v444 = vld [vmem:[#allocation8 + $0x1d0] sm:$0xff]
    %v445 = vld [vmem:[#allocation8 + $0x1d8] sm:$0xff]
    %v446 = vld [vmem:[#allocation8 + $0x1e0] sm:$0xff]
    %v447 = vld [vmem:[#allocation8 + $0x1e8] sm:$0xff]
    %v448 = vld [vmem:[#allocation8 + $0x1f0] sm:$0xff]
    %v449 = vld [vmem:[#allocation8 + $0x1f8] sm:$0xff]
    %v450 = vld [vmem:[#allocation8 + $0x200] sm:$0xff]
    %v451 = vld [vmem:[#allocation8 + $0x208] sm:$0xff]
    %v452 = vld [vmem:[#allocation8 + $0x210] sm:$0xff]
    %v453 = vld [vmem:[#allocation8 + $0x218] sm:$0xff]
    %v454 = vld [vmem:[#allocation8 + $0x220] sm:$0xff]
    %v455 = vld [vmem:[#allocation8 + $0x228] sm:$0xff]
    %v456 = vld [vmem:[#allocation8 + $0x230] sm:$0xff]
    %v457 = vld [vmem:[#allocation8 + $0x238] sm:$0xff]
    %v458 = vld [vmem:[#allocation8 + $0x240] sm:$0xff]
    %v459 = vld [vmem:[#allocation8 + $0x248] sm:$0xff]
    %v460 = vld [vmem:[#allocation8 + $0x250] sm:$0xff]
    %v461 = vld [vmem:[#allocation8 + $0x258] sm:$0xff]
    %v462 = vld [vmem:[#allocation8 + $0x260] sm:$0xff]
    %v463 = vld [vmem:[#allocation8 + $0x268] sm:$0xff]
    %v464 = vld [vmem:[#allocation8 + $0x270] sm:$0xff]
    %v465 = vld [vmem:[#allocation8 + $0x278] sm:$0xff]
    %v466 = vld [vmem:[#allocation8 + $0x280] sm:$0xff]
    %v467 = vld [vmem:[#allocation8 + $0x288] sm:$0xff]
    %v468 = vld [vmem:[#allocation8 + $0x290] sm:$0xff]
    %v469 = vld [vmem:[#allocation8 + $0x298] sm:$0xff]
    %v470 = vld [vmem:[#allocation8 + $0x2a0] sm:$0xff]
    %v471 = vld [vmem:[#allocation8 + $0x2a8] sm:$0xff]
    %v472 = vld [vmem:[#allocation8 + $0x2b0] sm:$0xff]
    %v473 = vld [vmem:[#allocation8 + $0x2b8] sm:$0xff]
    %v474 = vld [vmem:[#allocation8 + $0x2c0] sm:$0xff]
    %v475 = vld [vmem:[#allocation8 + $0x2c8] sm:$0xff]
    %v476 = vld [vmem:[#allocation8 + $0x2d0] sm:$0xff]
    %v477 = vld [vmem:[#allocation8 + $0x2d8] sm:$0xff]
    %v478 = vld [vmem:[#allocation8 + $0x2e0] sm:$0xff]
    %v479 = vld [vmem:[#allocation8 + $0x2e8] sm:$0xff]
    %v480 = vld [vmem:[#allocation8 + $0x2f0] sm:$0xff]
    %v481 = vld [vmem:[#allocation8 + $0x2f8] sm:$0xff]
    %v482 = vld [vmem:[#allocation8 + $0x300] sm:$0xff]
    %v483 = vld [vmem:[#allocation8 + $0x308] sm:$0xff]
    %v484 = vld [vmem:[#allocation8 + $0x310] sm:$0xff]
    %v485 = vld [vmem:[#allocation8 + $0x318] sm:$0xff]
    %v486 = vld [vmem:[#allocation8 + $0x320] sm:$0xff]
    %v487 = vld [vmem:[#allocation8 + $0x328] sm:$0xff]
    %v488 = vld [vmem:[#allocation8 + $0x330] sm:$0xff]
    %v489 = vld [vmem:[#allocation8 + $0x338] sm:$0xff]
    %v490 = vld [vmem:[#allocation8 + $0x340] sm:$0xff]
    %v491 = vld [vmem:[#allocation8 + $0x348] sm:$0xff]
    %v492 = vld [vmem:[#allocation8 + $0x350] sm:$0xff]
    %v493 = vld [vmem:[#allocation8 + $0x358] sm:$0xff]
    %v494 = vld [vmem:[#allocation8 + $0x360] sm:$0xff]
    %v495 = vld [vmem:[#allocation8 + $0x368] sm:$0xff]
    %v496 = vld [vmem:[#allocation8 + $0x370] sm:$0xff]
    %v497 = vld [vmem:[#allocation8 + $0x378] sm:$0xff]
    %v498 = vld [vmem:[#allocation8 + $0x380] sm:$0xff]
    %v499 = vld [vmem:[#allocation8 + $0x388] sm:$0xff]
    %v500 = vld [vmem:[#allocation8 + $0x390] sm:$0xff]
    %v501 = vld [vmem:[#allocation8 + $0x398] sm:$0xff]
    %v502 = vld [vmem:[#allocation8 + $0x3a0] sm:$0xff]
    %v503 = vld [vmem:[#allocation8 + $0x3a8] sm:$0xff]
    %v504 = vld [vmem:[#allocation8 + $0x3b0] sm:$0xff]
    %v505 = vld [vmem:[#allocation8 + $0x3b8] sm:$0xff]
    %v506 = vld [vmem:[#allocation8 + $0x3c0] sm:$0xff]
    %v507 = vld [vmem:[#allocation8 + $0x3c8] sm:$0xff]
    %v508 = vld [vmem:[#allocation8 + $0x3d0] sm:$0xff]
    %v509 = vld [vmem:[#allocation8 + $0x3d8] sm:$0xff]
    %v510 = vld [vmem:[#allocation8 + $0x3e0] sm:$0xff]
    %v511 = vld [vmem:[#allocation8 + $0x3e8] sm:$0xff]
    %v512 = vld [vmem:[#allocation8 + $0x3f0] sm:$0xff]
    %v513 = vld [vmem:[#allocation8 + $0x3f8] sm:$0xff]
    %v514 = vld [vmem:[#allocation8 + $0x400] sm:$0xff]
    %v515 = vld [vmem:[#allocation8 + $0x408] sm:$0xff]
    %v516 = vld [vmem:[#allocation8 + $0x410] sm:$0xff]
    %v517 = vld [vmem:[#allocation8 + $0x418] sm:$0xff]
    %v518 = vld [vmem:[#allocation8 + $0x420] sm:$0xff]
    %v519 = vld [vmem:[#allocation8 + $0x428] sm:$0xff]
    %v520 = vld [vmem:[#allocation8 + $0x430] sm:$0xff]
    %v521 = vld [vmem:[#allocation8 + $0x438] sm:$0xff]
    %v522 = vld [vmem:[#allocation8 + $0x440] sm:$0xff]
    %v523 = vld [vmem:[#allocation8 + $0x448] sm:$0xff]
    %v524 = vld [vmem:[#allocation8 + $0x450] sm:$0xff]
    %v525 = vld [vmem:[#allocation8 + $0x458] sm:$0xff]
    %v526 = vld [vmem:[#allocation8 + $0x460] sm:$0xff]
    %v527 = vld [vmem:[#allocation8 + $0x468] sm:$0xff]
    %v528 = vld [vmem:[#allocation8 + $0x470] sm:$0xff]
    %v529 = vld [vmem:[#allocation8 + $0x478] sm:$0xff]
    %v530 = vld [vmem:[#allocation8 + $0x480] sm:$0xff]
    %v531 = vld [vmem:[#allocation8 + $0x488] sm:$0xff]
    %v532 = vld [vmem:[#allocation8 + $0x490] sm:$0xff]
    %v533 = vld [vmem:[#allocation8 + $0x498] sm:$0xff]
    %v534 = vld [vmem:[#allocation8 + $0x4a0] sm:$0xff]
    %v535 = vld [vmem:[#allocation8 + $0x4a8] sm:$0xff]
    %v536 = vld [vmem:[#allocation8 + $0x4b0] sm:$0xff]
    %v537 = vld [vmem:[#allocation8 + $0x4b8] sm:$0xff]
    %v538 = vld [vmem:[#allocation8 + $0x4c0] sm:$0xff]
    %v539 = vld [vmem:[#allocation8 + $0x4c8] sm:$0xff]
    %v540 = vld [vmem:[#allocation8 + $0x4d0] sm:$0xff]
    %v541 = vld [vmem:[#allocation8 + $0x4d8] sm:$0xff]
    %v542 = vld [vmem:[#allocation8 + $0x4e0] sm:$0xff]
    %v543 = vld [vmem:[#allocation8 + $0x4e8] sm:$0xff]
    %v544 = vld [vmem:[#allocation8 + $0x4f0] sm:$0xff]
    %v545 = vld [vmem:[#allocation8 + $0x4f8] sm:$0xff]
    %v546 = vld [vmem:[#allocation8 + $0x500] sm:$0xff]
    %v547 = vld [vmem:[#allocation8 + $0x508] sm:$0xff]
    %v548 = vld [vmem:[#allocation8 + $0x510] sm:$0xff]
    %v549 = vld [vmem:[#allocation8 + $0x518] sm:$0xff]
    %v550 = vld [vmem:[#allocation8 + $0x520] sm:$0xff]
    %v551 = vld [vmem:[#allocation8 + $0x528] sm:$0xff]
    %v552 = vld [vmem:[#allocation8 + $0x530] sm:$0xff]
    %v553 = vld [vmem:[#allocation8 + $0x538] sm:$0xff]
    %v554 = vld [vmem:[#allocation8 + $0x540] sm:$0xff]
    %v555 = vld [vmem:[#allocation8 + $0x548] sm:$0xff]
    %v556 = vld [vmem:[#allocation8 + $0x550] sm:$0xff]
    %v557 = vld [vmem:[#allocation8 + $0x558] sm:$0xff]
    %v558 = vld [vmem:[#allocation8 + $0x560] sm:$0xff]
    %v559 = vld [vmem:[#allocation8 + $0x568] sm:$0xff]
    %v560 = vld [vmem:[#allocation8 + $0x570] sm:$0xff]
    %v561 = vld [vmem:[#allocation8 + $0x578] sm:$0xff]
    %v562 = vld [vmem:[#allocation8 + $0x580] sm:$0xff]
    %v563 = vld [vmem:[#allocation8 + $0x588] sm:$0xff]
    %v564 = vld [vmem:[#allocation8 + $0x590] sm:$0xff]
    %v565 = vld [vmem:[#allocation8 + $0x598] sm:$0xff]
    %v566 = vld [vmem:[#allocation8 + $0x5a0] sm:$0xff]
    %v567 = vld [vmem:[#allocation8 + $0x5a8] sm:$0xff]
    %v568 = vld [vmem:[#allocation8 + $0x5b0] sm:$0xff]
    %v569 = vld [vmem:[#allocation8 + $0x5b8] sm:$0xff]
    %v570 = vld [vmem:[#allocation8 + $0x5c0] sm:$0xff]
    %v571 = vld [vmem:[#allocation8 + $0x5c8] sm:$0xff]
    %v572 = vld [vmem:[#allocation8 + $0x5d0] sm:$0xff]
    %v573 = vld [vmem:[#allocation8 + $0x5d8] sm:$0xff]
    %v574 = vld [vmem:[#allocation8 + $0x5e0] sm:$0xff]
    %v575 = vld [vmem:[#allocation8 + $0x5e8] sm:$0xff]
    %v576 = vld [vmem:[#allocation8 + $0x5f0] sm:$0xff]
    %v577 = vld [vmem:[#allocation8 + $0x5f8] sm:$0xff]
    %v578 = vld [vmem:[#allocation8 + $0x600] sm:$0xff]
    %v579 = vld [vmem:[#allocation8 + $0x608] sm:$0xff]
    %v580 = vld [vmem:[#allocation8 + $0x610] sm:$0xff]
    %v581 = vld [vmem:[#allocation8 + $0x618] sm:$0xff]
    %v582 = vld [vmem:[#allocation8 + $0x620] sm:$0xff]
    %v583 = vld [vmem:[#allocation8 + $0x628] sm:$0xff]
    %v584 = vld [vmem:[#allocation8 + $0x630] sm:$0xff]
    %v585 = vld [vmem:[#allocation8 + $0x638] sm:$0xff]
    %v586 = vld [vmem:[#allocation8 + $0x640] sm:$0xff]
    %v587 = vld [vmem:[#allocation8 + $0x648] sm:$0xff]
    %v588 = vld [vmem:[#allocation8 + $0x650] sm:$0xff]
    %v589 = vld [vmem:[#allocation8 + $0x658] sm:$0xff]
    %v590 = vld [vmem:[#allocation8 + $0x660] sm:$0xff]
    %v591 = vld [vmem:[#allocation8 + $0x668] sm:$0xff]
    %v592 = vld [vmem:[#allocation8 + $0x670] sm:$0xff]
    %v593 = vld [vmem:[#allocation8 + $0x678] sm:$0xff]
    %v594 = vld [vmem:[#allocation8 + $0x680] sm:$0xff]
    %v595 = vld [vmem:[#allocation8 + $0x688] sm:$0xff]
    %v596 = vld [vmem:[#allocation8 + $0x690] sm:$0xff]
    %v597 = vld [vmem:[#allocation8 + $0x698] sm:$0xff]
    %v598 = vld [vmem:[#allocation8 + $0x6a0] sm:$0xff]
    %v599 = vld [vmem:[#allocation8 + $0x6a8] sm:$0xff]
    %v600 = vld [vmem:[#allocation8 + $0x6b0] sm:$0xff]
    %v601 = vld [vmem:[#allocation8 + $0x6b8] sm:$0xff]
    %v602 = vld [vmem:[#allocation8 + $0x6c0] sm:$0xff]
    %v603 = vld [vmem:[#allocation8 + $0x6c8] sm:$0xff]
    %v604 = vld [vmem:[#allocation8 + $0x6d0] sm:$0xff]
    %v605 = vld [vmem:[#allocation8 + $0x6d8] sm:$0xff]
    %v606 = vld [vmem:[#allocation8 + $0x6e0] sm:$0xff]
    %v607 = vld [vmem:[#allocation8 + $0x6e8] sm:$0xff]
    %v608 = vld [vmem:[#allocation8 + $0x6f0] sm:$0xff]
    %v609 = vld [vmem:[#allocation8 + $0x6f8] sm:$0xff]
    %v610 = vld [vmem:[#allocation8 + $0x700] sm:$0xff]
    %v611 = vld [vmem:[#allocation8 + $0x708] sm:$0xff]
    %v612 = vld [vmem:[#allocation8 + $0x710] sm:$0xff]
    %v613 = vld [vmem:[#allocation8 + $0x718] sm:$0xff]
    %v614 = vld [vmem:[#allocation8 + $0x720] sm:$0xff]
    %v615 = vld [vmem:[#allocation8 + $0x728] sm:$0xff]
    %v616 = vld [vmem:[#allocation8 + $0x730] sm:$0xff]
    %v617 = vld [vmem:[#allocation8 + $0x738] sm:$0xff]
    %v618 = vld [vmem:[#allocation8 + $0x740] sm:$0xff]
    %v619 = vld [vmem:[#allocation8 + $0x748] sm:$0xff]
    %v620 = vld [vmem:[#allocation8 + $0x750] sm:$0xff]
    %v621 = vld [vmem:[#allocation8 + $0x758] sm:$0xff]
    %v622 = vld [vmem:[#allocation8 + $0x760] sm:$0xff]
    %v623 = vld [vmem:[#allocation8 + $0x768] sm:$0xff]
    %v624 = vld [vmem:[#allocation8 + $0x770] sm:$0xff]
    %v625 = vld [vmem:[#allocation8 + $0x778] sm:$0xff]
    %v626 = vld [vmem:[#allocation8 + $0x780] sm:$0xff]
    %v627 = vld [vmem:[#allocation8 + $0x788] sm:$0xff]
    %v628 = vld [vmem:[#allocation8 + $0x790] sm:$0xff]
    %v629 = vld [vmem:[#allocation8 + $0x798] sm:$0xff]
    %v630 = vld [vmem:[#allocation8 + $0x7a0] sm:$0xff]
    %v631 = vld [vmem:[#allocation8 + $0x7a8] sm:$0xff]
    %v632 = vld [vmem:[#allocation8 + $0x7b0] sm:$0xff]
    %v633 = vld [vmem:[#allocation8 + $0x7b8] sm:$0xff]
    %v634 = vld [vmem:[#allocation8 + $0x7c0] sm:$0xff]
    %v635 = vld [vmem:[#allocation8 + $0x7c8] sm:$0xff]
    %v636 = vld [vmem:[#allocation8 + $0x7d0] sm:$0xff]
    %v637 = vld [vmem:[#allocation8 + $0x7d8] sm:$0xff]
    %v638 = vld [vmem:[#allocation8 + $0x7e0] sm:$0xff]
    %v639 = vld [vmem:[#allocation8 + $0x7e8] sm:$0xff]
    %v640 = vld [vmem:[#allocation8 + $0x7f0] sm:$0xff]
    %v641 = vld [vmem:[#allocation8 + $0x7f8] sm:$0xff]
    %v642 = vld [vmem:[#allocation8 + $0x800] sm:$0xff]
    %v643 = vld [vmem:[#allocation8 + $0x808] sm:$0xff]
    %v644 = vld [vmem:[#allocation8 + $0x810] sm:$0xff]
    %v645 = vld [vmem:[#allocation8 + $0x818] sm:$0xff]
    %v646 = vld [vmem:[#allocation8 + $0x820] sm:$0xff]
    %v647 = vld [vmem:[#allocation8 + $0x828] sm:$0xff]
    %v648 = vld [vmem:[#allocation8 + $0x830] sm:$0xff]
    %v649 = vld [vmem:[#allocation8 + $0x838] sm:$0xff]
    %v650 = vld [vmem:[#allocation8 + $0x840] sm:$0xff]
    %v651 = vld [vmem:[#allocation8 + $0x848] sm:$0xff]
    %v652 = vld [vmem:[#allocation8 + $0x850] sm:$0xff]
    %v653 = vld [vmem:[#allocation8 + $0x858] sm:$0xff]
    %v654 = vld [vmem:[#allocation8 + $0x860] sm:$0xff]
    %v655 = vld [vmem:[#allocation8 + $0x868] sm:$0xff]
    %v656 = vld [vmem:[#allocation8 + $0x870] sm:$0xff]
    %v657 = vld [vmem:[#allocation8 + $0x878] sm:$0xff]
    %v658 = vld [vmem:[#allocation8 + $0x880] sm:$0xff]
    %v659 = vld [vmem:[#allocation8 + $0x888] sm:$0xff]
    %v660 = vld [vmem:[#allocation8 + $0x890] sm:$0xff]
    %v661 = vld [vmem:[#allocation8 + $0x898] sm:$0xff]
    %v662 = vld [vmem:[#allocation8 + $0x8a0] sm:$0xff]
    %v663 = vld [vmem:[#allocation8 + $0x8a8] sm:$0xff]
    %v664 = vld [vmem:[#allocation8 + $0x8b0] sm:$0xff]
    %v665 = vld [vmem:[#allocation8 + $0x8b8] sm:$0xff]
    %v666 = vld [vmem:[#allocation8 + $0x8c0] sm:$0xff]
    %v667 = vld [vmem:[#allocation8 + $0x8c8] sm:$0xff]
    %v668 = vld [vmem:[#allocation8 + $0x8d0] sm:$0xff]
    %v669 = vld [vmem:[#allocation8 + $0x8d8] sm:$0xff]
    %v670 = vld [vmem:[#allocation8 + $0x8e0] sm:$0xff]
    %v671 = vld [vmem:[#allocation8 + $0x8e8] sm:$0xff]
    %v672 = vld [vmem:[#allocation8 + $0x8f0] sm:$0xff]
    %v673 = vld [vmem:[#allocation8 + $0x8f8] sm:$0xff]
    %v674 = vld [vmem:[#allocation8 + $0x900] sm:$0xff]
    %v675 = vld [vmem:[#allocation8 + $0x908] sm:$0xff]
    %v676 = vld [vmem:[#allocation8 + $0x910] sm:$0xff]
    %v677 = vld [vmem:[#allocation8 + $0x918] sm:$0xff]
    %v678 = vld [vmem:[#allocation8 + $0x920] sm:$0xff]
    %v679 = vld [vmem:[#allocation8 + $0x928] sm:$0xff]
    %v680 = vld [vmem:[#allocation8 + $0x930] sm:$0xff]
    %v681 = vld [vmem:[#allocation8 + $0x938] sm:$0xff]
    %v682 = vld [vmem:[#allocation8 + $0x940] sm:$0xff]
    %v683 = vld [vmem:[#allocation8 + $0x948] sm:$0xff]
    %v684 = vld [vmem:[#allocation8 + $0x950] sm:$0xff]
    %v685 = vld [vmem:[#allocation8 + $0x958] sm:$0xff]
    %v686 = vld [vmem:[#allocation8 + $0x960] sm:$0xff]
    %v687 = vld [vmem:[#allocation8 + $0x968] sm:$0xff]
    %v688 = vld [vmem:[#allocation8 + $0x970] sm:$0xff]
    %v689 = vld [vmem:[#allocation8 + $0x978] sm:$0xff]
    %v690 = vld [vmem:[#allocation8 + $0x980] sm:$0xff]
    %v691 = vld [vmem:[#allocation8 + $0x988] sm:$0xff]
    %v692 = vld [vmem:[#allocation8 + $0x990] sm:$0xff]
    %v693 = vld [vmem:[#allocation8 + $0x998] sm:$0xff]
    %v694 = vld [vmem:[#allocation8 + $0x9a0] sm:$0xff]
    %v695 = vld [vmem:[#allocation8 + $0x9a8] sm:$0xff]
    %v696 = vld [vmem:[#allocation8 + $0x9b0] sm:$0xff]
    %v697 = vld [vmem:[#allocation8 + $0x9b8] sm:$0xff]
    %v698 = vld [vmem:[#allocation8 + $0x9c0] sm:$0xff]
    %v699 = vld [vmem:[#allocation8 + $0x9c8] sm:$0xff]
    %v700 = vld [vmem:[#allocation8 + $0x9d0] sm:$0xff]
    %v701 = vld [vmem:[#allocation8 + $0x9d8] sm:$0xff]
    %v702 = vld [vmem:[#allocation8 + $0x9e0] sm:$0xff]
    %v703 = vld [vmem:[#allocation8 + $0x9e8] sm:$0xff]
    %v704 = vld [vmem:[#allocation8 + $0x9f0] sm:$0xff]
    %v705 = vld [vmem:[#allocation8 + $0x9f8] sm:$0xff]
    %v706 = vld [vmem:[#allocation8 + $0xa00] sm:$0xff]
    %v707 = vld [vmem:[#allocation8 + $0xa08] sm:$0xff]
    %v708 = vld [vmem:[#allocation8 + $0xa10] sm:$0xff]
    %v709 = vld [vmem:[#allocation8 + $0xa18] sm:$0xff]
    %v710 = vld [vmem:[#allocation8 + $0xa20] sm:$0xff]
    %v711 = vld [vmem:[#allocation8 + $0xa28] sm:$0xff]
    %v712 = vld [vmem:[#allocation8 + $0xa30] sm:$0xff]
    %v713 = vld [vmem:[#allocation8 + $0xa38] sm:$0xff]
    %v714 = vld [vmem:[#allocation8 + $0xa40] sm:$0xff]
    %v715 = vld [vmem:[#allocation8 + $0xa48] sm:$0xff]
    %v716 = vld [vmem:[#allocation8 + $0xa50] sm:$0xff]
    %v717 = vld [vmem:[#allocation8 + $0xa58] sm:$0xff]
    %v718 = vld [vmem:[#allocation8 + $0xa60] sm:$0xff]
    %v719 = vld [vmem:[#allocation8 + $0xa68] sm:$0xff]
    %v720 = vld [vmem:[#allocation8 + $0xa70] sm:$0xff]
    %v721 = vld [vmem:[#allocation8 + $0xa78] sm:$0xff]
    %v722 = vld [vmem:[#allocation8 + $0xa80] sm:$0xff]
    %v723 = vld [vmem:[#allocation8 + $0xa88] sm:$0xff]
    %v724 = vld [vmem:[#allocation8 + $0xa90] sm:$0xff]
    %v725 = vld [vmem:[#allocation8 + $0xa98] sm:$0xff]
    %v726 = vld [vmem:[#allocation8 + $0xaa0] sm:$0xff]
    %v727 = vld [vmem:[#allocation8 + $0xaa8] sm:$0xff]
    %v728 = vld [vmem:[#allocation8 + $0xab0] sm:$0xff]
    %v729 = vld [vmem:[#allocation8 + $0xab8] sm:$0xff]
    %v730 = vld [vmem:[#allocation8 + $0xac0] sm:$0xff]
    %v731 = vld [vmem:[#allocation8 + $0xac8] sm:$0xff]
    %v732 = vld [vmem:[#allocation8 + $0xad0] sm:$0xff]
    %v733 = vld [vmem:[#allocation8 + $0xad8] sm:$0xff]
    %v734 = vld [vmem:[#allocation8 + $0xae0] sm:$0xff]
    %v735 = vld [vmem:[#allocation8 + $0xae8] sm:$0xff]
    %v736 = vld [vmem:[#allocation8 + $0xaf0] sm:$0xff]
    %v737 = vld [vmem:[#allocation8 + $0xaf8] sm:$0xff]
    %v738 = vld [vmem:[#allocation8 + $0xb00] sm:$0xff]
    %v739 = vld [vmem:[#allocation8 + $0xb08] sm:$0xff]
    %v740 = vld [vmem:[#allocation8 + $0xb10] sm:$0xff]
    %v741 = vld [vmem:[#allocation8 + $0xb18] sm:$0xff]
    %v742 = vld [vmem:[#allocation8 + $0xb20] sm:$0xff]
    %v743 = vld [vmem:[#allocation8 + $0xb28] sm:$0xff]
    %v744 = vld [vmem:[#allocation8 + $0xb30] sm:$0xff]
    %v745 = vld [vmem:[#allocation8 + $0xb38] sm:$0xff]
    %v746 = vld [vmem:[#allocation8 + $0xb40] sm:$0xff]
    %v747 = vld [vmem:[#allocation8 + $0xb48] sm:$0xff]
    %v748 = vld [vmem:[#allocation8 + $0xb50] sm:$0xff]
    %v749 = vld [vmem:[#allocation8 + $0xb58] sm:$0xff]
    %v750 = vld [vmem:[#allocation8 + $0xb60] sm:$0xff]
    %v751 = vld [vmem:[#allocation8 + $0xb68] sm:$0xff]
    %v752 = vld [vmem:[#allocation8 + $0xb70] sm:$0xff]
    %v753 = vld [vmem:[#allocation8 + $0xb78] sm:$0xff]
    %v754 = vld [vmem:[#allocation8 + $0xb80] sm:$0xff]
    %v755 = vld [vmem:[#allocation8 + $0xb88] sm:$0xff]
    %v756 = vld [vmem:[#allocation8 + $0xb90] sm:$0xff]
    %v757 = vld [vmem:[#allocation8 + $0xb98] sm:$0xff]
    %v758 = vld [vmem:[#allocation8 + $0xba0] sm:$0xff]
    %v759 = vld [vmem:[#allocation8 + $0xba8] sm:$0xff]
    %v760 = vld [vmem:[#allocation8 + $0xbb0] sm:$0xff]
    %v761 = vld [vmem:[#allocation8 + $0xbb8] sm:$0xff]
    %v762 = vld [vmem:[#allocation8 + $0xbc0] sm:$0xff]
    %v763 = vld [vmem:[#allocation8 + $0xbc8] sm:$0xff]
    %v764 = vld [vmem:[#allocation8 + $0xbd0] sm:$0xff]
    %v765 = vld [vmem:[#allocation8 + $0xbd8] sm:$0xff]
    %v766 = vld [vmem:[#allocation8 + $0xbe0] sm:$0xff]
    %v767 = vld [vmem:[#allocation8 + $0xbe8] sm:$0xff]
    %v768 = vld [vmem:[#allocation8 + $0xbf0] sm:$0xff]
    %v769 = vld [vmem:[#allocation8 + $0xbf8] sm:$0xff]
    %v770 = vld [vmem:[#allocation8 + $0xc00] sm:$0xff]
    %v771 = vld [vmem:[#allocation8 + $0xc08] sm:$0xff]
    %v772 = vld [vmem:[#allocation8 + $0xc10] sm:$0xff]
    %v773 = vld [vmem:[#allocation8 + $0xc18] sm:$0xff]
    %v774 = vld [vmem:[#allocation8 + $0xc20] sm:$0xff]
    %v775 = vld [vmem:[#allocation8 + $0xc28] sm:$0xff]
    %v776 = vld [vmem:[#allocation8 + $0xc30] sm:$0xff]
    %v777 = vld [vmem:[#allocation8 + $0xc38] sm:$0xff]
    %v778 = vld [vmem:[#allocation8 + $0xc40] sm:$0xff]
    %v779 = vld [vmem:[#allocation8 + $0xc48] sm:$0xff]
    %v780 = vld [vmem:[#allocation8 + $0xc50] sm:$0xff]
    %v781 = vld [vmem:[#allocation8 + $0xc58] sm:$0xff]
    %v782 = vld [vmem:[#allocation8 + $0xc60] sm:$0xff]
    %v783 = vld [vmem:[#allocation8 + $0xc68] sm:$0xff]
    %v784 = vld [vmem:[#allocation8 + $0xc70] sm:$0xff]
    %v785 = vld [vmem:[#allocation8 + $0xc78] sm:$0xff]
    %v786 = vld [vmem:[#allocation8 + $0xc80] sm:$0xff]
    %v787 = vld [vmem:[#allocation8 + $0xc88] sm:$0xff]
    %v788 = vld [vmem:[#allocation8 + $0xc90] sm:$0xff]
    %v789 = vld [vmem:[#allocation8 + $0xc98] sm:$0xff]
    %v790 = vld [vmem:[#allocation8 + $0xca0] sm:$0xff]
    %v791 = vld [vmem:[#allocation8 + $0xca8] sm:$0xff]
    %v792 = vld [vmem:[#allocation8 + $0xcb0] sm:$0xff]
    %v793 = vld [vmem:[#allocation8 + $0xcb8] sm:$0xff]
    %v794 = vld [vmem:[#allocation8 + $0xcc0] sm:$0xff]
    %v795 = vld [vmem:[#allocation8 + $0xcc8] sm:$0xff]
    %v796 = vld [vmem:[#allocation8 + $0xcd0] sm:$0xff]
    %v797 = vld [vmem:[#allocation8 + $0xcd8] sm:$0xff]
    %v798 = vld [vmem:[#allocation8 + $0xce0] sm:$0xff]
    %v799 = vld [vmem:[#allocation8 + $0xce8] sm:$0xff]
    %v800 = vld [vmem:[#allocation8 + $0xcf0] sm:$0xff]
    %v801 = vld [vmem:[#allocation8 + $0xcf8] sm:$0xff]
    %v802 = vld [vmem:[#allocation8 + $0xd00] sm:$0xff]
    %v803 = vld [vmem:[#allocation8 + $0xd08] sm:$0xff]
    %v804 = vld [vmem:[#allocation8 + $0xd10] sm:$0xff]
    %v805 = vld [vmem:[#allocation8 + $0xd18] sm:$0xff]
    %v806 = vld [vmem:[#allocation8 + $0xd20] sm:$0xff]
    %v807 = vld [vmem:[#allocation8 + $0xd28] sm:$0xff]
    %v808 = vld [vmem:[#allocation8 + $0xd30] sm:$0xff]
    %v809 = vld [vmem:[#allocation8 + $0xd38] sm:$0xff]
    %v810 = vld [vmem:[#allocation8 + $0xd40] sm:$0xff]
    %v811 = vld [vmem:[#allocation8 + $0xd48] sm:$0xff]
    %v812 = vld [vmem:[#allocation8 + $0xd50] sm:$0xff]
    %v813 = vld [vmem:[#allocation8 + $0xd58] sm:$0xff]
    %v814 = vld [vmem:[#allocation8 + $0xd60] sm:$0xff]
    %v815 = vld [vmem:[#allocation8 + $0xd68] sm:$0xff]
    %v816 = vld [vmem:[#allocation8 + $0xd70] sm:$0xff]
    %v817 = vld [vmem:[#allocation8 + $0xd78] sm:$0xff]
    %v818 = vld [vmem:[#allocation8 + $0xd80] sm:$0xff]
    %v819 = vld [vmem:[#allocation8 + $0xd88] sm:$0xff]
    %v820 = vld [vmem:[#allocation8 + $0xd90] sm:$0xff]
    %v821 = vld [vmem:[#allocation8 + $0xd98] sm:$0xff]
    %v822 = vld [vmem:[#allocation8 + $0xda0] sm:$0xff]
    %v823 = vld [vmem:[#allocation8 + $0xda8] sm:$0xff]
    %v824 = vld [vmem:[#allocation8 + $0xdb0] sm:$0xff]
    %v825 = vld [vmem:[#allocation8 + $0xdb8] sm:$0xff]
    %v826 = vld [vmem:[#allocation8 + $0xdc0] sm:$0xff]
    %v827 = vld [vmem:[#allocation8 + $0xdc8] sm:$0xff]
    %v828 = vld [vmem:[#allocation8 + $0xdd0] sm:$0xff]
    %v829 = vld [vmem:[#allocation8 + $0xdd8] sm:$0xff]
    %v830 = vld [vmem:[#allocation8 + $0xde0] sm:$0xff]
    %v831 = vld [vmem:[#allocation8 + $0xde8] sm:$0xff]
    %v832 = vld [vmem:[#allocation8 + $0xdf0] sm:$0xff]
    %v833 = vld [vmem:[#allocation8 + $0xdf8] sm:$0xff]
    %v834 = vld [vmem:[#allocation8 + $0xe00] sm:$0xff]
    %v835 = vld [vmem:[#allocation8 + $0xe08] sm:$0xff]
    %v836 = vld [vmem:[#allocation8 + $0xe10] sm:$0xff]
    %v837 = vld [vmem:[#allocation8 + $0xe18] sm:$0xff]
    %v838 = vld [vmem:[#allocation8 + $0xe20] sm:$0xff]
    %v839 = vld [vmem:[#allocation8 + $0xe28] sm:$0xff]
    %v840 = vld [vmem:[#allocation8 + $0xe30] sm:$0xff]
    %v841 = vld [vmem:[#allocation8 + $0xe38] sm:$0xff]
    %v842 = vld [vmem:[#allocation8 + $0xe40] sm:$0xff]
    %v843 = vld [vmem:[#allocation8 + $0xe48] sm:$0xff]
    %v844 = vld [vmem:[#allocation8 + $0xe50] sm:$0xff]
    %v845 = vld [vmem:[#allocation8 + $0xe58] sm:$0xff]
    %v846 = vld [vmem:[#allocation8 + $0xe60] sm:$0xff]
    %v847 = vld [vmem:[#allocation8 + $0xe68] sm:$0xff]
    %v848 = vld [vmem:[#allocation8 + $0xe70] sm:$0xff]
    %v849 = vld [vmem:[#allocation8 + $0xe78] sm:$0xff]
    %v850 = vld [vmem:[#allocation8 + $0xe80] sm:$0xff]
    %v851 = vld [vmem:[#allocation8 + $0xe88] sm:$0xff]
    %v852 = vld [vmem:[#allocation8 + $0xe90] sm:$0xff]
    %v853 = vld [vmem:[#allocation8 + $0xe98] sm:$0xff]
    %v854 = vld [vmem:[#allocation8 + $0xea0] sm:$0xff]
    %v855 = vld [vmem:[#allocation8 + $0xea8] sm:$0xff]
    %v856 = vld [vmem:[#allocation8 + $0xeb0] sm:$0xff]
    %v857 = vld [vmem:[#allocation8 + $0xeb8] sm:$0xff]
    %v858 = vld [vmem:[#allocation8 + $0xec0] sm:$0xff]
    %v859 = vld [vmem:[#allocation8 + $0xec8] sm:$0xff]
    %v860 = vld [vmem:[#allocation8 + $0xed0] sm:$0xff]
    %v861 = vld [vmem:[#allocation8 + $0xed8] sm:$0xff]
    %v862 = vld [vmem:[#allocation8 + $0xee0] sm:$0xff]
    %v863 = vld [vmem:[#allocation8 + $0xee8] sm:$0xff]
    %v864 = vld [vmem:[#allocation8 + $0xef0] sm:$0xff]
    %v865 = vld [vmem:[#allocation8 + $0xef8] sm:$0xff]
    %v866 = vld [vmem:[#allocation8 + $0xf00] sm:$0xff]
    %v867 = vld [vmem:[#allocation8 + $0xf08] sm:$0xff]
    %v868 = vld [vmem:[#allocation8 + $0xf10] sm:$0xff]
    %v869 = vld [vmem:[#allocation8 + $0xf18] sm:$0xff]
    %v870 = vld [vmem:[#allocation8 + $0xf20] sm:$0xff]
    %v871 = vld [vmem:[#allocation8 + $0xf28] sm:$0xff]
    %v872 = vld [vmem:[#allocation8 + $0xf30] sm:$0xff]
    %v873 = vld [vmem:[#allocation8 + $0xf38] sm:$0xff]
    %v874 = vld [vmem:[#allocation8 + $0xf40] sm:$0xff]
    %v875 = vld [vmem:[#allocation8 + $0xf48] sm:$0xff]
    %v876 = vld [vmem:[#allocation8 + $0xf50] sm:$0xff]
    %v877 = vld [vmem:[#allocation8 + $0xf58] sm:$0xff]
    %v878 = vld [vmem:[#allocation8 + $0xf60] sm:$0xff]
    %v879 = vld [vmem:[#allocation8 + $0xf68] sm:$0xff]
    %v880 = vld [vmem:[#allocation8 + $0xf70] sm:$0xff]
    %v881 = vld [vmem:[#allocation8 + $0xf78] sm:$0xff]
    %v882 = vld [vmem:[#allocation8 + $0xf80] sm:$0xff]
    %v883 = vld [vmem:[#allocation8 + $0xf88] sm:$0xff]
    %v884 = vld [vmem:[#allocation8 + $0xf90] sm:$0xff]
    %v885 = vld [vmem:[#allocation8 + $0xf98] sm:$0xff]
    %v886 = vld [vmem:[#allocation8 + $0xfa0] sm:$0xff]
    %v887 = vld [vmem:[#allocation8 + $0xfa8] sm:$0xff]
    %v888 = vld [vmem:[#allocation8 + $0xfb0] sm:$0xff]
    %v889 = vld [vmem:[#allocation8 + $0xfb8] sm:$0xff]
    %v890 = vld [vmem:[#allocation8 + $0xfc0] sm:$0xff]
    %v891 = vld [vmem:[#allocation8 + $0xfc8] sm:$0xff]
    %v892 = vld [vmem:[#allocation8 + $0xfd0] sm:$0xff]
    %v893 = vld [vmem:[#allocation8 + $0xfd8] sm:$0xff]
    %v894 = vld [vmem:[#allocation8 + $0xfe0] sm:$0xff]
    %v895 = vld [vmem:[#allocation8 + $0xfe8] sm:$0xff]
    %v896 = vld [vmem:[#allocation8 + $0xff0] sm:$0xff]
    %v897 = vld [vmem:[#allocation8 + $0xff8] sm:$0xff]
    %v898 = vld [vmem:[#allocation8 + $0x1000] sm:$0xff]
    %v899 = vld [vmem:[#allocation8 + $0x1008] sm:$0xff]
    %v900 = vld [vmem:[#allocation8 + $0x1010] sm:$0xff]
    %v901 = vld [vmem:[#allocation8 + $0x1018] sm:$0xff]
    %v902 = vld [vmem:[#allocation8 + $0x1020] sm:$0xff]
    %v903 = vld [vmem:[#allocation8 + $0x1028] sm:$0xff]
    %v904 = vld [vmem:[#allocation8 + $0x1030] sm:$0xff]
    %v905 = vld [vmem:[#allocation8 + $0x1038] sm:$0xff]
    %v906 = vld [vmem:[#allocation8 + $0x1040] sm:$0xff]
    %v907 = vld [vmem:[#allocation8 + $0x1048] sm:$0xff]
    %v908 = vld [vmem:[#allocation8 + $0x1050] sm:$0xff]
    %v909 = vld [vmem:[#allocation8 + $0x1058] sm:$0xff]
    %v910 = vld [vmem:[#allocation8 + $0x1060] sm:$0xff]
    %v911 = vld [vmem:[#allocation8 + $0x1068] sm:$0xff]
    %v912 = vld [vmem:[#allocation8 + $0x1070] sm:$0xff]
    %v913 = vld [vmem:[#allocation8 + $0x1078] sm:$0xff]
    %v914 = vld [vmem:[#allocation8 + $0x1080] sm:$0xff]
    %v915 = vld [vmem:[#allocation8 + $0x1088] sm:$0xff]
    %v916 = vld [vmem:[#allocation8 + $0x1090] sm:$0xff]
    %v917 = vld [vmem:[#allocation8 + $0x1098] sm:$0xff]
    %v918 = vld [vmem:[#allocation8 + $0x10a0] sm:$0xff]
    %v919 = vld [vmem:[#allocation8 + $0x10a8] sm:$0xff]
    %v920 = vld [vmem:[#allocation8 + $0x10b0] sm:$0xff]
    %v921 = vld [vmem:[#allocation8 + $0x10b8] sm:$0xff]
    %v922 = vld [vmem:[#allocation8 + $0x10c0] sm:$0xff]
    %v923 = vld [vmem:[#allocation8 + $0x10c8] sm:$0xff]
    %v924 = vld [vmem:[#allocation8 + $0x10d0] sm:$0xff]
    %v925 = vld [vmem:[#allocation8 + $0x10d8] sm:$0xff]
    %v926 = vld [vmem:[#allocation8 + $0x10e0] sm:$0xff]
    %v927 = vld [vmem:[#allocation8 + $0x10e8] sm:$0xff]
    %v928 = vld [vmem:[#allocation8 + $0x10f0] sm:$0xff]
    %v929 = vld [vmem:[#allocation8 + $0x10f8] sm:$0xff]
    %v930 = vld [vmem:[#allocation8 + $0x1100] sm:$0xff]
    %v931 = vld [vmem:[#allocation8 + $0x1108] sm:$0xff]
    %v932 = vld [vmem:[#allocation8 + $0x1110] sm:$0xff]
    %v933 = vld [vmem:[#allocation8 + $0x1118] sm:$0xff]
    %v934 = vld [vmem:[#allocation8 + $0x1120] sm:$0xff]
    %v935 = vld [vmem:[#allocation8 + $0x1128] sm:$0xff]
    %v936 = vld [vmem:[#allocation8 + $0x1130] sm:$0xff]
    %v937 = vld [vmem:[#allocation8 + $0x1138] sm:$0xff]
    %v938 = vld [vmem:[#allocation8 + $0x1140] sm:$0xff]
    %v939 = vld [vmem:[#allocation8 + $0x1148] sm:$0xff]
    %v940 = vld [vmem:[#allocation8 + $0x1150] sm:$0xff]
    %v941 = vld [vmem:[#allocation8 + $0x1158] sm:$0xff]
    %v942 = vld [vmem:[#allocation8 + $0x1160] sm:$0xff]
    %v943 = vld [vmem:[#allocation8 + $0x1168] sm:$0xff]
    %v944 = vld [vmem:[#allocation8 + $0x1170] sm:$0xff]
    %v945 = vld [vmem:[#allocation8 + $0x1178] sm:$0xff]
    %v946 = vld [vmem:[#allocation8 + $0x1180] sm:$0xff]
    %v947 = vld [vmem:[#allocation8 + $0x1188] sm:$0xff]
    %v948 = vld [vmem:[#allocation8 + $0x1190] sm:$0xff]
    %v949 = vld [vmem:[#allocation8 + $0x1198] sm:$0xff]
    %v950 = vld [vmem:[#allocation8 + $0x11a0] sm:$0xff]
    %v951 = vld [vmem:[#allocation8 + $0x11a8] sm:$0xff]
    %v952 = vld [vmem:[#allocation8 + $0x11b0] sm:$0xff]
    %v953 = vld [vmem:[#allocation8 + $0x11b8] sm:$0xff]
    %v954 = vld [vmem:[#allocation8 + $0x11c0] sm:$0xff]
    %v955 = vld [vmem:[#allocation8 + $0x11c8] sm:$0xff]
    %v956 = vld [vmem:[#allocation8 + $0x11d0] sm:$0xff]
    %v957 = vld [vmem:[#allocation8 + $0x11d8] sm:$0xff]
    %v958 = vld [vmem:[#allocation8 + $0x11e0] sm:$0xff]
    %v959 = vld [vmem:[#allocation8 + $0x11e8] sm:$0xff]
    %v960 = vld [vmem:[#allocation8 + $0x11f0] sm:$0xff]
    %v961 = vld [vmem:[#allocation8 + $0x11f8] sm:$0xff]
    %v962 = vld [vmem:[#allocation8 + $0x1200] sm:$0xff]
    %v963 = vld [vmem:[#allocation8 + $0x1208] sm:$0xff]
    %v964 = vld [vmem:[#allocation8 + $0x1210] sm:$0xff]
    %v965 = vld [vmem:[#allocation8 + $0x1218] sm:$0xff]
    %v966 = vld [vmem:[#allocation8 + $0x1220] sm:$0xff]
    %v967 = vld [vmem:[#allocation8 + $0x1228] sm:$0xff]
    %v968 = vld [vmem:[#allocation8 + $0x1230] sm:$0xff]
    %v969 = vld [vmem:[#allocation8 + $0x1238] sm:$0xff]
    %v970 = vld [vmem:[#allocation8 + $0x1240] sm:$0xff]
    %v971 = vld [vmem:[#allocation8 + $0x1248] sm:$0xff]
    %v972 = vld [vmem:[#allocation8 + $0x1250] sm:$0xff]
    %v973 = vld [vmem:[#allocation8 + $0x1258] sm:$0xff]
    %v974 = vld [vmem:[#allocation8 + $0x1260] sm:$0xff]
    %v975 = vld [vmem:[#allocation8 + $0x1268] sm:$0xff]
    %v976 = vld [vmem:[#allocation8 + $0x1270] sm:$0xff]
    %v977 = vld [vmem:[#allocation8 + $0x1278] sm:$0xff]
    %v978 = vld [vmem:[#allocation8 + $0x1280] sm:$0xff]
    %v979 = vld [vmem:[#allocation8 + $0x1288] sm:$0xff]
    %v980 = vld [vmem:[#allocation8 + $0x1290] sm:$0xff]
    %v981 = vld [vmem:[#allocation8 + $0x1298] sm:$0xff]
    %v982 = vld [vmem:[#allocation8 + $0x12a0] sm:$0xff]
    %v983 = vld [vmem:[#allocation8 + $0x12a8] sm:$0xff]
    %v984 = vld [vmem:[#allocation8 + $0x12b0] sm:$0xff]
    %v985 = vld [vmem:[#allocation8 + $0x12b8] sm:$0xff]
    %v986 = vld [vmem:[#allocation8 + $0x12c0] sm:$0xff]
    %v987 = vld [vmem:[#allocation8 + $0x12c8] sm:$0xff]
    %v988 = vld [vmem:[#allocation8 + $0x12d0] sm:$0xff]
    %v989 = vld [vmem:[#allocation8 + $0x12d8] sm:$0xff]
    %v990 = vld [vmem:[#allocation8 + $0x12e0] sm:$0xff]
    %v991 = vld [vmem:[#allocation8 + $0x12e8] sm:$0xff]
    %v992 = vld [vmem:[#allocation8 + $0x12f0] sm:$0xff]
    %v993 = vld [vmem:[#allocation8 + $0x12f8] sm:$0xff]
    %v994 = vld [vmem:[#allocation8 + $0x1300] sm:$0xff]
    %v995 = vld [vmem:[#allocation8 + $0x1308] sm:$0xff]
    %v996 = vld [vmem:[#allocation8 + $0x1310] sm:$0xff]
    %v997 = vld [vmem:[#allocation8 + $0x1318] sm:$0xff]
    %v998 = vld [vmem:[#allocation8 + $0x1320] sm:$0xff]
    %v999 = vld [vmem:[#allocation8 + $0x1328] sm:$0xff]
    %v1000 = vld [vmem:[#allocation8 + $0x1330] sm:$0xff]
    %v1001 = vld [vmem:[#allocation8 + $0x1338] sm:$0xff]
    %v1002 = vld [vmem:[#allocation8 + $0x1340] sm:$0xff]
    %v1003 = vld [vmem:[#allocation8 + $0x1348] sm:$0xff]
    %v1004 = vld [vmem:[#allocation8 + $0x1350] sm:$0xff]
    %v1005 = vld [vmem:[#allocation8 + $0x1358] sm:$0xff]
    %v1006 = vld [vmem:[#allocation8 + $0x1360] sm:$0xff]
    %v1007 = vld [vmem:[#allocation8 + $0x1368] sm:$0xff]
    %v1008 = vld [vmem:[#allocation8 + $0x1370] sm:$0xff]
    %v1009 = vld [vmem:[#allocation8 + $0x1378] sm:$0xff]
    %v1010 = vld [vmem:[#allocation8 + $0x1380] sm:$0xff]
    %v1011 = vld [vmem:[#allocation8 + $0x1388] sm:$0xff]
    %v1012 = vld [vmem:[#allocation8 + $0x1390] sm:$0xff]
    %v1013 = vld [vmem:[#allocation8 + $0x1398] sm:$0xff]
    %v1014 = vld [vmem:[#allocation8 + $0x13a0] sm:$0xff]
    %v1015 = vld [vmem:[#allocation8 + $0x13a8] sm:$0xff]
    %v1016 = vld [vmem:[#allocation8 + $0x13b0] sm:$0xff]
    %v1017 = vld [vmem:[#allocation8 + $0x13b8] sm:$0xff]
    %v1018 = vld [vmem:[#allocation8 + $0x13c0] sm:$0xff]
    %v1019 = vld [vmem:[#allocation8 + $0x13c8] sm:$0xff]
    %v1020 = vld [vmem:[#allocation8 + $0x13d0] sm:$0xff]
    %v1021 = vld [vmem:[#allocation8 + $0x13d8] sm:$0xff]
    %v1022 = vld [vmem:[#allocation8 + $0x13e0] sm:$0xff]
    %v1023 = vld [vmem:[#allocation8 + $0x13e8] sm:$0xff]
    %v1024 = vld [vmem:[#allocation8 + $0x13f0] sm:$0xff]
    %v1025 = vld [vmem:[#allocation8 + $0x13f8] sm:$0xff]
    %v1026 = vld [vmem:[#allocation8 + $0x1400] sm:$0xff]
    %v1027 = vld [vmem:[#allocation8 + $0x1408] sm:$0xff]
    %v1028 = vld [vmem:[#allocation8 + $0x1410] sm:$0xff]
    %v1029 = vld [vmem:[#allocation8 + $0x1418] sm:$0xff]
    %v1030 = vld [vmem:[#allocation8 + $0x1420] sm:$0xff]
    %v1031 = vld [vmem:[#allocation8 + $0x1428] sm:$0xff]
    %v1032 = vld [vmem:[#allocation8 + $0x1430] sm:$0xff]
    %v1033 = vld [vmem:[#allocation8 + $0x1438] sm:$0xff]
    %v1034 = vld [vmem:[#allocation8 + $0x1440] sm:$0xff]
    %v1035 = vld [vmem:[#allocation8 + $0x1448] sm:$0xff]
    %v1036 = vld [vmem:[#allocation8 + $0x1450] sm:$0xff]
    %v1037 = vld [vmem:[#allocation8 + $0x1458] sm:$0xff]
    %v1038 = vld [vmem:[#allocation8 + $0x1460] sm:$0xff]
    %v1039 = vld [vmem:[#allocation8 + $0x1468] sm:$0xff]
    %v1040 = vld [vmem:[#allocation8 + $0x1470] sm:$0xff]
    %v1041 = vld [vmem:[#allocation8 + $0x1478] sm:$0xff]
    %v1042 = vld [vmem:[#allocation8 + $0x1480] sm:$0xff]
    %v1043 = vld [vmem:[#allocation8 + $0x1488] sm:$0xff]
    %v1044 = vld [vmem:[#allocation8 + $0x1490] sm:$0xff]
    %v1045 = vld [vmem:[#allocation8 + $0x1498] sm:$0xff]
    %v1046 = vld [vmem:[#allocation8 + $0x14a0] sm:$0xff]
    %v1047 = vld [vmem:[#allocation8 + $0x14a8] sm:$0xff]
    %v1048 = vld [vmem:[#allocation8 + $0x14b0] sm:$0xff]
    %v1049 = vld [vmem:[#allocation8 + $0x14b8] sm:$0xff]
    %v1050 = vld [vmem:[#allocation8 + $0x14c0] sm:$0xff]
    %v1051 = vld [vmem:[#allocation8 + $0x14c8] sm:$0xff]
    %v1052 = vld [vmem:[#allocation8 + $0x14d0] sm:$0xff]
    %v1053 = vld [vmem:[#allocation8 + $0x14d8] sm:$0xff]
    %v1054 = vld [vmem:[#allocation8 + $0x14e0] sm:$0xff]
    %v1055 = vld [vmem:[#allocation8 + $0x14e8] sm:$0xff]
    %v1056 = vld [vmem:[#allocation8 + $0x14f0] sm:$0xff]
    %v1057 = vld [vmem:[#allocation8 + $0x14f8] sm:$0xff]
    %v1058 = vld [vmem:[#allocation8 + $0x1500] sm:$0xff]
    %v1059 = vld [vmem:[#allocation8 + $0x1508] sm:$0xff]
    %v1060 = vld [vmem:[#allocation8 + $0x1510] sm:$0xff]
    %v1061 = vld [vmem:[#allocation8 + $0x1518] sm:$0xff]
    %v1062 = vld [vmem:[#allocation8 + $0x1520] sm:$0xff]
    %v1063 = vld [vmem:[#allocation8 + $0x1528] sm:$0xff]
    %v1064 = vld [vmem:[#allocation8 + $0x1530] sm:$0xff]
    %v1065 = vld [vmem:[#allocation8 + $0x1538] sm:$0xff]
    %v1066 = vld [vmem:[#allocation8 + $0x1540] sm:$0xff]
    %v1067 = vld [vmem:[#allocation8 + $0x1548] sm:$0xff]
    %v1068 = vld [vmem:[#allocation8 + $0x1550] sm:$0xff]
    %v1069 = vld [vmem:[#allocation8 + $0x1558] sm:$0xff]
    %v1070 = vld [vmem:[#allocation8 + $0x1560] sm:$0xff]
    %v1071 = vld [vmem:[#allocation8 + $0x1568] sm:$0xff]
    %v1072 = vld [vmem:[#allocation8 + $0x1570] sm:$0xff]
    %v1073 = vld [vmem:[#allocation8 + $0x1578] sm:$0xff]
    %v1074 = vld [vmem:[#allocation8 + $0x1580] sm:$0xff]
    %v1075 = vld [vmem:[#allocation8 + $0x1588] sm:$0xff]
    %v1076 = vld [vmem:[#allocation8 + $0x1590] sm:$0xff]
    %v1077 = vld [vmem:[#allocation8 + $0x1598] sm:$0xff]
    %v1078 = vld [vmem:[#allocation8 + $0x15a0] sm:$0xff]
    %v1079 = vld [vmem:[#allocation8 + $0x15a8] sm:$0xff]
    %v1080 = vld [vmem:[#allocation8 + $0x15b0] sm:$0xff]
    %v1081 = vld [vmem:[#allocation8 + $0x15b8] sm:$0xff]
    %v1082 = vld [vmem:[#allocation8 + $0x15c0] sm:$0xff]
    %v1083 = vld [vmem:[#allocation8 + $0x15c8] sm:$0xff]
    %v1084 = vld [vmem:[#allocation8 + $0x15d0] sm:$0xff]
    %v1085 = vld [vmem:[#allocation8 + $0x15d8] sm:$0xff]
    %v1086 = vld [vmem:[#allocation8 + $0x15e0] sm:$0xff]
    %v1087 = vld [vmem:[#allocation8 + $0x15e8] sm:$0xff]
    %v1088 = vld [vmem:[#allocation8 + $0x15f0] sm:$0xff]
    %v1089 = vld [vmem:[#allocation8 + $0x15f8] sm:$0xff]
    %v1090 = vld [vmem:[#allocation8 + $0x1600] sm:$0xff]
    %v1091 = vld [vmem:[#allocation8 + $0x1608] sm:$0xff]
    %v1092 = vld [vmem:[#allocation8 + $0x1610] sm:$0xff]
    %v1093 = vld [vmem:[#allocation8 + $0x1618] sm:$0xff]
    %v1094 = vld [vmem:[#allocation8 + $0x1620] sm:$0xff]
    %v1095 = vld [vmem:[#allocation8 + $0x1628] sm:$0xff]
    %v1096 = vld [vmem:[#allocation8 + $0x1630] sm:$0xff]
    %v1097 = vld [vmem:[#allocation8 + $0x1638] sm:$0xff]
    %v1098 = vld [vmem:[#allocation8 + $0x1640] sm:$0xff]
    %v1099 = vld [vmem:[#allocation8 + $0x1648] sm:$0xff]
    %v1100 = vld [vmem:[#allocation8 + $0x1650] sm:$0xff]
    %v1101 = vld [vmem:[#allocation8 + $0x1658] sm:$0xff]
    %v1102 = vld [vmem:[#allocation8 + $0x1660] sm:$0xff]
    %v1103 = vld [vmem:[#allocation8 + $0x1668] sm:$0xff]
    %v1104 = vld [vmem:[#allocation8 + $0x1670] sm:$0xff]
    %v1105 = vld [vmem:[#allocation8 + $0x1678] sm:$0xff]
    %v1106 = vld [vmem:[#allocation8 + $0x1680] sm:$0xff]
    %v1107 = vld [vmem:[#allocation8 + $0x1688] sm:$0xff]
    %v1108 = vld [vmem:[#allocation8 + $0x1690] sm:$0xff]
    %v1109 = vld [vmem:[#allocation8 + $0x1698] sm:$0xff]
    %v1110 = vld [vmem:[#allocation8 + $0x16a0] sm:$0xff]
    %v1111 = vld [vmem:[#allocation8 + $0x16a8] sm:$0xff]
    %v1112 = vld [vmem:[#allocation8 + $0x16b0] sm:$0xff]
    %v1113 = vld [vmem:[#allocation8 + $0x16b8] sm:$0xff]
    %v1114 = vld [vmem:[#allocation8 + $0x16c0] sm:$0xff]
    %v1115 = vld [vmem:[#allocation8 + $0x16c8] sm:$0xff]
    %v1116 = vld [vmem:[#allocation8 + $0x16d0] sm:$0xff]
    %v1117 = vld [vmem:[#allocation8 + $0x16d8] sm:$0xff]
    %v1118 = vld [vmem:[#allocation8 + $0x16e0] sm:$0xff]
    %v1119 = vld [vmem:[#allocation8 + $0x16e8] sm:$0xff]
    %v1120 = vld [vmem:[#allocation8 + $0x16f0] sm:$0xff]
    %v1121 = vld [vmem:[#allocation8 + $0x16f8] sm:$0xff]
    %v1122 = vld [vmem:[#allocation8 + $0x1700] sm:$0xff]
    %v1123 = vld [vmem:[#allocation8 + $0x1708] sm:$0xff]
    %v1124 = vld [vmem:[#allocation8 + $0x1710] sm:$0xff]
    %v1125 = vld [vmem:[#allocation8 + $0x1718] sm:$0xff]
    %v1126 = vld [vmem:[#allocation8 + $0x1720] sm:$0xff]
    %v1127 = vld [vmem:[#allocation8 + $0x1728] sm:$0xff]
    %v1128 = vld [vmem:[#allocation8 + $0x1730] sm:$0xff]
    %v1129 = vld [vmem:[#allocation8 + $0x1738] sm:$0xff]
    %v1130 = vld [vmem:[#allocation8 + $0x1740] sm:$0xff]
    %v1131 = vld [vmem:[#allocation8 + $0x1748] sm:$0xff]
    %v1132 = vld [vmem:[#allocation8 + $0x1750] sm:$0xff]
    %v1133 = vld [vmem:[#allocation8 + $0x1758] sm:$0xff]
    %v1134 = vld [vmem:[#allocation8 + $0x1760] sm:$0xff]
    %v1135 = vld [vmem:[#allocation8 + $0x1768] sm:$0xff]
    %v1136 = vld [vmem:[#allocation8 + $0x1770] sm:$0xff]
    %v1137 = vld [vmem:[#allocation8 + $0x1778] sm:$0xff]
    %v1138 = vld [vmem:[#allocation8 + $0x1780] sm:$0xff]
    %v1139 = vld [vmem:[#allocation8 + $0x1788] sm:$0xff]
    %v1140 = vld [vmem:[#allocation8 + $0x1790] sm:$0xff]
    %v1141 = vld [vmem:[#allocation8 + $0x1798] sm:$0xff]
    %v1142 = vld [vmem:[#allocation8 + $0x17a0] sm:$0xff]
    %v1143 = vld [vmem:[#allocation8 + $0x17a8] sm:$0xff]
    %v1144 = vld [vmem:[#allocation8 + $0x17b0] sm:$0xff]
    %v1145 = vld [vmem:[#allocation8 + $0x17b8] sm:$0xff]
    %v1146 = vld [vmem:[#allocation8 + $0x17c0] sm:$0xff]
    %v1147 = vld [vmem:[#allocation8 + $0x17c8] sm:$0xff]
    %v1148 = vld [vmem:[#allocation8 + $0x17d0] sm:$0xff]
    %v1149 = vld [vmem:[#allocation8 + $0x17d8] sm:$0xff]
    %v1150 = vld [vmem:[#allocation8 + $0x17e0] sm:$0xff]
    %v1151 = vld [vmem:[#allocation8 + $0x17e8] sm:$0xff]
    %v1152 = vld [vmem:[#allocation8 + $0x17f0] sm:$0xff]
    %v1153 = vld [vmem:[#allocation8 + $0x17f8] sm:$0xff]
    %v1154 = vld [vmem:[#allocation8 + $0x1800] sm:$0xff]
    %v1155 = vld [vmem:[#allocation8 + $0x1808] sm:$0xff]
    %v1156 = vld [vmem:[#allocation8 + $0x1810] sm:$0xff]
    %v1157 = vld [vmem:[#allocation8 + $0x1818] sm:$0xff]
    %v1158 = vld [vmem:[#allocation8 + $0x1820] sm:$0xff]
    %v1159 = vld [vmem:[#allocation8 + $0x1828] sm:$0xff]
    %v1160 = vld [vmem:[#allocation8 + $0x1830] sm:$0xff]
    %v1161 = vld [vmem:[#allocation8 + $0x1838] sm:$0xff]
    %v1162 = vld [vmem:[#allocation8 + $0x1840] sm:$0xff]
    %v1163 = vld [vmem:[#allocation8 + $0x1848] sm:$0xff]
    %v1164 = vld [vmem:[#allocation8 + $0x1850] sm:$0xff]
    %v1165 = vld [vmem:[#allocation8 + $0x1858] sm:$0xff]
    %v1166 = vld [vmem:[#allocation8 + $0x1860] sm:$0xff]
    %v1167 = vld [vmem:[#allocation8 + $0x1868] sm:$0xff]
    %v1168 = vld [vmem:[#allocation8 + $0x1870] sm:$0xff]
    %v1169 = vld [vmem:[#allocation8 + $0x1878] sm:$0xff]
    %v1170 = vld [vmem:[#allocation8 + $0x1880] sm:$0xff]
    %v1171 = vld [vmem:[#allocation8 + $0x1888] sm:$0xff]
    %v1172 = vld [vmem:[#allocation8 + $0x1890] sm:$0xff]
    %v1173 = vld [vmem:[#allocation8 + $0x1898] sm:$0xff]
    %v1174 = vld [vmem:[#allocation8 + $0x18a0] sm:$0xff]
    %v1175 = vld [vmem:[#allocation8 + $0x18a8] sm:$0xff]
    %v1176 = vld [vmem:[#allocation8 + $0x18b0] sm:$0xff]
    %v1177 = vld [vmem:[#allocation8 + $0x18b8] sm:$0xff]
    %v1178 = vld [vmem:[#allocation8 + $0x18c0] sm:$0xff]
    %v1179 = vld [vmem:[#allocation8 + $0x18c8] sm:$0xff]
    %v1180 = vld [vmem:[#allocation8 + $0x18d0] sm:$0xff]
    %v1181 = vld [vmem:[#allocation8 + $0x18d8] sm:$0xff]
    %v1182 = vld [vmem:[#allocation8 + $0x18e0] sm:$0xff]
    %v1183 = vld [vmem:[#allocation8 + $0x18e8] sm:$0xff]
    %v1184 = vld [vmem:[#allocation8 + $0x18f0] sm:$0xff]
    %v1185 = vld [vmem:[#allocation8 + $0x18f8] sm:$0xff]
    %v1186 = vld [vmem:[#allocation8 + $0x1900] sm:$0xff]
    %v1187 = vld [vmem:[#allocation8 + $0x1908] sm:$0xff]
    %v1188 = vld [vmem:[#allocation8 + $0x1910] sm:$0xff]
    %v1189 = vld [vmem:[#allocation8 + $0x1918] sm:$0xff]
    %v1190 = vld [vmem:[#allocation8 + $0x1920] sm:$0xff]
    %v1191 = vld [vmem:[#allocation8 + $0x1928] sm:$0xff]
    %v1192 = vld [vmem:[#allocation8 + $0x1930] sm:$0xff]
    %v1193 = vld [vmem:[#allocation8 + $0x1938] sm:$0xff]
    %v1194 = vld [vmem:[#allocation8 + $0x1940] sm:$0xff]
    %v1195 = vld [vmem:[#allocation8 + $0x1948] sm:$0xff]
    %v1196 = vld [vmem:[#allocation8 + $0x1950] sm:$0xff]
    %v1197 = vld [vmem:[#allocation8 + $0x1958] sm:$0xff]
    %v1198 = vld [vmem:[#allocation8 + $0x1960] sm:$0xff]
    %v1199 = vld [vmem:[#allocation8 + $0x1968] sm:$0xff]
    %v1200 = vld [vmem:[#allocation8 + $0x1970] sm:$0xff]
    %v1201 = vld [vmem:[#allocation8 + $0x1978] sm:$0xff]
    %v1202 = vld [vmem:[#allocation8 + $0x1980] sm:$0xff]
    %v1203 = vld [vmem:[#allocation8 + $0x1988] sm:$0xff]
    %v1204 = vld [vmem:[#allocation8 + $0x1990] sm:$0xff]
    %v1205 = vld [vmem:[#allocation8 + $0x1998] sm:$0xff]
    %v1206 = vld [vmem:[#allocation8 + $0x19a0] sm:$0xff]
    %v1207 = vld [vmem:[#allocation8 + $0x19a8] sm:$0xff]
    %v1208 = vld [vmem:[#allocation8 + $0x19b0] sm:$0xff]
    %v1209 = vld [vmem:[#allocation8 + $0x19b8] sm:$0xff]
    %v1210 = vld [vmem:[#allocation8 + $0x19c0] sm:$0xff]
    %v1211 = vld [vmem:[#allocation8 + $0x19c8] sm:$0xff]
    %v1212 = vld [vmem:[#allocation8 + $0x19d0] sm:$0xff]
    %v1213 = vld [vmem:[#allocation8 + $0x19d8] sm:$0xff]
    %v1214 = vld [vmem:[#allocation8 + $0x19e0] sm:$0xff]
    %v1215 = vld [vmem:[#allocation8 + $0x19e8] sm:$0xff]
    %v1216 = vld [vmem:[#allocation8 + $0x19f0] sm:$0xff]
    %v1217 = vld [vmem:[#allocation8 + $0x19f8] sm:$0xff]
    %v1218 = vld [vmem:[#allocation8 + $0x1a00] sm:$0xff]
    %v1219 = vld [vmem:[#allocation8 + $0x1a08] sm:$0xff]
    %v1220 = vld [vmem:[#allocation8 + $0x1a10] sm:$0xff]
    %v1221 = vld [vmem:[#allocation8 + $0x1a18] sm:$0xff]
    %v1222 = vld [vmem:[#allocation8 + $0x1a20] sm:$0xff]
    %v1223 = vld [vmem:[#allocation8 + $0x1a28] sm:$0xff]
    %v1224 = vld [vmem:[#allocation8 + $0x1a30] sm:$0xff]
    %v1225 = vld [vmem:[#allocation8 + $0x1a38] sm:$0xff]
    %v1226 = vld [vmem:[#allocation8 + $0x1a40] sm:$0xff]
    %v1227 = vld [vmem:[#allocation8 + $0x1a48] sm:$0xff]
    %v1228 = vld [vmem:[#allocation8 + $0x1a50] sm:$0xff]
    %v1229 = vld [vmem:[#allocation8 + $0x1a58] sm:$0xff]
    %v1230 = vld [vmem:[#allocation8 + $0x1a60] sm:$0xff]
    %v1231 = vld [vmem:[#allocation8 + $0x1a68] sm:$0xff]
    %v1232 = vld [vmem:[#allocation8 + $0x1a70] sm:$0xff]
    %v1233 = vld [vmem:[#allocation8 + $0x1a78] sm:$0xff]
    %v1234 = vld [vmem:[#allocation8 + $0x1a80] sm:$0xff]
    %v1235 = vld [vmem:[#allocation8 + $0x1a88] sm:$0xff]
    %v1236 = vld [vmem:[#allocation8 + $0x1a90] sm:$0xff]
    %v1237 = vld [vmem:[#allocation8 + $0x1a98] sm:$0xff]
    %v1238 = vld [vmem:[#allocation8 + $0x1aa0] sm:$0xff]
    %v1239 = vld [vmem:[#allocation8 + $0x1aa8] sm:$0xff]
    %v1240 = vld [vmem:[#allocation8 + $0x1ab0] sm:$0xff]
    %v1241 = vld [vmem:[#allocation8 + $0x1ab8] sm:$0xff]
    %v1242 = vld [vmem:[#allocation8 + $0x1ac0] sm:$0xff]
    %v1243 = vld [vmem:[#allocation8 + $0x1ac8] sm:$0xff]
    %v1244 = vld [vmem:[#allocation8 + $0x1ad0] sm:$0xff]
    %v1245 = vld [vmem:[#allocation8 + $0x1ad8] sm:$0xff]
    %v1246 = vld [vmem:[#allocation8 + $0x1ae0] sm:$0xff]
    %v1247 = vld [vmem:[#allocation8 + $0x1ae8] sm:$0xff]
    %v1248 = vld [vmem:[#allocation8 + $0x1af0] sm:$0xff]
    %v1249 = vld [vmem:[#allocation8 + $0x1af8] sm:$0xff]
    %v1250 = vld [vmem:[#allocation8 + $0x1b00] sm:$0xff]
    %v1251 = vld [vmem:[#allocation8 + $0x1b08] sm:$0xff]
    %v1252 = vld [vmem:[#allocation8 + $0x1b10] sm:$0xff]
    %v1253 = vld [vmem:[#allocation8 + $0x1b18] sm:$0xff]
    %v1254 = vld [vmem:[#allocation8 + $0x1b20] sm:$0xff]
    %v1255 = vld [vmem:[#allocation8 + $0x1b28] sm:$0xff]
    %v1256 = vld [vmem:[#allocation8 + $0x1b30] sm:$0xff]
    %v1257 = vld [vmem:[#allocation8 + $0x1b38] sm:$0xff]
    %v1258 = vld [vmem:[#allocation8 + $0x1b40] sm:$0xff]
    %v1259 = vld [vmem:[#allocation8 + $0x1b48] sm:$0xff]
    %v1260 = vld [vmem:[#allocation8 + $0x1b50] sm:$0xff]
    %v1261 = vld [vmem:[#allocation8 + $0x1b58] sm:$0xff]
    %v1262 = vld [vmem:[#allocation8 + $0x1b60] sm:$0xff]
    %v1263 = vld [vmem:[#allocation8 + $0x1b68] sm:$0xff]
    %v1264 = vld [vmem:[#allocation8 + $0x1b70] sm:$0xff]
    %v1265 = vld [vmem:[#allocation8 + $0x1b78] sm:$0xff]
    %v1266 = vld [vmem:[#allocation8 + $0x1b80] sm:$0xff]
    %v1267 = vld [vmem:[#allocation8 + $0x1b88] sm:$0xff]
    %v1268 = vld [vmem:[#allocation8 + $0x1b90] sm:$0xff]
    %v1269 = vld [vmem:[#allocation8 + $0x1b98] sm:$0xff]
    %v1270 = vld [vmem:[#allocation8 + $0x1ba0] sm:$0xff]
    %v1271 = vld [vmem:[#allocation8 + $0x1ba8] sm:$0xff]
    %v1272 = vld [vmem:[#allocation8 + $0x1bb0] sm:$0xff]
    %v1273 = vld [vmem:[#allocation8 + $0x1bb8] sm:$0xff]
    %v1274 = vld [vmem:[#allocation8 + $0x1bc0] sm:$0xff]
    %v1275 = vld [vmem:[#allocation8 + $0x1bc8] sm:$0xff]
    %v1276 = vld [vmem:[#allocation8 + $0x1bd0] sm:$0xff]
    %v1277 = vld [vmem:[#allocation8 + $0x1bd8] sm:$0xff]
    %v1278 = vld [vmem:[#allocation8 + $0x1be0] sm:$0xff]
    %v1279 = vld [vmem:[#allocation8 + $0x1be8] sm:$0xff]
    %v1280 = vld [vmem:[#allocation8 + $0x1bf0] sm:$0xff]
    %v1281 = vld [vmem:[#allocation8 + $0x1bf8] sm:$0xff]
    %v1282 = vld [vmem:[#allocation8 + $0x1c00] sm:$0xff]
    %v1283 = vld [vmem:[#allocation8 + $0x1c08] sm:$0xff]
    %v1284 = vld [vmem:[#allocation8 + $0x1c10] sm:$0xff]
    %v1285 = vld [vmem:[#allocation8 + $0x1c18] sm:$0xff]
    %v1286 = vld [vmem:[#allocation8 + $0x1c20] sm:$0xff]
    %v1287 = vld [vmem:[#allocation8 + $0x1c28] sm:$0xff]
    %v1288 = vld [vmem:[#allocation8 + $0x1c30] sm:$0xff]
    %v1289 = vld [vmem:[#allocation8 + $0x1c38] sm:$0xff]
    %v1290 = vld [vmem:[#allocation8 + $0x1c40] sm:$0xff]
    %v1291 = vld [vmem:[#allocation8 + $0x1c48] sm:$0xff]
    %v1292 = vld [vmem:[#allocation8 + $0x1c50] sm:$0xff]
    %v1293 = vld [vmem:[#allocation8 + $0x1c58] sm:$0xff]
    %v1294 = vld [vmem:[#allocation8 + $0x1c60] sm:$0xff]
    %v1295 = vld [vmem:[#allocation8 + $0x1c68] sm:$0xff]
    %v1296 = vld [vmem:[#allocation8 + $0x1c70] sm:$0xff]
    %v1297 = vld [vmem:[#allocation8 + $0x1c78] sm:$0xff]
    %v1298 = vld [vmem:[#allocation8 + $0x1c80] sm:$0xff]
    %v1299 = vld [vmem:[#allocation8 + $0x1c88] sm:$0xff]
    %v1300 = vld [vmem:[#allocation8 + $0x1c90] sm:$0xff]
    %v1301 = vld [vmem:[#allocation8 + $0x1c98] sm:$0xff]
    %v1302 = vld [vmem:[#allocation8 + $0x1ca0] sm:$0xff]
    %v1303 = vld [vmem:[#allocation8 + $0x1ca8] sm:$0xff]
    %v1304 = vld [vmem:[#allocation8 + $0x1cb0] sm:$0xff]
    %v1305 = vld [vmem:[#allocation8 + $0x1cb8] sm:$0xff]
    %v1306 = vld [vmem:[#allocation8 + $0x1cc0] sm:$0xff]
    %v1307 = vld [vmem:[#allocation8 + $0x1cc8] sm:$0xff]
    %v1308 = vld [vmem:[#allocation8 + $0x1cd0] sm:$0xff]
    %v1309 = vld [vmem:[#allocation8 + $0x1cd8] sm:$0xff]
    %v1310 = vld [vmem:[#allocation8 + $0x1ce0] sm:$0xff]
    %v1311 = vld [vmem:[#allocation8 + $0x1ce8] sm:$0xff]
    %v1312 = vld [vmem:[#allocation8 + $0x1cf0] sm:$0xff]
    %v1313 = vld [vmem:[#allocation8 + $0x1cf8] sm:$0xff]
    %v1314 = vld [vmem:[#allocation8 + $0x1d00] sm:$0xff]
    %v1315 = vld [vmem:[#allocation8 + $0x1d08] sm:$0xff]
    %v1316 = vld [vmem:[#allocation8 + $0x1d10] sm:$0xff]
    %v1317 = vld [vmem:[#allocation8 + $0x1d18] sm:$0xff]
    %v1318 = vld [vmem:[#allocation8 + $0x1d20] sm:$0xff]
    %v1319 = vld [vmem:[#allocation8 + $0x1d28] sm:$0xff]
    %v1320 = vld [vmem:[#allocation8 + $0x1d30] sm:$0xff]
    %v1321 = vld [vmem:[#allocation8 + $0x1d38] sm:$0xff]
    %v1322 = vld [vmem:[#allocation8 + $0x1d40] sm:$0xff]
    %v1323 = vld [vmem:[#allocation8 + $0x1d48] sm:$0xff]
    %v1324 = vld [vmem:[#allocation8 + $0x1d50] sm:$0xff]
    %v1325 = vld [vmem:[#allocation8 + $0x1d58] sm:$0xff]
    %v1326 = vld [vmem:[#allocation8 + $0x1d60] sm:$0xff]
    %v1327 = vld [vmem:[#allocation8 + $0x1d68] sm:$0xff]
    %v1328 = vld [vmem:[#allocation8 + $0x1d70] sm:$0xff]
    %v1329 = vld [vmem:[#allocation8 + $0x1d78] sm:$0xff]
    %v1330 = vld [vmem:[#allocation8 + $0x1d80] sm:$0xff]
    %v1331 = vld [vmem:[#allocation8 + $0x1d88] sm:$0xff]
    %v1332 = vld [vmem:[#allocation8 + $0x1d90] sm:$0xff]
    %v1333 = vld [vmem:[#allocation8 + $0x1d98] sm:$0xff]
    %v1334 = vld [vmem:[#allocation8 + $0x1da0] sm:$0xff]
    %v1335 = vld [vmem:[#allocation8 + $0x1da8] sm:$0xff]
    %v1336 = vld [vmem:[#allocation8 + $0x1db0] sm:$0xff]
    %v1337 = vld [vmem:[#allocation8 + $0x1db8] sm:$0xff]
    %v1338 = vld [vmem:[#allocation8 + $0x1dc0] sm:$0xff]
    %v1339 = vld [vmem:[#allocation8 + $0x1dc8] sm:$0xff]
    %v1340 = vld [vmem:[#allocation8 + $0x1dd0] sm:$0xff]
    %v1341 = vld [vmem:[#allocation8 + $0x1dd8] sm:$0xff]
    %v1342 = vld [vmem:[#allocation8 + $0x1de0] sm:$0xff]
    %v1343 = vld [vmem:[#allocation8 + $0x1de8] sm:$0xff]
    %v1344 = vld [vmem:[#allocation8 + $0x1df0] sm:$0xff]
    %v1345 = vld [vmem:[#allocation8 + $0x1df8] sm:$0xff]
    %v1346 = vld [vmem:[#allocation8 + $0x1e00] sm:$0xff]
    %v1347 = vld [vmem:[#allocation8 + $0x1e08] sm:$0xff]
    %v1348 = vld [vmem:[#allocation8 + $0x1e10] sm:$0xff]
    %v1349 = vld [vmem:[#allocation8 + $0x1e18] sm:$0xff]
    %v1350 = vld [vmem:[#allocation8 + $0x1e20] sm:$0xff]
    %v1351 = vld [vmem:[#allocation8 + $0x1e28] sm:$0xff]
    %v1352 = vld [vmem:[#allocation8 + $0x1e30] sm:$0xff]
    %v1353 = vld [vmem:[#allocation8 + $0x1e38] sm:$0xff]
    %v1354 = vld [vmem:[#allocation8 + $0x1e40] sm:$0xff]
    %v1355 = vld [vmem:[#allocation8 + $0x1e48] sm:$0xff]
    %v1356 = vld [vmem:[#allocation8 + $0x1e50] sm:$0xff]
    %v1357 = vld [vmem:[#allocation8 + $0x1e58] sm:$0xff]
    %v1358 = vld [vmem:[#allocation8 + $0x1e60] sm:$0xff]
    %v1359 = vld [vmem:[#allocation8 + $0x1e68] sm:$0xff]
    %v1360 = vld [vmem:[#allocation8 + $0x1e70] sm:$0xff]
    %v1361 = vld [vmem:[#allocation8 + $0x1e78] sm:$0xff]
    %v1362 = vld [vmem:[#allocation8 + $0x1e80] sm:$0xff]
    %v1363 = vld [vmem:[#allocation8 + $0x1e88] sm:$0xff]
    %v1364 = vld [vmem:[#allocation8 + $0x1e90] sm:$0xff]
    %v1365 = vld [vmem:[#allocation8 + $0x1e98] sm:$0xff]
    %v1366 = vld [vmem:[#allocation8 + $0x1ea0] sm:$0xff]
    %v1367 = vld [vmem:[#allocation8 + $0x1ea8] sm:$0xff]
    %v1368 = vld [vmem:[#allocation8 + $0x1eb0] sm:$0xff]
    %v1369 = vld [vmem:[#allocation8 + $0x1eb8] sm:$0xff]
    %v1370 = vld [vmem:[#allocation8 + $0x1ec0] sm:$0xff]
    %v1371 = vld [vmem:[#allocation8 + $0x1ec8] sm:$0xff]
    %v1372 = vld [vmem:[#allocation8 + $0x1ed0] sm:$0xff]
    %v1373 = vld [vmem:[#allocation8 + $0x1ed8] sm:$0xff]
    %v1374 = vld [vmem:[#allocation8 + $0x1ee0] sm:$0xff]
    %v1375 = vld [vmem:[#allocation8 + $0x1ee8] sm:$0xff]
    %v1376 = vld [vmem:[#allocation8 + $0x1ef0] sm:$0xff]
    %v1377 = vld [vmem:[#allocation8 + $0x1ef8] sm:$0xff]
    %v1378 = vld [vmem:[#allocation8 + $0x1f00] sm:$0xff]
    %v1379 = vld [vmem:[#allocation8 + $0x1f08] sm:$0xff]
    %v1380 = vld [vmem:[#allocation8 + $0x1f10] sm:$0xff]
    %v1381 = vld [vmem:[#allocation8 + $0x1f18] sm:$0xff]
    %v1382 = vld [vmem:[#allocation8 + $0x1f20] sm:$0xff]
    %v1383 = vld [vmem:[#allocation8 + $0x1f28] sm:$0xff]
    %v1384 = vld [vmem:[#allocation8 + $0x1f30] sm:$0xff]
    %v1385 = vld [vmem:[#allocation8 + $0x1f38] sm:$0xff]
    %v1386 = vld [vmem:[#allocation8 + $0x1f40] sm:$0xff]
    %v1387 = vld [vmem:[#allocation8 + $0x1f48] sm:$0xff]
    %v1388 = vld [vmem:[#allocation8 + $0x1f50] sm:$0xff]
    %v1389 = vld [vmem:[#allocation8 + $0x1f58] sm:$0xff]
    %v1390 = vld [vmem:[#allocation8 + $0x1f60] sm:$0xff]
    %v1391 = vld [vmem:[#allocation8 + $0x1f68] sm:$0xff]
    %v1392 = vld [vmem:[#allocation8 + $0x1f70] sm:$0xff]
    %v1393 = vld [vmem:[#allocation8 + $0x1f78] sm:$0xff]
    %v1394 = vld [vmem:[#allocation8 + $0x1f80] sm:$0xff]
    %v1395 = vld [vmem:[#allocation8 + $0x1f88] sm:$0xff]
    %v1396 = vld [vmem:[#allocation8 + $0x1f90] sm:$0xff]
    %v1397 = vld [vmem:[#allocation8 + $0x1f98] sm:$0xff]
    %v1398 = vld [vmem:[#allocation8 + $0x1fa0] sm:$0xff]
    %v1399 = vld [vmem:[#allocation8 + $0x1fa8] sm:$0xff]
    %v1400 = vld [vmem:[#allocation8 + $0x1fb0] sm:$0xff]
    %v1401 = vld [vmem:[#allocation8 + $0x1fb8] sm:$0xff]
    %v1402 = vld [vmem:[#allocation8 + $0x1fc0] sm:$0xff]
    %v1403 = vld [vmem:[#allocation8 + $0x1fc8] sm:$0xff]
    %v1404 = vld [vmem:[#allocation8 + $0x1fd0] sm:$0xff]
    %v1405 = vld [vmem:[#allocation8 + $0x1fd8] sm:$0xff]
    %v1406 = vld [vmem:[#allocation8 + $0x1fe0] sm:$0xff]
    %v1407 = vld [vmem:[#allocation8 + $0x1fe8] sm:$0xff]
    %v1408 = vld [vmem:[#allocation8 + $0x1ff0] sm:$0xff]
    %v1409 = vld [vmem:[#allocation8 + $0x1ff8] sm:$0xff]
    %v1410 = vld [vmem:[#allocation10] sm:$0xff]
    %v1412 = vperm.slane %v1410, 0
    %v1413 = vperm.slane %v1410, 1
    %v1414 = vperm.slane %v1410, 2
    %v1415 = vperm.slane %v1410, 3
    %v1416 = vperm.slane %v1410, 4
    %v1417 = vperm.slane %v1410, 5
    %v1418 = vperm.slane %v1410, 6
    %v1419 = vperm.slane %v1410, 7
    %1428 = vmatpush.msra.mxu0 %v506
    %1429 = vmatpush.msra.mxu0 %v498
    %1430 = vmatpush.msra.mxu0 %v490
    %1431 = vmatpush.msra.mxu0 %v482
    %1432 = vmatpush.msra.mxu0 %v474
    %1433 = vmatpush.msra.mxu0 %v466
    %1434 = vmatpush.msra.mxu0 %v458
    %1435 = vmatpush.msra.mxu0 %v450
    %1436 = vmatpush.msra.mxu0 %v442
    %1437 = vmatpush.msra.mxu0 %v434
    %1438 = vmatpush.msra.mxu0 %v426
    %1439 = vmatpush.msra.mxu0 %v418
    %1440 = vmatpush.msra.mxu0 %v410
    %1441 = vmatpush.msra.mxu0 %v402
    %1442 = vmatpush.msra.mxu0 %v394
    %1443 = vmatpush.msra.mxu0 %v386
    %1444 = vmatmul.f32.gmra.mxu0 %v378
    %v1445 = vpop.f32.mrf.mxu0
    %v1446 = vadd.f32 %v1412, %v1445
    %1447 = vdwg.mxu0
    %1448 = vmatpush.msra.mxu0 %v634
    %1449 = vmatpush.msra.mxu0 %v626
    %1450 = vmatpush.msra.mxu0 %v618
    %1451 = vmatpush.msra.mxu0 %v610
    %1452 = vmatpush.msra.mxu0 %v602
    %1453 = vmatpush.msra.mxu0 %v594
    %1454 = vmatpush.msra.mxu0 %v586
    %1455 = vmatpush.msra.mxu0 %v578
    %1456 = vmatpush.msra.mxu0 %v570
    %1457 = vmatpush.msra.mxu0 %v562
    %1458 = vmatpush.msra.mxu0 %v554
    %1459 = vmatpush.msra.mxu0 %v546
    %1460 = vmatpush.msra.mxu0 %v538
    %1461 = vmatpush.msra.mxu0 %v530
    %1462 = vmatpush.msra.mxu0 %v522
    %1463 = vmatpush.msra.mxu0 %v514
    %1464 = vmatmul.f32.gmra.mxu0 %v379
    %v1465 = vpop.f32.mrf.mxu0
    %v1466 = vadd.f32 %v1446, %v1465
    %1467 = vdwg.mxu0
    %1468 = vmatpush.msra.mxu0 %v762
    %1469 = vmatpush.msra.mxu0 %v754
    %1470 = vmatpush.msra.mxu0 %v746
    %1471 = vmatpush.msra.mxu0 %v738
    %1472 = vmatpush.msra.mxu0 %v730
    %1473 = vmatpush.msra.mxu0 %v722
    %1474 = vmatpush.msra.mxu0 %v714
    %1475 = vmatpush.msra.mxu0 %v706
    %1476 = vmatpush.msra.mxu0 %v698
    %1477 = vmatpush.msra.mxu0 %v690
    %1478 = vmatpush.msra.mxu0 %v682
    %1479 = vmatpush.msra.mxu0 %v674
    %1480 = vmatpush.msra.mxu0 %v666
    %1481 = vmatpush.msra.mxu0 %v658
    %1482 = vmatpush.msra.mxu0 %v650
    %1483 = vmatpush.msra.mxu0 %v642
    %1484 = vmatmul.f32.gmra.mxu0 %v380
    %v1485 = vpop.f32.mrf.mxu0
    %v1486 = vadd.f32 %v1466, %v1485
    %1487 = vdwg.mxu0
    %1488 = vmatpush.msra.mxu0 %v890
    %1489 = vmatpush.msra.mxu0 %v882
    %1490 = vmatpush.msra.mxu0 %v874
    %1491 = vmatpush.msra.mxu0 %v866
    %1492 = vmatpush.msra.mxu0 %v858
    %1493 = vmatpush.msra.mxu0 %v850
    %1494 = vmatpush.msra.mxu0 %v842
    %1495 = vmatpush.msra.mxu0 %v834
    %1496 = vmatpush.msra.mxu0 %v826
    %1497 = vmatpush.msra.mxu0 %v818
    %1498 = vmatpush.msra.mxu0 %v810
    %1499 = vmatpush.msra.mxu0 %v802
    %1500 = vmatpush.msra.mxu0 %v794
    %1501 = vmatpush.msra.mxu0 %v786
    %1502 = vmatpush.msra.mxu0 %v778
    %1503 = vmatpush.msra.mxu0 %v770
    %1504 = vmatmul.f32.gmra.mxu0 %v381
    %v1505 = vpop.f32.mrf.mxu0
    %v1506 = vadd.f32 %v1486, %v1505
    %1507 = vdwg.mxu0
    %1508 = vmatpush.msra.mxu0 %v1018
    %1509 = vmatpush.msra.mxu0 %v1010
    %1510 = vmatpush.msra.mxu0 %v1002
    %1511 = vmatpush.msra.mxu0 %v994
    %1512 = vmatpush.msra.mxu0 %v986
    %1513 = vmatpush.msra.mxu0 %v978
    %1514 = vmatpush.msra.mxu0 %v970
    %1515 = vmatpush.msra.mxu0 %v962
    %1516 = vmatpush.msra.mxu0 %v954
    %1517 = vmatpush.msra.mxu0 %v946
    %1518 = vmatpush.msra.mxu0 %v938
    %1519 = vmatpush.msra.mxu0 %v930
    %1520 = vmatpush.msra.mxu0 %v922
    %1521 = vmatpush.msra.mxu0 %v914
    %1522 = vmatpush.msra.mxu0 %v906
    %1523 = vmatpush.msra.mxu0 %v898
    %1524 = vmatmul.f32.gmra.mxu0 %v382
    %v1525 = vpop.f32.mrf.mxu0
    %v1526 = vadd.f32 %v1506, %v1525
    %1527 = vdwg.mxu0
    %1528 = vmatpush.msra.mxu0 %v1146
    %1529 = vmatpush.msra.mxu0 %v1138
    %1530 = vmatpush.msra.mxu0 %v1130
    %1531 = vmatpush.msra.mxu0 %v1122
    %1532 = vmatpush.msra.mxu0 %v1114
    %1533 = vmatpush.msra.mxu0 %v1106
    %1534 = vmatpush.msra.mxu0 %v1098
    %1535 = vmatpush.msra.mxu0 %v1090
    %1536 = vmatpush.msra.mxu0 %v1082
    %1537 = vmatpush.msra.mxu0 %v1074
    %1538 = vmatpush.msra.mxu0 %v1066
    %1539 = vmatpush.msra.mxu0 %v1058
    %1540 = vmatpush.msra.mxu0 %v1050
    %1541 = vmatpush.msra.mxu0 %v1042
    %1542 = vmatpush.msra.mxu0 %v1034
    %1543 = vmatpush.msra.mxu0 %v1026
    %1544 = vmatmul.f32.gmra.mxu0 %v383
    %v1545 = vpop.f32.mrf.mxu0
    %v1546 = vadd.f32 %v1526, %v1545
    %1547 = vdwg.mxu0
    %1548 = vmatpush.msra.mxu0 %v1274
    %1549 = vmatpush.msra.mxu0 %v1266
    %1550 = vmatpush.msra.mxu0 %v1258
    %1551 = vmatpush.msra.mxu0 %v1250
    %1552 = vmatpush.msra.mxu0 %v1242
    %1553 = vmatpush.msra.mxu0 %v1234
    %1554 = vmatpush.msra.mxu0 %v1226
    %1555 = vmatpush.msra.mxu0 %v1218
    %1556 = vmatpush.msra.mxu0 %v1210
    %1557 = vmatpush.msra.mxu0 %v1202
    %1558 = vmatpush.msra.mxu0 %v1194
    %1559 = vmatpush.msra.mxu0 %v1186
    %1560 = vmatpush.msra.mxu0 %v1178
    %1561 = vmatpush.msra.mxu0 %v1170
    %1562 = vmatpush.msra.mxu0 %v1162
    %1563 = vmatpush.msra.mxu0 %v1154
    %1564 = vmatmul.f32.gmra.mxu0 %v384
    %v1565 = vpop.f32.mrf.mxu0
    %v1566 = vadd.f32 %v1546, %v1565
    %1567 = vdwg.mxu0
    %1568 = vmatpush.msra.mxu0 %v1402
    %1569 = vmatpush.msra.mxu0 %v1394
    %1570 = vmatpush.msra.mxu0 %v1386
    %1571 = vmatpush.msra.mxu0 %v1378
    %1572 = vmatpush.msra.mxu0 %v1370
    %1573 = vmatpush.msra.mxu0 %v1362
    %1574 = vmatpush.msra.mxu0 %v1354
    %1575 = vmatpush.msra.mxu0 %v1346
    %1576 = vmatpush.msra.mxu0 %v1338
    %1577 = vmatpush.msra.mxu0 %v1330
    %1578 = vmatpush.msra.mxu0 %v1322
    %1579 = vmatpush.msra.mxu0 %v1314
    %1580 = vmatpush.msra.mxu0 %v1306
    %1581 = vmatpush.msra.mxu0 %v1298
    %1582 = vmatpush.msra.mxu0 %v1290
    %1583 = vmatpush.msra.mxu0 %v1282
    %1584 = vmatmul.f32.gmra.mxu0 %v385
    %v1585 = vpop.f32.mrf.mxu0
    %v1586 = vadd.f32 %v1566, %v1585
    %1587 = vdwg.mxu0
    %1588 = vmatpush.msra.mxu0 %v507
    %1589 = vmatpush.msra.mxu0 %v499
    %1590 = vmatpush.msra.mxu0 %v491
    %1591 = vmatpush.msra.mxu0 %v483
    %1592 = vmatpush.msra.mxu0 %v475
    %1593 = vmatpush.msra.mxu0 %v467
    %1594 = vmatpush.msra.mxu0 %v459
    %1595 = vmatpush.msra.mxu0 %v451
    %1596 = vmatpush.msra.mxu0 %v443
    %1597 = vmatpush.msra.mxu0 %v435
    %1598 = vmatpush.msra.mxu0 %v427
    %1599 = vmatpush.msra.mxu0 %v419
    %1600 = vmatpush.msra.mxu0 %v411
    %1601 = vmatpush.msra.mxu0 %v403
    %1602 = vmatpush.msra.mxu0 %v395
    %1603 = vmatpush.msra.mxu0 %v387
    %1604 = vmatmul.f32.gmra.mxu0 %v378
    %v1605 = vpop.f32.mrf.mxu0
    %v1606 = vadd.f32 %v1413, %v1605
    %1607 = vdwg.mxu0
    %1608 = vmatpush.msra.mxu0 %v635
    %1609 = vmatpush.msra.mxu0 %v627
    %1610 = vmatpush.msra.mxu0 %v619
    %1611 = vmatpush.msra.mxu0 %v611
    %1612 = vmatpush.msra.mxu0 %v603
    %1613 = vmatpush.msra.mxu0 %v595
    %1614 = vmatpush.msra.mxu0 %v587
    %1615 = vmatpush.msra.mxu0 %v579
    %1616 = vmatpush.msra.mxu0 %v571
    %1617 = vmatpush.msra.mxu0 %v563
    %1618 = vmatpush.msra.mxu0 %v555
    %1619 = vmatpush.msra.mxu0 %v547
    %1620 = vmatpush.msra.mxu0 %v539
    %1621 = vmatpush.msra.mxu0 %v531
    %1622 = vmatpush.msra.mxu0 %v523
    %1623 = vmatpush.msra.mxu0 %v515
    %1624 = vmatmul.f32.gmra.mxu0 %v379
    %v1625 = vpop.f32.mrf.mxu0
    %v1626 = vadd.f32 %v1606, %v1625
    %1627 = vdwg.mxu0
    %1628 = vmatpush.msra.mxu0 %v763
    %1629 = vmatpush.msra.mxu0 %v755
    %1630 = vmatpush.msra.mxu0 %v747
    %1631 = vmatpush.msra.mxu0 %v739
    %1632 = vmatpush.msra.mxu0 %v731
    %1633 = vmatpush.msra.mxu0 %v723
    %1634 = vmatpush.msra.mxu0 %v715
    %1635 = vmatpush.msra.mxu0 %v707
    %1636 = vmatpush.msra.mxu0 %v699
    %1637 = vmatpush.msra.mxu0 %v691
    %1638 = vmatpush.msra.mxu0 %v683
    %1639 = vmatpush.msra.mxu0 %v675
    %1640 = vmatpush.msra.mxu0 %v667
    %1641 = vmatpush.msra.mxu0 %v659
    %1642 = vmatpush.msra.mxu0 %v651
    %1643 = vmatpush.msra.mxu0 %v643
    %1644 = vmatmul.f32.gmra.mxu0 %v380
    %v1645 = vpop.f32.mrf.mxu0
    %v1646 = vadd.f32 %v1626, %v1645
    %1647 = vdwg.mxu0
    %1648 = vmatpush.msra.mxu0 %v891
    %1649 = vmatpush.msra.mxu0 %v883
    %1650 = vmatpush.msra.mxu0 %v875
    %1651 = vmatpush.msra.mxu0 %v867
    %1652 = vmatpush.msra.mxu0 %v859
    %1653 = vmatpush.msra.mxu0 %v851
    %1654 = vmatpush.msra.mxu0 %v843
    %1655 = vmatpush.msra.mxu0 %v835
    %1656 = vmatpush.msra.mxu0 %v827
    %1657 = vmatpush.msra.mxu0 %v819
    %1658 = vmatpush.msra.mxu0 %v811
    %1659 = vmatpush.msra.mxu0 %v803
    %1660 = vmatpush.msra.mxu0 %v795
    %1661 = vmatpush.msra.mxu0 %v787
    %1662 = vmatpush.msra.mxu0 %v779
    %1663 = vmatpush.msra.mxu0 %v771
    %1664 = vmatmul.f32.gmra.mxu0 %v381
    %v1665 = vpop.f32.mrf.mxu0
    %v1666 = vadd.f32 %v1646, %v1665
    %1667 = vdwg.mxu0
    %1668 = vmatpush.msra.mxu0 %v1019
    %1669 = vmatpush.msra.mxu0 %v1011
    %1670 = vmatpush.msra.mxu0 %v1003
    %1671 = vmatpush.msra.mxu0 %v995
    %1672 = vmatpush.msra.mxu0 %v987
    %1673 = vmatpush.msra.mxu0 %v979
    %1674 = vmatpush.msra.mxu0 %v971
    %1675 = vmatpush.msra.mxu0 %v963
    %1676 = vmatpush.msra.mxu0 %v955
    %1677 = vmatpush.msra.mxu0 %v947
    %1678 = vmatpush.msra.mxu0 %v939
    %1679 = vmatpush.msra.mxu0 %v931
    %1680 = vmatpush.msra.mxu0 %v923
    %1681 = vmatpush.msra.mxu0 %v915
    %1682 = vmatpush.msra.mxu0 %v907
    %1683 = vmatpush.msra.mxu0 %v899
    %1684 = vmatmul.f32.gmra.mxu0 %v382
    %v1685 = vpop.f32.mrf.mxu0
    %v1686 = vadd.f32 %v1666, %v1685
    %1687 = vdwg.mxu0
    %1688 = vmatpush.msra.mxu0 %v1147
    %1689 = vmatpush.msra.mxu0 %v1139
    %1690 = vmatpush.msra.mxu0 %v1131
    %1691 = vmatpush.msra.mxu0 %v1123
    %1692 = vmatpush.msra.mxu0 %v1115
    %1693 = vmatpush.msra.mxu0 %v1107
    %1694 = vmatpush.msra.mxu0 %v1099
    %1695 = vmatpush.msra.mxu0 %v1091
    %1696 = vmatpush.msra.mxu0 %v1083
    %1697 = vmatpush.msra.mxu0 %v1075
    %1698 = vmatpush.msra.mxu0 %v1067
    %1699 = vmatpush.msra.mxu0 %v1059
    %1700 = vmatpush.msra.mxu0 %v1051
    %1701 = vmatpush.msra.mxu0 %v1043
    %1702 = vmatpush.msra.mxu0 %v1035
    %1703 = vmatpush.msra.mxu0 %v1027
    %1704 = vmatmul.f32.gmra.mxu0 %v383
    %v1705 = vpop.f32.mrf.mxu0
    %v1706 = vadd.f32 %v1686, %v1705
    %1707 = vdwg.mxu0
    %1708 = vmatpush.msra.mxu0 %v1275
    %1709 = vmatpush.msra.mxu0 %v1267
    %1710 = vmatpush.msra.mxu0 %v1259
    %1711 = vmatpush.msra.mxu0 %v1251
    %1712 = vmatpush.msra.mxu0 %v1243
    %1713 = vmatpush.msra.mxu0 %v1235
    %1714 = vmatpush.msra.mxu0 %v1227
    %1715 = vmatpush.msra.mxu0 %v1219
    %1716 = vmatpush.msra.mxu0 %v1211
    %1717 = vmatpush.msra.mxu0 %v1203
    %1718 = vmatpush.msra.mxu0 %v1195
    %1719 = vmatpush.msra.mxu0 %v1187
    %1720 = vmatpush.msra.mxu0 %v1179
    %1721 = vmatpush.msra.mxu0 %v1171
    %1722 = vmatpush.msra.mxu0 %v1163
    %1723 = vmatpush.msra.mxu0 %v1155
    %1724 = vmatmul.f32.gmra.mxu0 %v384
    %v1725 = vpop.f32.mrf.mxu0
    %v1726 = vadd.f32 %v1706, %v1725
    %1727 = vdwg.mxu0
    %1728 = vmatpush.msra.mxu0 %v1403
    %1729 = vmatpush.msra.mxu0 %v1395
    %1730 = vmatpush.msra.mxu0 %v1387
    %1731 = vmatpush.msra.mxu0 %v1379
    %1732 = vmatpush.msra.mxu0 %v1371
    %1733 = vmatpush.msra.mxu0 %v1363
    %1734 = vmatpush.msra.mxu0 %v1355
    %1735 = vmatpush.msra.mxu0 %v1347
    %1736 = vmatpush.msra.mxu0 %v1339
    %1737 = vmatpush.msra.mxu0 %v1331
    %1738 = vmatpush.msra.mxu0 %v1323
    %1739 = vmatpush.msra.mxu0 %v1315
    %1740 = vmatpush.msra.mxu0 %v1307
    %1741 = vmatpush.msra.mxu0 %v1299
    %1742 = vmatpush.msra.mxu0 %v1291
    %1743 = vmatpush.msra.mxu0 %v1283
    %1744 = vmatmul.f32.gmra.mxu0 %v385
    %v1745 = vpop.f32.mrf.mxu0
    %v1746 = vadd.f32 %v1726, %v1745
    %1747 = vdwg.mxu0
    %1748 = vmatpush.msra.mxu0 %v508
    %1749 = vmatpush.msra.mxu0 %v500
    %1750 = vmatpush.msra.mxu0 %v492
    %1751 = vmatpush.msra.mxu0 %v484
    %1752 = vmatpush.msra.mxu0 %v476
    %1753 = vmatpush.msra.mxu0 %v468
    %1754 = vmatpush.msra.mxu0 %v460
    %1755 = vmatpush.msra.mxu0 %v452
    %1756 = vmatpush.msra.mxu0 %v444
    %1757 = vmatpush.msra.mxu0 %v436
    %1758 = vmatpush.msra.mxu0 %v428
    %1759 = vmatpush.msra.mxu0 %v420
    %1760 = vmatpush.msra.mxu0 %v412
    %1761 = vmatpush.msra.mxu0 %v404
    %1762 = vmatpush.msra.mxu0 %v396
    %1763 = vmatpush.msra.mxu0 %v388
    %1764 = vmatmul.f32.gmra.mxu0 %v378
    %v1765 = vpop.f32.mrf.mxu0
    %v1766 = vadd.f32 %v1414, %v1765
    %1767 = vdwg.mxu0
    %1768 = vmatpush.msra.mxu0 %v636
    %1769 = vmatpush.msra.mxu0 %v628
    %1770 = vmatpush.msra.mxu0 %v620
    %1771 = vmatpush.msra.mxu0 %v612
    %1772 = vmatpush.msra.mxu0 %v604
    %1773 = vmatpush.msra.mxu0 %v596
    %1774 = vmatpush.msra.mxu0 %v588
    %1775 = vmatpush.msra.mxu0 %v580
    %1776 = vmatpush.msra.mxu0 %v572
    %1777 = vmatpush.msra.mxu0 %v564
    %1778 = vmatpush.msra.mxu0 %v556
    %1779 = vmatpush.msra.mxu0 %v548
    %1780 = vmatpush.msra.mxu0 %v540
    %1781 = vmatpush.msra.mxu0 %v532
    %1782 = vmatpush.msra.mxu0 %v524
    %1783 = vmatpush.msra.mxu0 %v516
    %1784 = vmatmul.f32.gmra.mxu0 %v379
    %v1785 = vpop.f32.mrf.mxu0
    %v1786 = vadd.f32 %v1766, %v1785
    %1787 = vdwg.mxu0
    %1788 = vmatpush.msra.mxu0 %v764
    %1789 = vmatpush.msra.mxu0 %v756
    %1790 = vmatpush.msra.mxu0 %v748
    %1791 = vmatpush.msra.mxu0 %v740
    %1792 = vmatpush.msra.mxu0 %v732
    %1793 = vmatpush.msra.mxu0 %v724
    %1794 = vmatpush.msra.mxu0 %v716
    %1795 = vmatpush.msra.mxu0 %v708
    %1796 = vmatpush.msra.mxu0 %v700
    %1797 = vmatpush.msra.mxu0 %v692
    %1798 = vmatpush.msra.mxu0 %v684
    %1799 = vmatpush.msra.mxu0 %v676
    %1800 = vmatpush.msra.mxu0 %v668
    %1801 = vmatpush.msra.mxu0 %v660
    %1802 = vmatpush.msra.mxu0 %v652
    %1803 = vmatpush.msra.mxu0 %v644
    %1804 = vmatmul.f32.gmra.mxu0 %v380
    %v1805 = vpop.f32.mrf.mxu0
    %v1806 = vadd.f32 %v1786, %v1805
    %1807 = vdwg.mxu0
    %1808 = vmatpush.msra.mxu0 %v892
    %1809 = vmatpush.msra.mxu0 %v884
    %1810 = vmatpush.msra.mxu0 %v876
    %1811 = vmatpush.msra.mxu0 %v868
    %1812 = vmatpush.msra.mxu0 %v860
    %1813 = vmatpush.msra.mxu0 %v852
    %1814 = vmatpush.msra.mxu0 %v844
    %1815 = vmatpush.msra.mxu0 %v836
    %1816 = vmatpush.msra.mxu0 %v828
    %1817 = vmatpush.msra.mxu0 %v820
    %1818 = vmatpush.msra.mxu0 %v812
    %1819 = vmatpush.msra.mxu0 %v804
    %1820 = vmatpush.msra.mxu0 %v796
    %1821 = vmatpush.msra.mxu0 %v788
    %1822 = vmatpush.msra.mxu0 %v780
    %1823 = vmatpush.msra.mxu0 %v772
    %1824 = vmatmul.f32.gmra.mxu0 %v381
    %v1825 = vpop.f32.mrf.mxu0
    %v1826 = vadd.f32 %v1806, %v1825
    %1827 = vdwg.mxu0
    %1828 = vmatpush.msra.mxu0 %v1020
    %1829 = vmatpush.msra.mxu0 %v1012
    %1830 = vmatpush.msra.mxu0 %v1004
    %1831 = vmatpush.msra.mxu0 %v996
    %1832 = vmatpush.msra.mxu0 %v988
    %1833 = vmatpush.msra.mxu0 %v980
    %1834 = vmatpush.msra.mxu0 %v972
    %1835 = vmatpush.msra.mxu0 %v964
    %1836 = vmatpush.msra.mxu0 %v956
    %1837 = vmatpush.msra.mxu0 %v948
    %1838 = vmatpush.msra.mxu0 %v940
    %1839 = vmatpush.msra.mxu0 %v932
    %1840 = vmatpush.msra.mxu0 %v924
    %1841 = vmatpush.msra.mxu0 %v916
    %1842 = vmatpush.msra.mxu0 %v908
    %1843 = vmatpush.msra.mxu0 %v900
    %1844 = vmatmul.f32.gmra.mxu0 %v382
    %v1845 = vpop.f32.mrf.mxu0
    %v1846 = vadd.f32 %v1826, %v1845
    %1847 = vdwg.mxu0
    %1848 = vmatpush.msra.mxu0 %v1148
    %1849 = vmatpush.msra.mxu0 %v1140
    %1850 = vmatpush.msra.mxu0 %v1132
    %1851 = vmatpush.msra.mxu0 %v1124
    %1852 = vmatpush.msra.mxu0 %v1116
    %1853 = vmatpush.msra.mxu0 %v1108
    %1854 = vmatpush.msra.mxu0 %v1100
    %1855 = vmatpush.msra.mxu0 %v1092
    %1856 = vmatpush.msra.mxu0 %v1084
    %1857 = vmatpush.msra.mxu0 %v1076
    %1858 = vmatpush.msra.mxu0 %v1068
    %1859 = vmatpush.msra.mxu0 %v1060
    %1860 = vmatpush.msra.mxu0 %v1052
    %1861 = vmatpush.msra.mxu0 %v1044
    %1862 = vmatpush.msra.mxu0 %v1036
    %1863 = vmatpush.msra.mxu0 %v1028
    %1864 = vmatmul.f32.gmra.mxu0 %v383
    %v1865 = vpop.f32.mrf.mxu0
    %v1866 = vadd.f32 %v1846, %v1865
    %1867 = vdwg.mxu0
    %1868 = vmatpush.msra.mxu0 %v1276
    %1869 = vmatpush.msra.mxu0 %v1268
    %1870 = vmatpush.msra.mxu0 %v1260
    %1871 = vmatpush.msra.mxu0 %v1252
    %1872 = vmatpush.msra.mxu0 %v1244
    %1873 = vmatpush.msra.mxu0 %v1236
    %1874 = vmatpush.msra.mxu0 %v1228
    %1875 = vmatpush.msra.mxu0 %v1220
    %1876 = vmatpush.msra.mxu0 %v1212
    %1877 = vmatpush.msra.mxu0 %v1204
    %1878 = vmatpush.msra.mxu0 %v1196
    %1879 = vmatpush.msra.mxu0 %v1188
    %1880 = vmatpush.msra.mxu0 %v1180
    %1881 = vmatpush.msra.mxu0 %v1172
    %1882 = vmatpush.msra.mxu0 %v1164
    %1883 = vmatpush.msra.mxu0 %v1156
    %1884 = vmatmul.f32.gmra.mxu0 %v384
    %v1885 = vpop.f32.mrf.mxu0
    %v1886 = vadd.f32 %v1866, %v1885
    %1887 = vdwg.mxu0
    %1888 = vmatpush.msra.mxu0 %v1404
    %1889 = vmatpush.msra.mxu0 %v1396
    %1890 = vmatpush.msra.mxu0 %v1388
    %1891 = vmatpush.msra.mxu0 %v1380
    %1892 = vmatpush.msra.mxu0 %v1372
    %1893 = vmatpush.msra.mxu0 %v1364
    %1894 = vmatpush.msra.mxu0 %v1356
    %1895 = vmatpush.msra.mxu0 %v1348
    %1896 = vmatpush.msra.mxu0 %v1340
    %1897 = vmatpush.msra.mxu0 %v1332
    %1898 = vmatpush.msra.mxu0 %v1324
    %1899 = vmatpush.msra.mxu0 %v1316
    %1900 = vmatpush.msra.mxu0 %v1308
    %1901 = vmatpush.msra.mxu0 %v1300
    %1902 = vmatpush.msra.mxu0 %v1292
    %1903 = vmatpush.msra.mxu0 %v1284
    %1904 = vmatmul.f32.gmra.mxu0 %v385
    %v1905 = vpop.f32.mrf.mxu0
    %v1906 = vadd.f32 %v1886, %v1905
    %1907 = vdwg.mxu0
    %1908 = vmatpush.msra.mxu0 %v509
    %1909 = vmatpush.msra.mxu0 %v501
    %1910 = vmatpush.msra.mxu0 %v493
    %1911 = vmatpush.msra.mxu0 %v485
    %1912 = vmatpush.msra.mxu0 %v477
    %1913 = vmatpush.msra.mxu0 %v469
    %1914 = vmatpush.msra.mxu0 %v461
    %1915 = vmatpush.msra.mxu0 %v453
    %1916 = vmatpush.msra.mxu0 %v445
    %1917 = vmatpush.msra.mxu0 %v437
    %1918 = vmatpush.msra.mxu0 %v429
    %1919 = vmatpush.msra.mxu0 %v421
    %1920 = vmatpush.msra.mxu0 %v413
    %1921 = vmatpush.msra.mxu0 %v405
    %1922 = vmatpush.msra.mxu0 %v397
    %1923 = vmatpush.msra.mxu0 %v389
    %1924 = vmatmul.f32.gmra.mxu0 %v378
    %v1925 = vpop.f32.mrf.mxu0
    %v1926 = vadd.f32 %v1415, %v1925
    %1927 = vdwg.mxu0
    %1928 = vmatpush.msra.mxu0 %v637
    %1929 = vmatpush.msra.mxu0 %v629
    %1930 = vmatpush.msra.mxu0 %v621
    %1931 = vmatpush.msra.mxu0 %v613
    %1932 = vmatpush.msra.mxu0 %v605
    %1933 = vmatpush.msra.mxu0 %v597
    %1934 = vmatpush.msra.mxu0 %v589
    %1935 = vmatpush.msra.mxu0 %v581
    %1936 = vmatpush.msra.mxu0 %v573
    %1937 = vmatpush.msra.mxu0 %v565
    %1938 = vmatpush.msra.mxu0 %v557
    %1939 = vmatpush.msra.mxu0 %v549
    %1940 = vmatpush.msra.mxu0 %v541
    %1941 = vmatpush.msra.mxu0 %v533
    %1942 = vmatpush.msra.mxu0 %v525
    %1943 = vmatpush.msra.mxu0 %v517
    %1944 = vmatmul.f32.gmra.mxu0 %v379
    %v1945 = vpop.f32.mrf.mxu0
    %v1946 = vadd.f32 %v1926, %v1945
    %1947 = vdwg.mxu0
    %1948 = vmatpush.msra.mxu0 %v765
    %1949 = vmatpush.msra.mxu0 %v757
    %1950 = vmatpush.msra.mxu0 %v749
    %1951 = vmatpush.msra.mxu0 %v741
    %1952 = vmatpush.msra.mxu0 %v733
    %1953 = vmatpush.msra.mxu0 %v725
    %1954 = vmatpush.msra.mxu0 %v717
    %1955 = vmatpush.msra.mxu0 %v709
    %1956 = vmatpush.msra.mxu0 %v701
    %1957 = vmatpush.msra.mxu0 %v693
    %1958 = vmatpush.msra.mxu0 %v685
    %1959 = vmatpush.msra.mxu0 %v677
    %1960 = vmatpush.msra.mxu0 %v669
    %1961 = vmatpush.msra.mxu0 %v661
    %1962 = vmatpush.msra.mxu0 %v653
    %1963 = vmatpush.msra.mxu0 %v645
    %1964 = vmatmul.f32.gmra.mxu0 %v380
    %v1965 = vpop.f32.mrf.mxu0
    %v1966 = vadd.f32 %v1946, %v1965
    %1967 = vdwg.mxu0
    %1968 = vmatpush.msra.mxu0 %v893
    %1969 = vmatpush.msra.mxu0 %v885
    %1970 = vmatpush.msra.mxu0 %v877
    %1971 = vmatpush.msra.mxu0 %v869
    %1972 = vmatpush.msra.mxu0 %v861
    %1973 = vmatpush.msra.mxu0 %v853
    %1974 = vmatpush.msra.mxu0 %v845
    %1975 = vmatpush.msra.mxu0 %v837
    %1976 = vmatpush.msra.mxu0 %v829
    %1977 = vmatpush.msra.mxu0 %v821
    %1978 = vmatpush.msra.mxu0 %v813
    %1979 = vmatpush.msra.mxu0 %v805
    %1980 = vmatpush.msra.mxu0 %v797
    %1981 = vmatpush.msra.mxu0 %v789
    %1982 = vmatpush.msra.mxu0 %v781
    %1983 = vmatpush.msra.mxu0 %v773
    %1984 = vmatmul.f32.gmra.mxu0 %v381
    %v1985 = vpop.f32.mrf.mxu0
    %v1986 = vadd.f32 %v1966, %v1985
    %1987 = vdwg.mxu0
    %1988 = vmatpush.msra.mxu0 %v1021
    %1989 = vmatpush.msra.mxu0 %v1013
    %1990 = vmatpush.msra.mxu0 %v1005
    %1991 = vmatpush.msra.mxu0 %v997
    %1992 = vmatpush.msra.mxu0 %v989
    %1993 = vmatpush.msra.mxu0 %v981
    %1994 = vmatpush.msra.mxu0 %v973
    %1995 = vmatpush.msra.mxu0 %v965
    %1996 = vmatpush.msra.mxu0 %v957
    %1997 = vmatpush.msra.mxu0 %v949
    %1998 = vmatpush.msra.mxu0 %v941
    %1999 = vmatpush.msra.mxu0 %v933
    %2000 = vmatpush.msra.mxu0 %v925
    %2001 = vmatpush.msra.mxu0 %v917
    %2002 = vmatpush.msra.mxu0 %v909
    %2003 = vmatpush.msra.mxu0 %v901
    %2004 = vmatmul.f32.gmra.mxu0 %v382
    %v2005 = vpop.f32.mrf.mxu0
    %v2006 = vadd.f32 %v1986, %v2005
    %2007 = vdwg.mxu0
    %2008 = vmatpush.msra.mxu0 %v1149
    %2009 = vmatpush.msra.mxu0 %v1141
    %2010 = vmatpush.msra.mxu0 %v1133
    %2011 = vmatpush.msra.mxu0 %v1125
    %2012 = vmatpush.msra.mxu0 %v1117
    %2013 = vmatpush.msra.mxu0 %v1109
    %2014 = vmatpush.msra.mxu0 %v1101
    %2015 = vmatpush.msra.mxu0 %v1093
    %2016 = vmatpush.msra.mxu0 %v1085
    %2017 = vmatpush.msra.mxu0 %v1077
    %2018 = vmatpush.msra.mxu0 %v1069
    %2019 = vmatpush.msra.mxu0 %v1061
    %2020 = vmatpush.msra.mxu0 %v1053
    %2021 = vmatpush.msra.mxu0 %v1045
    %2022 = vmatpush.msra.mxu0 %v1037
    %2023 = vmatpush.msra.mxu0 %v1029
    %2024 = vmatmul.f32.gmra.mxu0 %v383
    %v2025 = vpop.f32.mrf.mxu0
    %v2026 = vadd.f32 %v2006, %v2025
    %2027 = vdwg.mxu0
    %2028 = vmatpush.msra.mxu0 %v1277
    %2029 = vmatpush.msra.mxu0 %v1269
    %2030 = vmatpush.msra.mxu0 %v1261
    %2031 = vmatpush.msra.mxu0 %v1253
    %2032 = vmatpush.msra.mxu0 %v1245
    %2033 = vmatpush.msra.mxu0 %v1237
    %2034 = vmatpush.msra.mxu0 %v1229
    %2035 = vmatpush.msra.mxu0 %v1221
    %2036 = vmatpush.msra.mxu0 %v1213
    %2037 = vmatpush.msra.mxu0 %v1205
    %2038 = vmatpush.msra.mxu0 %v1197
    %2039 = vmatpush.msra.mxu0 %v1189
    %2040 = vmatpush.msra.mxu0 %v1181
    %2041 = vmatpush.msra.mxu0 %v1173
    %2042 = vmatpush.msra.mxu0 %v1165
    %2043 = vmatpush.msra.mxu0 %v1157
    %2044 = vmatmul.f32.gmra.mxu0 %v384
    %v2045 = vpop.f32.mrf.mxu0
    %v2046 = vadd.f32 %v2026, %v2045
    %2047 = vdwg.mxu0
    %2048 = vmatpush.msra.mxu0 %v1405
    %2049 = vmatpush.msra.mxu0 %v1397
    %2050 = vmatpush.msra.mxu0 %v1389
    %2051 = vmatpush.msra.mxu0 %v1381
    %2052 = vmatpush.msra.mxu0 %v1373
    %2053 = vmatpush.msra.mxu0 %v1365
    %2054 = vmatpush.msra.mxu0 %v1357
    %2055 = vmatpush.msra.mxu0 %v1349
    %2056 = vmatpush.msra.mxu0 %v1341
    %2057 = vmatpush.msra.mxu0 %v1333
    %2058 = vmatpush.msra.mxu0 %v1325
    %2059 = vmatpush.msra.mxu0 %v1317
    %2060 = vmatpush.msra.mxu0 %v1309
    %2061 = vmatpush.msra.mxu0 %v1301
    %2062 = vmatpush.msra.mxu0 %v1293
    %2063 = vmatpush.msra.mxu0 %v1285
    %2064 = vmatmul.f32.gmra.mxu0 %v385
    %v2065 = vpop.f32.mrf.mxu0
    %v2066 = vadd.f32 %v2046, %v2065
    %2067 = vdwg.mxu0
    %2068 = vmatpush.msra.mxu0 %v510
    %2069 = vmatpush.msra.mxu0 %v502
    %2070 = vmatpush.msra.mxu0 %v494
    %2071 = vmatpush.msra.mxu0 %v486
    %2072 = vmatpush.msra.mxu0 %v478
    %2073 = vmatpush.msra.mxu0 %v470
    %2074 = vmatpush.msra.mxu0 %v462
    %2075 = vmatpush.msra.mxu0 %v454
    %2076 = vmatpush.msra.mxu0 %v446
    %2077 = vmatpush.msra.mxu0 %v438
    %2078 = vmatpush.msra.mxu0 %v430
    %2079 = vmatpush.msra.mxu0 %v422
    %2080 = vmatpush.msra.mxu0 %v414
    %2081 = vmatpush.msra.mxu0 %v406
    %2082 = vmatpush.msra.mxu0 %v398
    %2083 = vmatpush.msra.mxu0 %v390
    %2084 = vmatmul.f32.gmra.mxu0 %v378
    %v2085 = vpop.f32.mrf.mxu0
    %v2086 = vadd.f32 %v1416, %v2085
    %2087 = vdwg.mxu0
    %2088 = vmatpush.msra.mxu0 %v638
    %2089 = vmatpush.msra.mxu0 %v630
    %2090 = vmatpush.msra.mxu0 %v622
    %2091 = vmatpush.msra.mxu0 %v614
    %2092 = vmatpush.msra.mxu0 %v606
    %2093 = vmatpush.msra.mxu0 %v598
    %2094 = vmatpush.msra.mxu0 %v590
    %2095 = vmatpush.msra.mxu0 %v582
    %2096 = vmatpush.msra.mxu0 %v574
    %2097 = vmatpush.msra.mxu0 %v566
    %2098 = vmatpush.msra.mxu0 %v558
    %2099 = vmatpush.msra.mxu0 %v550
    %2100 = vmatpush.msra.mxu0 %v542
    %2101 = vmatpush.msra.mxu0 %v534
    %2102 = vmatpush.msra.mxu0 %v526
    %2103 = vmatpush.msra.mxu0 %v518
    %2104 = vmatmul.f32.gmra.mxu0 %v379
    %v2105 = vpop.f32.mrf.mxu0
    %v2106 = vadd.f32 %v2086, %v2105
    %2107 = vdwg.mxu0
    %2108 = vmatpush.msra.mxu0 %v766
    %2109 = vmatpush.msra.mxu0 %v758
    %2110 = vmatpush.msra.mxu0 %v750
    %2111 = vmatpush.msra.mxu0 %v742
    %2112 = vmatpush.msra.mxu0 %v734
    %2113 = vmatpush.msra.mxu0 %v726
    %2114 = vmatpush.msra.mxu0 %v718
    %2115 = vmatpush.msra.mxu0 %v710
    %2116 = vmatpush.msra.mxu0 %v702
    %2117 = vmatpush.msra.mxu0 %v694
    %2118 = vmatpush.msra.mxu0 %v686
    %2119 = vmatpush.msra.mxu0 %v678
    %2120 = vmatpush.msra.mxu0 %v670
    %2121 = vmatpush.msra.mxu0 %v662
    %2122 = vmatpush.msra.mxu0 %v654
    %2123 = vmatpush.msra.mxu0 %v646
    %2124 = vmatmul.f32.gmra.mxu0 %v380
    %v2125 = vpop.f32.mrf.mxu0
    %v2126 = vadd.f32 %v2106, %v2125
    %2127 = vdwg.mxu0
    %2128 = vmatpush.msra.mxu0 %v894
    %2129 = vmatpush.msra.mxu0 %v886
    %2130 = vmatpush.msra.mxu0 %v878
    %2131 = vmatpush.msra.mxu0 %v870
    %2132 = vmatpush.msra.mxu0 %v862
    %2133 = vmatpush.msra.mxu0 %v854
    %2134 = vmatpush.msra.mxu0 %v846
    %2135 = vmatpush.msra.mxu0 %v838
    %2136 = vmatpush.msra.mxu0 %v830
    %2137 = vmatpush.msra.mxu0 %v822
    %2138 = vmatpush.msra.mxu0 %v814
    %2139 = vmatpush.msra.mxu0 %v806
    %2140 = vmatpush.msra.mxu0 %v798
    %2141 = vmatpush.msra.mxu0 %v790
    %2142 = vmatpush.msra.mxu0 %v782
    %2143 = vmatpush.msra.mxu0 %v774
    %2144 = vmatmul.f32.gmra.mxu0 %v381
    %v2145 = vpop.f32.mrf.mxu0
    %v2146 = vadd.f32 %v2126, %v2145
    %2147 = vdwg.mxu0
    %2148 = vmatpush.msra.mxu0 %v1022
    %2149 = vmatpush.msra.mxu0 %v1014
    %2150 = vmatpush.msra.mxu0 %v1006
    %2151 = vmatpush.msra.mxu0 %v998
    %2152 = vmatpush.msra.mxu0 %v990
    %2153 = vmatpush.msra.mxu0 %v982
    %2154 = vmatpush.msra.mxu0 %v974
    %2155 = vmatpush.msra.mxu0 %v966
    %2156 = vmatpush.msra.mxu0 %v958
    %2157 = vmatpush.msra.mxu0 %v950
    %2158 = vmatpush.msra.mxu0 %v942
    %2159 = vmatpush.msra.mxu0 %v934
    %2160 = vmatpush.msra.mxu0 %v926
    %2161 = vmatpush.msra.mxu0 %v918
    %2162 = vmatpush.msra.mxu0 %v910
    %2163 = vmatpush.msra.mxu0 %v902
    %2164 = vmatmul.f32.gmra.mxu0 %v382
    %v2165 = vpop.f32.mrf.mxu0
    %v2166 = vadd.f32 %v2146, %v2165
    %2167 = vdwg.mxu0
    %2168 = vmatpush.msra.mxu0 %v1150
    %2169 = vmatpush.msra.mxu0 %v1142
    %2170 = vmatpush.msra.mxu0 %v1134
    %2171 = vmatpush.msra.mxu0 %v1126
    %2172 = vmatpush.msra.mxu0 %v1118
    %2173 = vmatpush.msra.mxu0 %v1110
    %2174 = vmatpush.msra.mxu0 %v1102
    %2175 = vmatpush.msra.mxu0 %v1094
    %2176 = vmatpush.msra.mxu0 %v1086
    %2177 = vmatpush.msra.mxu0 %v1078
    %2178 = vmatpush.msra.mxu0 %v1070
    %2179 = vmatpush.msra.mxu0 %v1062
    %2180 = vmatpush.msra.mxu0 %v1054
    %2181 = vmatpush.msra.mxu0 %v1046
    %2182 = vmatpush.msra.mxu0 %v1038
    %2183 = vmatpush.msra.mxu0 %v1030
    %2184 = vmatmul.f32.gmra.mxu0 %v383
    %v2185 = vpop.f32.mrf.mxu0
    %v2186 = vadd.f32 %v2166, %v2185
    %2187 = vdwg.mxu0
    %2188 = vmatpush.msra.mxu0 %v1278
    %2189 = vmatpush.msra.mxu0 %v1270
    %2190 = vmatpush.msra.mxu0 %v1262
    %2191 = vmatpush.msra.mxu0 %v1254
    %2192 = vmatpush.msra.mxu0 %v1246
    %2193 = vmatpush.msra.mxu0 %v1238
    %2194 = vmatpush.msra.mxu0 %v1230
    %2195 = vmatpush.msra.mxu0 %v1222
    %2196 = vmatpush.msra.mxu0 %v1214
    %2197 = vmatpush.msra.mxu0 %v1206
    %2198 = vmatpush.msra.mxu0 %v1198
    %2199 = vmatpush.msra.mxu0 %v1190
    %2200 = vmatpush.msra.mxu0 %v1182
    %2201 = vmatpush.msra.mxu0 %v1174
    %2202 = vmatpush.msra.mxu0 %v1166
    %2203 = vmatpush.msra.mxu0 %v1158
    %2204 = vmatmul.f32.gmra.mxu0 %v384
    %v2205 = vpop.f32.mrf.mxu0
    %v2206 = vadd.f32 %v2186, %v2205
    %2207 = vdwg.mxu0
    %2208 = vmatpush.msra.mxu0 %v1406
    %2209 = vmatpush.msra.mxu0 %v1398
    %2210 = vmatpush.msra.mxu0 %v1390
    %2211 = vmatpush.msra.mxu0 %v1382
    %2212 = vmatpush.msra.mxu0 %v1374
    %2213 = vmatpush.msra.mxu0 %v1366
    %2214 = vmatpush.msra.mxu0 %v1358
    %2215 = vmatpush.msra.mxu0 %v1350
    %2216 = vmatpush.msra.mxu0 %v1342
    %2217 = vmatpush.msra.mxu0 %v1334
    %2218 = vmatpush.msra.mxu0 %v1326
    %2219 = vmatpush.msra.mxu0 %v1318
    %2220 = vmatpush.msra.mxu0 %v1310
    %2221 = vmatpush.msra.mxu0 %v1302
    %2222 = vmatpush.msra.mxu0 %v1294
    %2223 = vmatpush.msra.mxu0 %v1286
    %2224 = vmatmul.f32.gmra.mxu0 %v385
    %v2225 = vpop.f32.mrf.mxu0
    %v2226 = vadd.f32 %v2206, %v2225
    %2227 = vdwg.mxu0
    %2228 = vmatpush.msra.mxu0 %v511
    %2229 = vmatpush.msra.mxu0 %v503
    %2230 = vmatpush.msra.mxu0 %v495
    %2231 = vmatpush.msra.mxu0 %v487
    %2232 = vmatpush.msra.mxu0 %v479
    %2233 = vmatpush.msra.mxu0 %v471
    %2234 = vmatpush.msra.mxu0 %v463
    %2235 = vmatpush.msra.mxu0 %v455
    %2236 = vmatpush.msra.mxu0 %v447
    %2237 = vmatpush.msra.mxu0 %v439
    %2238 = vmatpush.msra.mxu0 %v431
    %2239 = vmatpush.msra.mxu0 %v423
    %2240 = vmatpush.msra.mxu0 %v415
    %2241 = vmatpush.msra.mxu0 %v407
    %2242 = vmatpush.msra.mxu0 %v399
    %2243 = vmatpush.msra.mxu0 %v391
    %2244 = vmatmul.f32.gmra.mxu0 %v378
    %v2245 = vpop.f32.mrf.mxu0
    %v2246 = vadd.f32 %v1417, %v2245
    %2247 = vdwg.mxu0
    %2248 = vmatpush.msra.mxu0 %v639
    %2249 = vmatpush.msra.mxu0 %v631
    %2250 = vmatpush.msra.mxu0 %v623
    %2251 = vmatpush.msra.mxu0 %v615
    %2252 = vmatpush.msra.mxu0 %v607
    %2253 = vmatpush.msra.mxu0 %v599
    %2254 = vmatpush.msra.mxu0 %v591
    %2255 = vmatpush.msra.mxu0 %v583
    %2256 = vmatpush.msra.mxu0 %v575
    %2257 = vmatpush.msra.mxu0 %v567
    %2258 = vmatpush.msra.mxu0 %v559
    %2259 = vmatpush.msra.mxu0 %v551
    %2260 = vmatpush.msra.mxu0 %v543
    %2261 = vmatpush.msra.mxu0 %v535
    %2262 = vmatpush.msra.mxu0 %v527
    %2263 = vmatpush.msra.mxu0 %v519
    %2264 = vmatmul.f32.gmra.mxu0 %v379
    %v2265 = vpop.f32.mrf.mxu0
    %v2266 = vadd.f32 %v2246, %v2265
    %2267 = vdwg.mxu0
    %2268 = vmatpush.msra.mxu0 %v767
    %2269 = vmatpush.msra.mxu0 %v759
    %2270 = vmatpush.msra.mxu0 %v751
    %2271 = vmatpush.msra.mxu0 %v743
    %2272 = vmatpush.msra.mxu0 %v735
    %2273 = vmatpush.msra.mxu0 %v727
    %2274 = vmatpush.msra.mxu0 %v719
    %2275 = vmatpush.msra.mxu0 %v711
    %2276 = vmatpush.msra.mxu0 %v703
    %2277 = vmatpush.msra.mxu0 %v695
    %2278 = vmatpush.msra.mxu0 %v687
    %2279 = vmatpush.msra.mxu0 %v679
    %2280 = vmatpush.msra.mxu0 %v671
    %2281 = vmatpush.msra.mxu0 %v663
    %2282 = vmatpush.msra.mxu0 %v655
    %2283 = vmatpush.msra.mxu0 %v647
    %2284 = vmatmul.f32.gmra.mxu0 %v380
    %v2285 = vpop.f32.mrf.mxu0
    %v2286 = vadd.f32 %v2266, %v2285
    %2287 = vdwg.mxu0
    %2288 = vmatpush.msra.mxu0 %v895
    %2289 = vmatpush.msra.mxu0 %v887
    %2290 = vmatpush.msra.mxu0 %v879
    %2291 = vmatpush.msra.mxu0 %v871
    %2292 = vmatpush.msra.mxu0 %v863
    %2293 = vmatpush.msra.mxu0 %v855
    %2294 = vmatpush.msra.mxu0 %v847
    %2295 = vmatpush.msra.mxu0 %v839
    %2296 = vmatpush.msra.mxu0 %v831
    %2297 = vmatpush.msra.mxu0 %v823
    %2298 = vmatpush.msra.mxu0 %v815
    %2299 = vmatpush.msra.mxu0 %v807
    %2300 = vmatpush.msra.mxu0 %v799
    %2301 = vmatpush.msra.mxu0 %v791
    %2302 = vmatpush.msra.mxu0 %v783
    %2303 = vmatpush.msra.mxu0 %v775
    %2304 = vmatmul.f32.gmra.mxu0 %v381
    %v2305 = vpop.f32.mrf.mxu0
    %v2306 = vadd.f32 %v2286, %v2305
    %2307 = vdwg.mxu0
    %2308 = vmatpush.msra.mxu0 %v1023
    %2309 = vmatpush.msra.mxu0 %v1015
    %2310 = vmatpush.msra.mxu0 %v1007
    %2311 = vmatpush.msra.mxu0 %v999
    %2312 = vmatpush.msra.mxu0 %v991
    %2313 = vmatpush.msra.mxu0 %v983
    %2314 = vmatpush.msra.mxu0 %v975
    %2315 = vmatpush.msra.mxu0 %v967
    %2316 = vmatpush.msra.mxu0 %v959
    %2317 = vmatpush.msra.mxu0 %v951
    %2318 = vmatpush.msra.mxu0 %v943
    %2319 = vmatpush.msra.mxu0 %v935
    %2320 = vmatpush.msra.mxu0 %v927
    %2321 = vmatpush.msra.mxu0 %v919
    %2322 = vmatpush.msra.mxu0 %v911
    %2323 = vmatpush.msra.mxu0 %v903
    %2324 = vmatmul.f32.gmra.mxu0 %v382
    %v2325 = vpop.f32.mrf.mxu0
    %v2326 = vadd.f32 %v2306, %v2325
    %2327 = vdwg.mxu0
    %2328 = vmatpush.msra.mxu0 %v1151
    %2329 = vmatpush.msra.mxu0 %v1143
    %2330 = vmatpush.msra.mxu0 %v1135
    %2331 = vmatpush.msra.mxu0 %v1127
    %2332 = vmatpush.msra.mxu0 %v1119
    %2333 = vmatpush.msra.mxu0 %v1111
    %2334 = vmatpush.msra.mxu0 %v1103
    %2335 = vmatpush.msra.mxu0 %v1095
    %2336 = vmatpush.msra.mxu0 %v1087
    %2337 = vmatpush.msra.mxu0 %v1079
    %2338 = vmatpush.msra.mxu0 %v1071
    %2339 = vmatpush.msra.mxu0 %v1063
    %2340 = vmatpush.msra.mxu0 %v1055
    %2341 = vmatpush.msra.mxu0 %v1047
    %2342 = vmatpush.msra.mxu0 %v1039
    %2343 = vmatpush.msra.mxu0 %v1031
    %2344 = vmatmul.f32.gmra.mxu0 %v383
    %v2345 = vpop.f32.mrf.mxu0
    %v2346 = vadd.f32 %v2326, %v2345
    %2347 = vdwg.mxu0
    %2348 = vmatpush.msra.mxu0 %v1279
    %2349 = vmatpush.msra.mxu0 %v1271
    %2350 = vmatpush.msra.mxu0 %v1263
    %2351 = vmatpush.msra.mxu0 %v1255
    %2352 = vmatpush.msra.mxu0 %v1247
    %2353 = vmatpush.msra.mxu0 %v1239
    %2354 = vmatpush.msra.mxu0 %v1231
    %2355 = vmatpush.msra.mxu0 %v1223
    %2356 = vmatpush.msra.mxu0 %v1215
    %2357 = vmatpush.msra.mxu0 %v1207
    %2358 = vmatpush.msra.mxu0 %v1199
    %2359 = vmatpush.msra.mxu0 %v1191
    %2360 = vmatpush.msra.mxu0 %v1183
    %2361 = vmatpush.msra.mxu0 %v1175
    %2362 = vmatpush.msra.mxu0 %v1167
    %2363 = vmatpush.msra.mxu0 %v1159
    %2364 = vmatmul.f32.gmra.mxu0 %v384
    %v2365 = vpop.f32.mrf.mxu0
    %v2366 = vadd.f32 %v2346, %v2365
    %2367 = vdwg.mxu0
    %2368 = vmatpush.msra.mxu0 %v1407
    %2369 = vmatpush.msra.mxu0 %v1399
    %2370 = vmatpush.msra.mxu0 %v1391
    %2371 = vmatpush.msra.mxu0 %v1383
    %2372 = vmatpush.msra.mxu0 %v1375
    %2373 = vmatpush.msra.mxu0 %v1367
    %2374 = vmatpush.msra.mxu0 %v1359
    %2375 = vmatpush.msra.mxu0 %v1351
    %2376 = vmatpush.msra.mxu0 %v1343
    %2377 = vmatpush.msra.mxu0 %v1335
    %2378 = vmatpush.msra.mxu0 %v1327
    %2379 = vmatpush.msra.mxu0 %v1319
    %2380 = vmatpush.msra.mxu0 %v1311
    %2381 = vmatpush.msra.mxu0 %v1303
    %2382 = vmatpush.msra.mxu0 %v1295
    %2383 = vmatpush.msra.mxu0 %v1287
    %2384 = vmatmul.f32.gmra.mxu0 %v385
    %v2385 = vpop.f32.mrf.mxu0
    %v2386 = vadd.f32 %v2366, %v2385
    %2387 = vdwg.mxu0
    %2388 = vmatpush.msra.mxu0 %v512
    %2389 = vmatpush.msra.mxu0 %v504
    %2390 = vmatpush.msra.mxu0 %v496
    %2391 = vmatpush.msra.mxu0 %v488
    %2392 = vmatpush.msra.mxu0 %v480
    %2393 = vmatpush.msra.mxu0 %v472
    %2394 = vmatpush.msra.mxu0 %v464
    %2395 = vmatpush.msra.mxu0 %v456
    %2396 = vmatpush.msra.mxu0 %v448
    %2397 = vmatpush.msra.mxu0 %v440
    %2398 = vmatpush.msra.mxu0 %v432
    %2399 = vmatpush.msra.mxu0 %v424
    %2400 = vmatpush.msra.mxu0 %v416
    %2401 = vmatpush.msra.mxu0 %v408
    %2402 = vmatpush.msra.mxu0 %v400
    %2403 = vmatpush.msra.mxu0 %v392
    %2404 = vmatmul.f32.gmra.mxu0 %v378
    %v2405 = vpop.f32.mrf.mxu0
    %v2406 = vadd.f32 %v1418, %v2405
    %2407 = vdwg.mxu0
    %2408 = vmatpush.msra.mxu0 %v640
    %2409 = vmatpush.msra.mxu0 %v632
    %2410 = vmatpush.msra.mxu0 %v624
    %2411 = vmatpush.msra.mxu0 %v616
    %2412 = vmatpush.msra.mxu0 %v608
    %2413 = vmatpush.msra.mxu0 %v600
    %2414 = vmatpush.msra.mxu0 %v592
    %2415 = vmatpush.msra.mxu0 %v584
    %2416 = vmatpush.msra.mxu0 %v576
    %2417 = vmatpush.msra.mxu0 %v568
    %2418 = vmatpush.msra.mxu0 %v560
    %2419 = vmatpush.msra.mxu0 %v552
    %2420 = vmatpush.msra.mxu0 %v544
    %2421 = vmatpush.msra.mxu0 %v536
    %2422 = vmatpush.msra.mxu0 %v528
    %2423 = vmatpush.msra.mxu0 %v520
    %2424 = vmatmul.f32.gmra.mxu0 %v379
    %v2425 = vpop.f32.mrf.mxu0
    %v2426 = vadd.f32 %v2406, %v2425
    %2427 = vdwg.mxu0
    %2428 = vmatpush.msra.mxu0 %v768
    %2429 = vmatpush.msra.mxu0 %v760
    %2430 = vmatpush.msra.mxu0 %v752
    %2431 = vmatpush.msra.mxu0 %v744
    %2432 = vmatpush.msra.mxu0 %v736
    %2433 = vmatpush.msra.mxu0 %v728
    %2434 = vmatpush.msra.mxu0 %v720
    %2435 = vmatpush.msra.mxu0 %v712
    %2436 = vmatpush.msra.mxu0 %v704
    %2437 = vmatpush.msra.mxu0 %v696
    %2438 = vmatpush.msra.mxu0 %v688
    %2439 = vmatpush.msra.mxu0 %v680
    %2440 = vmatpush.msra.mxu0 %v672
    %2441 = vmatpush.msra.mxu0 %v664
    %2442 = vmatpush.msra.mxu0 %v656
    %2443 = vmatpush.msra.mxu0 %v648
    %2444 = vmatmul.f32.gmra.mxu0 %v380
    %v2445 = vpop.f32.mrf.mxu0
    %v2446 = vadd.f32 %v2426, %v2445
    %2447 = vdwg.mxu0
    %2448 = vmatpush.msra.mxu0 %v896
    %2449 = vmatpush.msra.mxu0 %v888
    %2450 = vmatpush.msra.mxu0 %v880
    %2451 = vmatpush.msra.mxu0 %v872
    %2452 = vmatpush.msra.mxu0 %v864
    %2453 = vmatpush.msra.mxu0 %v856
    %2454 = vmatpush.msra.mxu0 %v848
    %2455 = vmatpush.msra.mxu0 %v840
    %2456 = vmatpush.msra.mxu0 %v832
    %2457 = vmatpush.msra.mxu0 %v824
    %2458 = vmatpush.msra.mxu0 %v816
    %2459 = vmatpush.msra.mxu0 %v808
    %2460 = vmatpush.msra.mxu0 %v800
    %2461 = vmatpush.msra.mxu0 %v792
    %2462 = vmatpush.msra.mxu0 %v784
    %2463 = vmatpush.msra.mxu0 %v776
    %2464 = vmatmul.f32.gmra.mxu0 %v381
    %v2465 = vpop.f32.mrf.mxu0
    %v2466 = vadd.f32 %v2446, %v2465
    %2467 = vdwg.mxu0
    %2468 = vmatpush.msra.mxu0 %v1024
    %2469 = vmatpush.msra.mxu0 %v1016
    %2470 = vmatpush.msra.mxu0 %v1008
    %2471 = vmatpush.msra.mxu0 %v1000
    %2472 = vmatpush.msra.mxu0 %v992
    %2473 = vmatpush.msra.mxu0 %v984
    %2474 = vmatpush.msra.mxu0 %v976
    %2475 = vmatpush.msra.mxu0 %v968
    %2476 = vmatpush.msra.mxu0 %v960
    %2477 = vmatpush.msra.mxu0 %v952
    %2478 = vmatpush.msra.mxu0 %v944
    %2479 = vmatpush.msra.mxu0 %v936
    %2480 = vmatpush.msra.mxu0 %v928
    %2481 = vmatpush.msra.mxu0 %v920
    %2482 = vmatpush.msra.mxu0 %v912
    %2483 = vmatpush.msra.mxu0 %v904
    %2484 = vmatmul.f32.gmra.mxu0 %v382
    %v2485 = vpop.f32.mrf.mxu0
    %v2486 = vadd.f32 %v2466, %v2485
    %2487 = vdwg.mxu0
    %2488 = vmatpush.msra.mxu0 %v1152
    %2489 = vmatpush.msra.mxu0 %v1144
    %2490 = vmatpush.msra.mxu0 %v1136
    %2491 = vmatpush.msra.mxu0 %v1128
    %2492 = vmatpush.msra.mxu0 %v1120
    %2493 = vmatpush.msra.mxu0 %v1112
    %2494 = vmatpush.msra.mxu0 %v1104
    %2495 = vmatpush.msra.mxu0 %v1096
    %2496 = vmatpush.msra.mxu0 %v1088
    %2497 = vmatpush.msra.mxu0 %v1080
    %2498 = vmatpush.msra.mxu0 %v1072
    %2499 = vmatpush.msra.mxu0 %v1064
    %2500 = vmatpush.msra.mxu0 %v1056
    %2501 = vmatpush.msra.mxu0 %v1048
    %2502 = vmatpush.msra.mxu0 %v1040
    %2503 = vmatpush.msra.mxu0 %v1032
    %2504 = vmatmul.f32.gmra.mxu0 %v383
    %v2505 = vpop.f32.mrf.mxu0
    %v2506 = vadd.f32 %v2486, %v2505
    %2507 = vdwg.mxu0
    %2508 = vmatpush.msra.mxu0 %v1280
    %2509 = vmatpush.msra.mxu0 %v1272
    %2510 = vmatpush.msra.mxu0 %v1264
    %2511 = vmatpush.msra.mxu0 %v1256
    %2512 = vmatpush.msra.mxu0 %v1248
    %2513 = vmatpush.msra.mxu0 %v1240
    %2514 = vmatpush.msra.mxu0 %v1232
    %2515 = vmatpush.msra.mxu0 %v1224
    %2516 = vmatpush.msra.mxu0 %v1216
    %2517 = vmatpush.msra.mxu0 %v1208
    %2518 = vmatpush.msra.mxu0 %v1200
    %2519 = vmatpush.msra.mxu0 %v1192
    %2520 = vmatpush.msra.mxu0 %v1184
    %2521 = vmatpush.msra.mxu0 %v1176
    %2522 = vmatpush.msra.mxu0 %v1168
    %2523 = vmatpush.msra.mxu0 %v1160
    %2524 = vmatmul.f32.gmra.mxu0 %v384
    %v2525 = vpop.f32.mrf.mxu0
    %v2526 = vadd.f32 %v2506, %v2525
    %2527 = vdwg.mxu0
    %2528 = vmatpush.msra.mxu0 %v1408
    %2529 = vmatpush.msra.mxu0 %v1400
    %2530 = vmatpush.msra.mxu0 %v1392
    %2531 = vmatpush.msra.mxu0 %v1384
    %2532 = vmatpush.msra.mxu0 %v1376
    %2533 = vmatpush.msra.mxu0 %v1368
    %2534 = vmatpush.msra.mxu0 %v1360
    %2535 = vmatpush.msra.mxu0 %v1352
    %2536 = vmatpush.msra.mxu0 %v1344
    %2537 = vmatpush.msra.mxu0 %v1336
    %2538 = vmatpush.msra.mxu0 %v1328
    %2539 = vmatpush.msra.mxu0 %v1320
    %2540 = vmatpush.msra.mxu0 %v1312
    %2541 = vmatpush.msra.mxu0 %v1304
    %2542 = vmatpush.msra.mxu0 %v1296
    %2543 = vmatpush.msra.mxu0 %v1288
    %2544 = vmatmul.f32.gmra.mxu0 %v385
    %v2545 = vpop.f32.mrf.mxu0
    %v2546 = vadd.f32 %v2526, %v2545
    %2547 = vdwg.mxu0
    %2548 = vmatpush.msra.mxu0 %v513
    %2549 = vmatpush.msra.mxu0 %v505
    %2550 = vmatpush.msra.mxu0 %v497
    %2551 = vmatpush.msra.mxu0 %v489
    %2552 = vmatpush.msra.mxu0 %v481
    %2553 = vmatpush.msra.mxu0 %v473
    %2554 = vmatpush.msra.mxu0 %v465
    %2555 = vmatpush.msra.mxu0 %v457
    %2556 = vmatpush.msra.mxu0 %v449
    %2557 = vmatpush.msra.mxu0 %v441
    %2558 = vmatpush.msra.mxu0 %v433
    %2559 = vmatpush.msra.mxu0 %v425
    %2560 = vmatpush.msra.mxu0 %v417
    %2561 = vmatpush.msra.mxu0 %v409
    %2562 = vmatpush.msra.mxu0 %v401
    %2563 = vmatpush.msra.mxu0 %v393
    %2564 = vmatmul.f32.gmra.mxu0 %v378
    %v2565 = vpop.f32.mrf.mxu0
    %v2566 = vadd.f32 %v1419, %v2565
    %2567 = vdwg.mxu0
    %2568 = vmatpush.msra.mxu0 %v641
    %2569 = vmatpush.msra.mxu0 %v633
    %2570 = vmatpush.msra.mxu0 %v625
    %2571 = vmatpush.msra.mxu0 %v617
    %2572 = vmatpush.msra.mxu0 %v609
    %2573 = vmatpush.msra.mxu0 %v601
    %2574 = vmatpush.msra.mxu0 %v593
    %2575 = vmatpush.msra.mxu0 %v585
    %2576 = vmatpush.msra.mxu0 %v577
    %2577 = vmatpush.msra.mxu0 %v569
    %2578 = vmatpush.msra.mxu0 %v561
    %2579 = vmatpush.msra.mxu0 %v553
    %2580 = vmatpush.msra.mxu0 %v545
    %2581 = vmatpush.msra.mxu0 %v537
    %2582 = vmatpush.msra.mxu0 %v529
    %2583 = vmatpush.msra.mxu0 %v521
    %2584 = vmatmul.f32.gmra.mxu0 %v379
    %v2585 = vpop.f32.mrf.mxu0
    %v2586 = vadd.f32 %v2566, %v2585
    %2587 = vdwg.mxu0
    %2588 = vmatpush.msra.mxu0 %v769
    %2589 = vmatpush.msra.mxu0 %v761
    %2590 = vmatpush.msra.mxu0 %v753
    %2591 = vmatpush.msra.mxu0 %v745
    %2592 = vmatpush.msra.mxu0 %v737
    %2593 = vmatpush.msra.mxu0 %v729
    %2594 = vmatpush.msra.mxu0 %v721
    %2595 = vmatpush.msra.mxu0 %v713
    %2596 = vmatpush.msra.mxu0 %v705
    %2597 = vmatpush.msra.mxu0 %v697
    %2598 = vmatpush.msra.mxu0 %v689
    %2599 = vmatpush.msra.mxu0 %v681
    %2600 = vmatpush.msra.mxu0 %v673
    %2601 = vmatpush.msra.mxu0 %v665
    %2602 = vmatpush.msra.mxu0 %v657
    %2603 = vmatpush.msra.mxu0 %v649
    %2604 = vmatmul.f32.gmra.mxu0 %v380
    %v2605 = vpop.f32.mrf.mxu0
    %v2606 = vadd.f32 %v2586, %v2605
    %2607 = vdwg.mxu0
    %2608 = vmatpush.msra.mxu0 %v897
    %2609 = vmatpush.msra.mxu0 %v889
    %2610 = vmatpush.msra.mxu0 %v881
    %2611 = vmatpush.msra.mxu0 %v873
    %2612 = vmatpush.msra.mxu0 %v865
    %2613 = vmatpush.msra.mxu0 %v857
    %2614 = vmatpush.msra.mxu0 %v849
    %2615 = vmatpush.msra.mxu0 %v841
    %2616 = vmatpush.msra.mxu0 %v833
    %2617 = vmatpush.msra.mxu0 %v825
    %2618 = vmatpush.msra.mxu0 %v817
    %2619 = vmatpush.msra.mxu0 %v809
    %2620 = vmatpush.msra.mxu0 %v801
    %2621 = vmatpush.msra.mxu0 %v793
    %2622 = vmatpush.msra.mxu0 %v785
    %2623 = vmatpush.msra.mxu0 %v777
    %2624 = vmatmul.f32.gmra.mxu0 %v381
    %v2625 = vpop.f32.mrf.mxu0
    %v2626 = vadd.f32 %v2606, %v2625
    %2627 = vdwg.mxu0
    %2628 = vmatpush.msra.mxu0 %v1025
    %2629 = vmatpush.msra.mxu0 %v1017
    %2630 = vmatpush.msra.mxu0 %v1009
    %2631 = vmatpush.msra.mxu0 %v1001
    %2632 = vmatpush.msra.mxu0 %v993
    %2633 = vmatpush.msra.mxu0 %v985
    %2634 = vmatpush.msra.mxu0 %v977
    %2635 = vmatpush.msra.mxu0 %v969
    %2636 = vmatpush.msra.mxu0 %v961
    %2637 = vmatpush.msra.mxu0 %v953
    %2638 = vmatpush.msra.mxu0 %v945
    %2639 = vmatpush.msra.mxu0 %v937
    %2640 = vmatpush.msra.mxu0 %v929
    %2641 = vmatpush.msra.mxu0 %v921
    %2642 = vmatpush.msra.mxu0 %v913
    %2643 = vmatpush.msra.mxu0 %v905
    %2644 = vmatmul.f32.gmra.mxu0 %v382
    %v2645 = vpop.f32.mrf.mxu0
    %v2646 = vadd.f32 %v2626, %v2645
    %2647 = vdwg.mxu0
    %2648 = vmatpush.msra.mxu0 %v1153
    %2649 = vmatpush.msra.mxu0 %v1145
    %2650 = vmatpush.msra.mxu0 %v1137
    %2651 = vmatpush.msra.mxu0 %v1129
    %2652 = vmatpush.msra.mxu0 %v1121
    %2653 = vmatpush.msra.mxu0 %v1113
    %2654 = vmatpush.msra.mxu0 %v1105
    %2655 = vmatpush.msra.mxu0 %v1097
    %2656 = vmatpush.msra.mxu0 %v1089
    %2657 = vmatpush.msra.mxu0 %v1081
    %2658 = vmatpush.msra.mxu0 %v1073
    %2659 = vmatpush.msra.mxu0 %v1065
    %2660 = vmatpush.msra.mxu0 %v1057
    %2661 = vmatpush.msra.mxu0 %v1049
    %2662 = vmatpush.msra.mxu0 %v1041
    %2663 = vmatpush.msra.mxu0 %v1033
    %2664 = vmatmul.f32.gmra.mxu0 %v383
    %v2665 = vpop.f32.mrf.mxu0
    %v2666 = vadd.f32 %v2646, %v2665
    %2667 = vdwg.mxu0
    %2668 = vmatpush.msra.mxu0 %v1281
    %2669 = vmatpush.msra.mxu0 %v1273
    %2670 = vmatpush.msra.mxu0 %v1265
    %2671 = vmatpush.msra.mxu0 %v1257
    %2672 = vmatpush.msra.mxu0 %v1249
    %2673 = vmatpush.msra.mxu0 %v1241
    %2674 = vmatpush.msra.mxu0 %v1233
    %2675 = vmatpush.msra.mxu0 %v1225
    %2676 = vmatpush.msra.mxu0 %v1217
    %2677 = vmatpush.msra.mxu0 %v1209
    %2678 = vmatpush.msra.mxu0 %v1201
    %2679 = vmatpush.msra.mxu0 %v1193
    %2680 = vmatpush.msra.mxu0 %v1185
    %2681 = vmatpush.msra.mxu0 %v1177
    %2682 = vmatpush.msra.mxu0 %v1169
    %2683 = vmatpush.msra.mxu0 %v1161
    %2684 = vmatmul.f32.gmra.mxu0 %v384
    %v2685 = vpop.f32.mrf.mxu0
    %v2686 = vadd.f32 %v2666, %v2685
    %2687 = vdwg.mxu0
    %2688 = vmatpush.msra.mxu0 %v1409
    %2689 = vmatpush.msra.mxu0 %v1401
    %2690 = vmatpush.msra.mxu0 %v1393
    %2691 = vmatpush.msra.mxu0 %v1385
    %2692 = vmatpush.msra.mxu0 %v1377
    %2693 = vmatpush.msra.mxu0 %v1369
    %2694 = vmatpush.msra.mxu0 %v1361
    %2695 = vmatpush.msra.mxu0 %v1353
    %2696 = vmatpush.msra.mxu0 %v1345
    %2697 = vmatpush.msra.mxu0 %v1337
    %2698 = vmatpush.msra.mxu0 %v1329
    %2699 = vmatpush.msra.mxu0 %v1321
    %2700 = vmatpush.msra.mxu0 %v1313
    %2701 = vmatpush.msra.mxu0 %v1305
    %2702 = vmatpush.msra.mxu0 %v1297
    %2703 = vmatpush.msra.mxu0 %v1289
    %2704 = vmatmul.f32.gmra.mxu0 %v385
    %v2705 = vpop.f32.mrf.mxu0
    %v2706 = vadd.f32 %v2686, %v2705
    %2707 = vdwg.mxu0
    %v2708 = vmax.f32 %v1586, 0.0
    %v2709 = vmax.f32 %v1746, 0.0
    %v2710 = vmax.f32 %v1906, 0.0
    %v2711 = vmax.f32 %v2066, 0.0
    %v2712 = vmax.f32 %v2226, 0.0
    %v2713 = vmax.f32 %v2386, 0.0
    %v2714 = vmax.f32 %v2546, 0.0
    %v2715 = vmax.f32 %v2706, 0.0
    %v2716 = vld [vmem:[#allocation11] sm:$0xff]
    %v2717 = vld [vmem:[#allocation11 + $0x8] sm:$0xff]
    %v2718 = vld [vmem:[#allocation11 + $0x10] sm:$0xff]
    %v2719 = vld [vmem:[#allocation11 + $0x18] sm:$0xff]
    %v2720 = vld [vmem:[#allocation11 + $0x20] sm:$0xff]
    %v2721 = vld [vmem:[#allocation11 + $0x28] sm:$0xff]
    %v2722 = vld [vmem:[#allocation11 + $0x30] sm:$0xff]
    %v2723 = vld [vmem:[#allocation11 + $0x38] sm:$0xff]
    %v2724 = vld [vmem:[#allocation11 + $0x40] sm:$0xff]
    %v2725 = vld [vmem:[#allocation11 + $0x48] sm:$0xff]
    %v2726 = vld [vmem:[#allocation11 + $0x50] sm:$0xff]
    %v2727 = vld [vmem:[#allocation11 + $0x58] sm:$0xff]
    %v2728 = vld [vmem:[#allocation11 + $0x60] sm:$0xff]
    %v2729 = vld [vmem:[#allocation11 + $0x68] sm:$0xff]
    %v2730 = vld [vmem:[#allocation11 + $0x70] sm:$0xff]
    %v2731 = vld [vmem:[#allocation11 + $0x78] sm:$0xff]
    %v2732 = vld [vmem:[#allocation11 + $0x80] sm:$0xff]
    %v2733 = vld [vmem:[#allocation11 + $0x88] sm:$0xff]
    %v2734 = vld [vmem:[#allocation11 + $0x90] sm:$0xff]
    %v2735 = vld [vmem:[#allocation11 + $0x98] sm:$0xff]
    %v2736 = vld [vmem:[#allocation11 + $0xa0] sm:$0xff]
    %v2737 = vld [vmem:[#allocation11 + $0xa8] sm:$0xff]
    %v2738 = vld [vmem:[#allocation11 + $0xb0] sm:$0xff]
    %v2739 = vld [vmem:[#allocation11 + $0xb8] sm:$0xff]
    %v2740 = vld [vmem:[#allocation11 + $0xc0] sm:$0xff]
    %v2741 = vld [vmem:[#allocation11 + $0xc8] sm:$0xff]
    %v2742 = vld [vmem:[#allocation11 + $0xd0] sm:$0xff]
    %v2743 = vld [vmem:[#allocation11 + $0xd8] sm:$0xff]
    %v2744 = vld [vmem:[#allocation11 + $0xe0] sm:$0xff]
    %v2745 = vld [vmem:[#allocation11 + $0xe8] sm:$0xff]
    %v2746 = vld [vmem:[#allocation11 + $0xf0] sm:$0xff]
    %v2747 = vld [vmem:[#allocation11 + $0xf8] sm:$0xff]
    %v2748 = vld [vmem:[#allocation11 + $0x100] sm:$0xff]
    %v2749 = vld [vmem:[#allocation11 + $0x108] sm:$0xff]
    %v2750 = vld [vmem:[#allocation11 + $0x110] sm:$0xff]
    %v2751 = vld [vmem:[#allocation11 + $0x118] sm:$0xff]
    %v2752 = vld [vmem:[#allocation11 + $0x120] sm:$0xff]
    %v2753 = vld [vmem:[#allocation11 + $0x128] sm:$0xff]
    %v2754 = vld [vmem:[#allocation11 + $0x130] sm:$0xff]
    %v2755 = vld [vmem:[#allocation11 + $0x138] sm:$0xff]
    %v2756 = vld [vmem:[#allocation11 + $0x140] sm:$0xff]
    %v2757 = vld [vmem:[#allocation11 + $0x148] sm:$0xff]
    %v2758 = vld [vmem:[#allocation11 + $0x150] sm:$0xff]
    %v2759 = vld [vmem:[#allocation11 + $0x158] sm:$0xff]
    %v2760 = vld [vmem:[#allocation11 + $0x160] sm:$0xff]
    %v2761 = vld [vmem:[#allocation11 + $0x168] sm:$0xff]
    %v2762 = vld [vmem:[#allocation11 + $0x170] sm:$0xff]
    %v2763 = vld [vmem:[#allocation11 + $0x178] sm:$0xff]
    %v2764 = vld [vmem:[#allocation11 + $0x180] sm:$0xff]
    %v2765 = vld [vmem:[#allocation11 + $0x188] sm:$0xff]
    %v2766 = vld [vmem:[#allocation11 + $0x190] sm:$0xff]
    %v2767 = vld [vmem:[#allocation11 + $0x198] sm:$0xff]
    %v2768 = vld [vmem:[#allocation11 + $0x1a0] sm:$0xff]
    %v2769 = vld [vmem:[#allocation11 + $0x1a8] sm:$0xff]
    %v2770 = vld [vmem:[#allocation11 + $0x1b0] sm:$0xff]
    %v2771 = vld [vmem:[#allocation11 + $0x1b8] sm:$0xff]
    %v2772 = vld [vmem:[#allocation11 + $0x1c0] sm:$0xff]
    %v2773 = vld [vmem:[#allocation11 + $0x1c8] sm:$0xff]
    %v2774 = vld [vmem:[#allocation11 + $0x1d0] sm:$0xff]
    %v2775 = vld [vmem:[#allocation11 + $0x1d8] sm:$0xff]
    %v2776 = vld [vmem:[#allocation11 + $0x1e0] sm:$0xff]
    %v2777 = vld [vmem:[#allocation11 + $0x1e8] sm:$0xff]
    %v2778 = vld [vmem:[#allocation11 + $0x1f0] sm:$0xff]
    %v2779 = vld [vmem:[#allocation11 + $0x1f8] sm:$0xff]
    %v2780 = vld [vmem:[#allocation11 + $0x200] sm:$0xff]
    %v2781 = vld [vmem:[#allocation11 + $0x208] sm:$0xff]
    %v2782 = vld [vmem:[#allocation11 + $0x210] sm:$0xff]
    %v2783 = vld [vmem:[#allocation11 + $0x218] sm:$0xff]
    %v2784 = vld [vmem:[#allocation11 + $0x220] sm:$0xff]
    %v2785 = vld [vmem:[#allocation11 + $0x228] sm:$0xff]
    %v2786 = vld [vmem:[#allocation11 + $0x230] sm:$0xff]
    %v2787 = vld [vmem:[#allocation11 + $0x238] sm:$0xff]
    %v2788 = vld [vmem:[#allocation11 + $0x240] sm:$0xff]
    %v2789 = vld [vmem:[#allocation11 + $0x248] sm:$0xff]
    %v2790 = vld [vmem:[#allocation11 + $0x250] sm:$0xff]
    %v2791 = vld [vmem:[#allocation11 + $0x258] sm:$0xff]
    %v2792 = vld [vmem:[#allocation11 + $0x260] sm:$0xff]
    %v2793 = vld [vmem:[#allocation11 + $0x268] sm:$0xff]
    %v2794 = vld [vmem:[#allocation11 + $0x270] sm:$0xff]
    %v2795 = vld [vmem:[#allocation11 + $0x278] sm:$0xff]
    %v2796 = vld [vmem:[#allocation11 + $0x280] sm:$0xff]
    %v2797 = vld [vmem:[#allocation11 + $0x288] sm:$0xff]
    %v2798 = vld [vmem:[#allocation11 + $0x290] sm:$0xff]
    %v2799 = vld [vmem:[#allocation11 + $0x298] sm:$0xff]
    %v2800 = vld [vmem:[#allocation11 + $0x2a0] sm:$0xff]
    %v2801 = vld [vmem:[#allocation11 + $0x2a8] sm:$0xff]
    %v2802 = vld [vmem:[#allocation11 + $0x2b0] sm:$0xff]
    %v2803 = vld [vmem:[#allocation11 + $0x2b8] sm:$0xff]
    %v2804 = vld [vmem:[#allocation11 + $0x2c0] sm:$0xff]
    %v2805 = vld [vmem:[#allocation11 + $0x2c8] sm:$0xff]
    %v2806 = vld [vmem:[#allocation11 + $0x2d0] sm:$0xff]
    %v2807 = vld [vmem:[#allocation11 + $0x2d8] sm:$0xff]
    %v2808 = vld [vmem:[#allocation11 + $0x2e0] sm:$0xff]
    %v2809 = vld [vmem:[#allocation11 + $0x2e8] sm:$0xff]
    %v2810 = vld [vmem:[#allocation11 + $0x2f0] sm:$0xff]
    %v2811 = vld [vmem:[#allocation11 + $0x2f8] sm:$0xff]
    %v2812 = vld [vmem:[#allocation11 + $0x300] sm:$0xff]
    %v2813 = vld [vmem:[#allocation11 + $0x308] sm:$0xff]
    %v2814 = vld [vmem:[#allocation11 + $0x310] sm:$0xff]
    %v2815 = vld [vmem:[#allocation11 + $0x318] sm:$0xff]
    %v2816 = vld [vmem:[#allocation11 + $0x320] sm:$0xff]
    %v2817 = vld [vmem:[#allocation11 + $0x328] sm:$0xff]
    %v2818 = vld [vmem:[#allocation11 + $0x330] sm:$0xff]
    %v2819 = vld [vmem:[#allocation11 + $0x338] sm:$0xff]
    %v2820 = vld [vmem:[#allocation11 + $0x340] sm:$0xff]
    %v2821 = vld [vmem:[#allocation11 + $0x348] sm:$0xff]
    %v2822 = vld [vmem:[#allocation11 + $0x350] sm:$0xff]
    %v2823 = vld [vmem:[#allocation11 + $0x358] sm:$0xff]
    %v2824 = vld [vmem:[#allocation11 + $0x360] sm:$0xff]
    %v2825 = vld [vmem:[#allocation11 + $0x368] sm:$0xff]
    %v2826 = vld [vmem:[#allocation11 + $0x370] sm:$0xff]
    %v2827 = vld [vmem:[#allocation11 + $0x378] sm:$0xff]
    %v2828 = vld [vmem:[#allocation11 + $0x380] sm:$0xff]
    %v2829 = vld [vmem:[#allocation11 + $0x388] sm:$0xff]
    %v2830 = vld [vmem:[#allocation11 + $0x390] sm:$0xff]
    %v2831 = vld [vmem:[#allocation11 + $0x398] sm:$0xff]
    %v2832 = vld [vmem:[#allocation11 + $0x3a0] sm:$0xff]
    %v2833 = vld [vmem:[#allocation11 + $0x3a8] sm:$0xff]
    %v2834 = vld [vmem:[#allocation11 + $0x3b0] sm:$0xff]
    %v2835 = vld [vmem:[#allocation11 + $0x3b8] sm:$0xff]
    %v2836 = vld [vmem:[#allocation11 + $0x3c0] sm:$0xff]
    %v2837 = vld [vmem:[#allocation11 + $0x3c8] sm:$0xff]
    %v2838 = vld [vmem:[#allocation11 + $0x3d0] sm:$0xff]
    %v2839 = vld [vmem:[#allocation11 + $0x3d8] sm:$0xff]
    %v2840 = vld [vmem:[#allocation11 + $0x3e0] sm:$0xff]
    %v2841 = vld [vmem:[#allocation11 + $0x3e8] sm:$0xff]
    %v2842 = vld [vmem:[#allocation11 + $0x3f0] sm:$0xff]
    %v2843 = vld [vmem:[#allocation11 + $0x3f8] sm:$0xff]
    %v2844 = vld [vmem:[#allocation11 + $0x400] sm:$0xff]
    %v2845 = vld [vmem:[#allocation11 + $0x408] sm:$0xff]
    %v2846 = vld [vmem:[#allocation11 + $0x410] sm:$0xff]
    %v2847 = vld [vmem:[#allocation11 + $0x418] sm:$0xff]
    %v2848 = vld [vmem:[#allocation11 + $0x420] sm:$0xff]
    %v2849 = vld [vmem:[#allocation11 + $0x428] sm:$0xff]
    %v2850 = vld [vmem:[#allocation11 + $0x430] sm:$0xff]
    %v2851 = vld [vmem:[#allocation11 + $0x438] sm:$0xff]
    %v2852 = vld [vmem:[#allocation11 + $0x440] sm:$0xff]
    %v2853 = vld [vmem:[#allocation11 + $0x448] sm:$0xff]
    %v2854 = vld [vmem:[#allocation11 + $0x450] sm:$0xff]
    %v2855 = vld [vmem:[#allocation11 + $0x458] sm:$0xff]
    %v2856 = vld [vmem:[#allocation11 + $0x460] sm:$0xff]
    %v2857 = vld [vmem:[#allocation11 + $0x468] sm:$0xff]
    %v2858 = vld [vmem:[#allocation11 + $0x470] sm:$0xff]
    %v2859 = vld [vmem:[#allocation11 + $0x478] sm:$0xff]
    %v2860 = vld [vmem:[#allocation11 + $0x480] sm:$0xff]
    %v2861 = vld [vmem:[#allocation11 + $0x488] sm:$0xff]
    %v2862 = vld [vmem:[#allocation11 + $0x490] sm:$0xff]
    %v2863 = vld [vmem:[#allocation11 + $0x498] sm:$0xff]
    %v2864 = vld [vmem:[#allocation11 + $0x4a0] sm:$0xff]
    %v2865 = vld [vmem:[#allocation11 + $0x4a8] sm:$0xff]
    %v2866 = vld [vmem:[#allocation11 + $0x4b0] sm:$0xff]
    %v2867 = vld [vmem:[#allocation11 + $0x4b8] sm:$0xff]
    %v2868 = vld [vmem:[#allocation11 + $0x4c0] sm:$0xff]
    %v2869 = vld [vmem:[#allocation11 + $0x4c8] sm:$0xff]
    %v2870 = vld [vmem:[#allocation11 + $0x4d0] sm:$0xff]
    %v2871 = vld [vmem:[#allocation11 + $0x4d8] sm:$0xff]
    %v2872 = vld [vmem:[#allocation11 + $0x4e0] sm:$0xff]
    %v2873 = vld [vmem:[#allocation11 + $0x4e8] sm:$0xff]
    %v2874 = vld [vmem:[#allocation11 + $0x4f0] sm:$0xff]
    %v2875 = vld [vmem:[#allocation11 + $0x4f8] sm:$0xff]
    %v2876 = vld [vmem:[#allocation11 + $0x500] sm:$0xff]
    %v2877 = vld [vmem:[#allocation11 + $0x508] sm:$0xff]
    %v2878 = vld [vmem:[#allocation11 + $0x510] sm:$0xff]
    %v2879 = vld [vmem:[#allocation11 + $0x518] sm:$0xff]
    %v2880 = vld [vmem:[#allocation11 + $0x520] sm:$0xff]
    %v2881 = vld [vmem:[#allocation11 + $0x528] sm:$0xff]
    %v2882 = vld [vmem:[#allocation11 + $0x530] sm:$0xff]
    %v2883 = vld [vmem:[#allocation11 + $0x538] sm:$0xff]
    %v2884 = vld [vmem:[#allocation11 + $0x540] sm:$0xff]
    %v2885 = vld [vmem:[#allocation11 + $0x548] sm:$0xff]
    %v2886 = vld [vmem:[#allocation11 + $0x550] sm:$0xff]
    %v2887 = vld [vmem:[#allocation11 + $0x558] sm:$0xff]
    %v2888 = vld [vmem:[#allocation11 + $0x560] sm:$0xff]
    %v2889 = vld [vmem:[#allocation11 + $0x568] sm:$0xff]
    %v2890 = vld [vmem:[#allocation11 + $0x570] sm:$0xff]
    %v2891 = vld [vmem:[#allocation11 + $0x578] sm:$0xff]
    %v2892 = vld [vmem:[#allocation11 + $0x580] sm:$0xff]
    %v2893 = vld [vmem:[#allocation11 + $0x588] sm:$0xff]
    %v2894 = vld [vmem:[#allocation11 + $0x590] sm:$0xff]
    %v2895 = vld [vmem:[#allocation11 + $0x598] sm:$0xff]
    %v2896 = vld [vmem:[#allocation11 + $0x5a0] sm:$0xff]
    %v2897 = vld [vmem:[#allocation11 + $0x5a8] sm:$0xff]
    %v2898 = vld [vmem:[#allocation11 + $0x5b0] sm:$0xff]
    %v2899 = vld [vmem:[#allocation11 + $0x5b8] sm:$0xff]
    %v2900 = vld [vmem:[#allocation11 + $0x5c0] sm:$0xff]
    %v2901 = vld [vmem:[#allocation11 + $0x5c8] sm:$0xff]
    %v2902 = vld [vmem:[#allocation11 + $0x5d0] sm:$0xff]
    %v2903 = vld [vmem:[#allocation11 + $0x5d8] sm:$0xff]
    %v2904 = vld [vmem:[#allocation11 + $0x5e0] sm:$0xff]
    %v2905 = vld [vmem:[#allocation11 + $0x5e8] sm:$0xff]
    %v2906 = vld [vmem:[#allocation11 + $0x5f0] sm:$0xff]
    %v2907 = vld [vmem:[#allocation11 + $0x5f8] sm:$0xff]
    %v2908 = vld [vmem:[#allocation11 + $0x600] sm:$0xff]
    %v2909 = vld [vmem:[#allocation11 + $0x608] sm:$0xff]
    %v2910 = vld [vmem:[#allocation11 + $0x610] sm:$0xff]
    %v2911 = vld [vmem:[#allocation11 + $0x618] sm:$0xff]
    %v2912 = vld [vmem:[#allocation11 + $0x620] sm:$0xff]
    %v2913 = vld [vmem:[#allocation11 + $0x628] sm:$0xff]
    %v2914 = vld [vmem:[#allocation11 + $0x630] sm:$0xff]
    %v2915 = vld [vmem:[#allocation11 + $0x638] sm:$0xff]
    %v2916 = vld [vmem:[#allocation11 + $0x640] sm:$0xff]
    %v2917 = vld [vmem:[#allocation11 + $0x648] sm:$0xff]
    %v2918 = vld [vmem:[#allocation11 + $0x650] sm:$0xff]
    %v2919 = vld [vmem:[#allocation11 + $0x658] sm:$0xff]
    %v2920 = vld [vmem:[#allocation11 + $0x660] sm:$0xff]
    %v2921 = vld [vmem:[#allocation11 + $0x668] sm:$0xff]
    %v2922 = vld [vmem:[#allocation11 + $0x670] sm:$0xff]
    %v2923 = vld [vmem:[#allocation11 + $0x678] sm:$0xff]
    %v2924 = vld [vmem:[#allocation11 + $0x680] sm:$0xff]
    %v2925 = vld [vmem:[#allocation11 + $0x688] sm:$0xff]
    %v2926 = vld [vmem:[#allocation11 + $0x690] sm:$0xff]
    %v2927 = vld [vmem:[#allocation11 + $0x698] sm:$0xff]
    %v2928 = vld [vmem:[#allocation11 + $0x6a0] sm:$0xff]
    %v2929 = vld [vmem:[#allocation11 + $0x6a8] sm:$0xff]
    %v2930 = vld [vmem:[#allocation11 + $0x6b0] sm:$0xff]
    %v2931 = vld [vmem:[#allocation11 + $0x6b8] sm:$0xff]
    %v2932 = vld [vmem:[#allocation11 + $0x6c0] sm:$0xff]
    %v2933 = vld [vmem:[#allocation11 + $0x6c8] sm:$0xff]
    %v2934 = vld [vmem:[#allocation11 + $0x6d0] sm:$0xff]
    %v2935 = vld [vmem:[#allocation11 + $0x6d8] sm:$0xff]
    %v2936 = vld [vmem:[#allocation11 + $0x6e0] sm:$0xff]
    %v2937 = vld [vmem:[#allocation11 + $0x6e8] sm:$0xff]
    %v2938 = vld [vmem:[#allocation11 + $0x6f0] sm:$0xff]
    %v2939 = vld [vmem:[#allocation11 + $0x6f8] sm:$0xff]
    %v2940 = vld [vmem:[#allocation11 + $0x700] sm:$0xff]
    %v2941 = vld [vmem:[#allocation11 + $0x708] sm:$0xff]
    %v2942 = vld [vmem:[#allocation11 + $0x710] sm:$0xff]
    %v2943 = vld [vmem:[#allocation11 + $0x718] sm:$0xff]
    %v2944 = vld [vmem:[#allocation11 + $0x720] sm:$0xff]
    %v2945 = vld [vmem:[#allocation11 + $0x728] sm:$0xff]
    %v2946 = vld [vmem:[#allocation11 + $0x730] sm:$0xff]
    %v2947 = vld [vmem:[#allocation11 + $0x738] sm:$0xff]
    %v2948 = vld [vmem:[#allocation11 + $0x740] sm:$0xff]
    %v2949 = vld [vmem:[#allocation11 + $0x748] sm:$0xff]
    %v2950 = vld [vmem:[#allocation11 + $0x750] sm:$0xff]
    %v2951 = vld [vmem:[#allocation11 + $0x758] sm:$0xff]
    %v2952 = vld [vmem:[#allocation11 + $0x760] sm:$0xff]
    %v2953 = vld [vmem:[#allocation11 + $0x768] sm:$0xff]
    %v2954 = vld [vmem:[#allocation11 + $0x770] sm:$0xff]
    %v2955 = vld [vmem:[#allocation11 + $0x778] sm:$0xff]
    %v2956 = vld [vmem:[#allocation11 + $0x780] sm:$0xff]
    %v2957 = vld [vmem:[#allocation11 + $0x788] sm:$0xff]
    %v2958 = vld [vmem:[#allocation11 + $0x790] sm:$0xff]
    %v2959 = vld [vmem:[#allocation11 + $0x798] sm:$0xff]
    %v2960 = vld [vmem:[#allocation11 + $0x7a0] sm:$0xff]
    %v2961 = vld [vmem:[#allocation11 + $0x7a8] sm:$0xff]
    %v2962 = vld [vmem:[#allocation11 + $0x7b0] sm:$0xff]
    %v2963 = vld [vmem:[#allocation11 + $0x7b8] sm:$0xff]
    %v2964 = vld [vmem:[#allocation11 + $0x7c0] sm:$0xff]
    %v2965 = vld [vmem:[#allocation11 + $0x7c8] sm:$0xff]
    %v2966 = vld [vmem:[#allocation11 + $0x7d0] sm:$0xff]
    %v2967 = vld [vmem:[#allocation11 + $0x7d8] sm:$0xff]
    %v2968 = vld [vmem:[#allocation11 + $0x7e0] sm:$0xff]
    %v2969 = vld [vmem:[#allocation11 + $0x7e8] sm:$0xff]
    %v2970 = vld [vmem:[#allocation11 + $0x7f0] sm:$0xff]
    %v2971 = vld [vmem:[#allocation11 + $0x7f8] sm:$0xff]
    %v2972 = vld [vmem:[#allocation11 + $0x800] sm:$0xff]
    %v2973 = vld [vmem:[#allocation11 + $0x808] sm:$0xff]
    %v2974 = vld [vmem:[#allocation11 + $0x810] sm:$0xff]
    %v2975 = vld [vmem:[#allocation11 + $0x818] sm:$0xff]
    %v2976 = vld [vmem:[#allocation11 + $0x820] sm:$0xff]
    %v2977 = vld [vmem:[#allocation11 + $0x828] sm:$0xff]
    %v2978 = vld [vmem:[#allocation11 + $0x830] sm:$0xff]
    %v2979 = vld [vmem:[#allocation11 + $0x838] sm:$0xff]
    %v2980 = vld [vmem:[#allocation11 + $0x840] sm:$0xff]
    %v2981 = vld [vmem:[#allocation11 + $0x848] sm:$0xff]
    %v2982 = vld [vmem:[#allocation11 + $0x850] sm:$0xff]
    %v2983 = vld [vmem:[#allocation11 + $0x858] sm:$0xff]
    %v2984 = vld [vmem:[#allocation11 + $0x860] sm:$0xff]
    %v2985 = vld [vmem:[#allocation11 + $0x868] sm:$0xff]
    %v2986 = vld [vmem:[#allocation11 + $0x870] sm:$0xff]
    %v2987 = vld [vmem:[#allocation11 + $0x878] sm:$0xff]
    %v2988 = vld [vmem:[#allocation11 + $0x880] sm:$0xff]
    %v2989 = vld [vmem:[#allocation11 + $0x888] sm:$0xff]
    %v2990 = vld [vmem:[#allocation11 + $0x890] sm:$0xff]
    %v2991 = vld [vmem:[#allocation11 + $0x898] sm:$0xff]
    %v2992 = vld [vmem:[#allocation11 + $0x8a0] sm:$0xff]
    %v2993 = vld [vmem:[#allocation11 + $0x8a8] sm:$0xff]
    %v2994 = vld [vmem:[#allocation11 + $0x8b0] sm:$0xff]
    %v2995 = vld [vmem:[#allocation11 + $0x8b8] sm:$0xff]
    %v2996 = vld [vmem:[#allocation11 + $0x8c0] sm:$0xff]
    %v2997 = vld [vmem:[#allocation11 + $0x8c8] sm:$0xff]
    %v2998 = vld [vmem:[#allocation11 + $0x8d0] sm:$0xff]
    %v2999 = vld [vmem:[#allocation11 + $0x8d8] sm:$0xff]
    %v3000 = vld [vmem:[#allocation11 + $0x8e0] sm:$0xff]
    %v3001 = vld [vmem:[#allocation11 + $0x8e8] sm:$0xff]
    %v3002 = vld [vmem:[#allocation11 + $0x8f0] sm:$0xff]
    %v3003 = vld [vmem:[#allocation11 + $0x8f8] sm:$0xff]
    %v3004 = vld [vmem:[#allocation11 + $0x900] sm:$0xff]
    %v3005 = vld [vmem:[#allocation11 + $0x908] sm:$0xff]
    %v3006 = vld [vmem:[#allocation11 + $0x910] sm:$0xff]
    %v3007 = vld [vmem:[#allocation11 + $0x918] sm:$0xff]
    %v3008 = vld [vmem:[#allocation11 + $0x920] sm:$0xff]
    %v3009 = vld [vmem:[#allocation11 + $0x928] sm:$0xff]
    %v3010 = vld [vmem:[#allocation11 + $0x930] sm:$0xff]
    %v3011 = vld [vmem:[#allocation11 + $0x938] sm:$0xff]
    %v3012 = vld [vmem:[#allocation11 + $0x940] sm:$0xff]
    %v3013 = vld [vmem:[#allocation11 + $0x948] sm:$0xff]
    %v3014 = vld [vmem:[#allocation11 + $0x950] sm:$0xff]
    %v3015 = vld [vmem:[#allocation11 + $0x958] sm:$0xff]
    %v3016 = vld [vmem:[#allocation11 + $0x960] sm:$0xff]
    %v3017 = vld [vmem:[#allocation11 + $0x968] sm:$0xff]
    %v3018 = vld [vmem:[#allocation11 + $0x970] sm:$0xff]
    %v3019 = vld [vmem:[#allocation11 + $0x978] sm:$0xff]
    %v3020 = vld [vmem:[#allocation11 + $0x980] sm:$0xff]
    %v3021 = vld [vmem:[#allocation11 + $0x988] sm:$0xff]
    %v3022 = vld [vmem:[#allocation11 + $0x990] sm:$0xff]
    %v3023 = vld [vmem:[#allocation11 + $0x998] sm:$0xff]
    %v3024 = vld [vmem:[#allocation11 + $0x9a0] sm:$0xff]
    %v3025 = vld [vmem:[#allocation11 + $0x9a8] sm:$0xff]
    %v3026 = vld [vmem:[#allocation11 + $0x9b0] sm:$0xff]
    %v3027 = vld [vmem:[#allocation11 + $0x9b8] sm:$0xff]
    %v3028 = vld [vmem:[#allocation11 + $0x9c0] sm:$0xff]
    %v3029 = vld [vmem:[#allocation11 + $0x9c8] sm:$0xff]
    %v3030 = vld [vmem:[#allocation11 + $0x9d0] sm:$0xff]
    %v3031 = vld [vmem:[#allocation11 + $0x9d8] sm:$0xff]
    %v3032 = vld [vmem:[#allocation11 + $0x9e0] sm:$0xff]
    %v3033 = vld [vmem:[#allocation11 + $0x9e8] sm:$0xff]
    %v3034 = vld [vmem:[#allocation11 + $0x9f0] sm:$0xff]
    %v3035 = vld [vmem:[#allocation11 + $0x9f8] sm:$0xff]
    %v3036 = vld [vmem:[#allocation11 + $0xa00] sm:$0xff]
    %v3037 = vld [vmem:[#allocation11 + $0xa08] sm:$0xff]
    %v3038 = vld [vmem:[#allocation11 + $0xa10] sm:$0xff]
    %v3039 = vld [vmem:[#allocation11 + $0xa18] sm:$0xff]
    %v3040 = vld [vmem:[#allocation11 + $0xa20] sm:$0xff]
    %v3041 = vld [vmem:[#allocation11 + $0xa28] sm:$0xff]
    %v3042 = vld [vmem:[#allocation11 + $0xa30] sm:$0xff]
    %v3043 = vld [vmem:[#allocation11 + $0xa38] sm:$0xff]
    %v3044 = vld [vmem:[#allocation11 + $0xa40] sm:$0xff]
    %v3045 = vld [vmem:[#allocation11 + $0xa48] sm:$0xff]
    %v3046 = vld [vmem:[#allocation11 + $0xa50] sm:$0xff]
    %v3047 = vld [vmem:[#allocation11 + $0xa58] sm:$0xff]
    %v3048 = vld [vmem:[#allocation11 + $0xa60] sm:$0xff]
    %v3049 = vld [vmem:[#allocation11 + $0xa68] sm:$0xff]
    %v3050 = vld [vmem:[#allocation11 + $0xa70] sm:$0xff]
    %v3051 = vld [vmem:[#allocation11 + $0xa78] sm:$0xff]
    %v3052 = vld [vmem:[#allocation11 + $0xa80] sm:$0xff]
    %v3053 = vld [vmem:[#allocation11 + $0xa88] sm:$0xff]
    %v3054 = vld [vmem:[#allocation11 + $0xa90] sm:$0xff]
    %v3055 = vld [vmem:[#allocation11 + $0xa98] sm:$0xff]
    %v3056 = vld [vmem:[#allocation11 + $0xaa0] sm:$0xff]
    %v3057 = vld [vmem:[#allocation11 + $0xaa8] sm:$0xff]
    %v3058 = vld [vmem:[#allocation11 + $0xab0] sm:$0xff]
    %v3059 = vld [vmem:[#allocation11 + $0xab8] sm:$0xff]
    %v3060 = vld [vmem:[#allocation11 + $0xac0] sm:$0xff]
    %v3061 = vld [vmem:[#allocation11 + $0xac8] sm:$0xff]
    %v3062 = vld [vmem:[#allocation11 + $0xad0] sm:$0xff]
    %v3063 = vld [vmem:[#allocation11 + $0xad8] sm:$0xff]
    %v3064 = vld [vmem:[#allocation11 + $0xae0] sm:$0xff]
    %v3065 = vld [vmem:[#allocation11 + $0xae8] sm:$0xff]
    %v3066 = vld [vmem:[#allocation11 + $0xaf0] sm:$0xff]
    %v3067 = vld [vmem:[#allocation11 + $0xaf8] sm:$0xff]
    %v3068 = vld [vmem:[#allocation11 + $0xb00] sm:$0xff]
    %v3069 = vld [vmem:[#allocation11 + $0xb08] sm:$0xff]
    %v3070 = vld [vmem:[#allocation11 + $0xb10] sm:$0xff]
    %v3071 = vld [vmem:[#allocation11 + $0xb18] sm:$0xff]
    %v3072 = vld [vmem:[#allocation11 + $0xb20] sm:$0xff]
    %v3073 = vld [vmem:[#allocation11 + $0xb28] sm:$0xff]
    %v3074 = vld [vmem:[#allocation11 + $0xb30] sm:$0xff]
    %v3075 = vld [vmem:[#allocation11 + $0xb38] sm:$0xff]
    %v3076 = vld [vmem:[#allocation11 + $0xb40] sm:$0xff]
    %v3077 = vld [vmem:[#allocation11 + $0xb48] sm:$0xff]
    %v3078 = vld [vmem:[#allocation11 + $0xb50] sm:$0xff]
    %v3079 = vld [vmem:[#allocation11 + $0xb58] sm:$0xff]
    %v3080 = vld [vmem:[#allocation11 + $0xb60] sm:$0xff]
    %v3081 = vld [vmem:[#allocation11 + $0xb68] sm:$0xff]
    %v3082 = vld [vmem:[#allocation11 + $0xb70] sm:$0xff]
    %v3083 = vld [vmem:[#allocation11 + $0xb78] sm:$0xff]
    %v3084 = vld [vmem:[#allocation11 + $0xb80] sm:$0xff]
    %v3085 = vld [vmem:[#allocation11 + $0xb88] sm:$0xff]
    %v3086 = vld [vmem:[#allocation11 + $0xb90] sm:$0xff]
    %v3087 = vld [vmem:[#allocation11 + $0xb98] sm:$0xff]
    %v3088 = vld [vmem:[#allocation11 + $0xba0] sm:$0xff]
    %v3089 = vld [vmem:[#allocation11 + $0xba8] sm:$0xff]
    %v3090 = vld [vmem:[#allocation11 + $0xbb0] sm:$0xff]
    %v3091 = vld [vmem:[#allocation11 + $0xbb8] sm:$0xff]
    %v3092 = vld [vmem:[#allocation11 + $0xbc0] sm:$0xff]
    %v3093 = vld [vmem:[#allocation11 + $0xbc8] sm:$0xff]
    %v3094 = vld [vmem:[#allocation11 + $0xbd0] sm:$0xff]
    %v3095 = vld [vmem:[#allocation11 + $0xbd8] sm:$0xff]
    %v3096 = vld [vmem:[#allocation11 + $0xbe0] sm:$0xff]
    %v3097 = vld [vmem:[#allocation11 + $0xbe8] sm:$0xff]
    %v3098 = vld [vmem:[#allocation11 + $0xbf0] sm:$0xff]
    %v3099 = vld [vmem:[#allocation11 + $0xbf8] sm:$0xff]
    %v3100 = vld [vmem:[#allocation11 + $0xc00] sm:$0xff]
    %v3101 = vld [vmem:[#allocation11 + $0xc08] sm:$0xff]
    %v3102 = vld [vmem:[#allocation11 + $0xc10] sm:$0xff]
    %v3103 = vld [vmem:[#allocation11 + $0xc18] sm:$0xff]
    %v3104 = vld [vmem:[#allocation11 + $0xc20] sm:$0xff]
    %v3105 = vld [vmem:[#allocation11 + $0xc28] sm:$0xff]
    %v3106 = vld [vmem:[#allocation11 + $0xc30] sm:$0xff]
    %v3107 = vld [vmem:[#allocation11 + $0xc38] sm:$0xff]
    %v3108 = vld [vmem:[#allocation11 + $0xc40] sm:$0xff]
    %v3109 = vld [vmem:[#allocation11 + $0xc48] sm:$0xff]
    %v3110 = vld [vmem:[#allocation11 + $0xc50] sm:$0xff]
    %v3111 = vld [vmem:[#allocation11 + $0xc58] sm:$0xff]
    %v3112 = vld [vmem:[#allocation11 + $0xc60] sm:$0xff]
    %v3113 = vld [vmem:[#allocation11 + $0xc68] sm:$0xff]
    %v3114 = vld [vmem:[#allocation11 + $0xc70] sm:$0xff]
    %v3115 = vld [vmem:[#allocation11 + $0xc78] sm:$0xff]
    %v3116 = vld [vmem:[#allocation11 + $0xc80] sm:$0xff]
    %v3117 = vld [vmem:[#allocation11 + $0xc88] sm:$0xff]
    %v3118 = vld [vmem:[#allocation11 + $0xc90] sm:$0xff]
    %v3119 = vld [vmem:[#allocation11 + $0xc98] sm:$0xff]
    %v3120 = vld [vmem:[#allocation11 + $0xca0] sm:$0xff]
    %v3121 = vld [vmem:[#allocation11 + $0xca8] sm:$0xff]
    %v3122 = vld [vmem:[#allocation11 + $0xcb0] sm:$0xff]
    %v3123 = vld [vmem:[#allocation11 + $0xcb8] sm:$0xff]
    %v3124 = vld [vmem:[#allocation11 + $0xcc0] sm:$0xff]
    %v3125 = vld [vmem:[#allocation11 + $0xcc8] sm:$0xff]
    %v3126 = vld [vmem:[#allocation11 + $0xcd0] sm:$0xff]
    %v3127 = vld [vmem:[#allocation11 + $0xcd8] sm:$0xff]
    %v3128 = vld [vmem:[#allocation11 + $0xce0] sm:$0xff]
    %v3129 = vld [vmem:[#allocation11 + $0xce8] sm:$0xff]
    %v3130 = vld [vmem:[#allocation11 + $0xcf0] sm:$0xff]
    %v3131 = vld [vmem:[#allocation11 + $0xcf8] sm:$0xff]
    %v3132 = vld [vmem:[#allocation11 + $0xd00] sm:$0xff]
    %v3133 = vld [vmem:[#allocation11 + $0xd08] sm:$0xff]
    %v3134 = vld [vmem:[#allocation11 + $0xd10] sm:$0xff]
    %v3135 = vld [vmem:[#allocation11 + $0xd18] sm:$0xff]
    %v3136 = vld [vmem:[#allocation11 + $0xd20] sm:$0xff]
    %v3137 = vld [vmem:[#allocation11 + $0xd28] sm:$0xff]
    %v3138 = vld [vmem:[#allocation11 + $0xd30] sm:$0xff]
    %v3139 = vld [vmem:[#allocation11 + $0xd38] sm:$0xff]
    %v3140 = vld [vmem:[#allocation11 + $0xd40] sm:$0xff]
    %v3141 = vld [vmem:[#allocation11 + $0xd48] sm:$0xff]
    %v3142 = vld [vmem:[#allocation11 + $0xd50] sm:$0xff]
    %v3143 = vld [vmem:[#allocation11 + $0xd58] sm:$0xff]
    %v3144 = vld [vmem:[#allocation11 + $0xd60] sm:$0xff]
    %v3145 = vld [vmem:[#allocation11 + $0xd68] sm:$0xff]
    %v3146 = vld [vmem:[#allocation11 + $0xd70] sm:$0xff]
    %v3147 = vld [vmem:[#allocation11 + $0xd78] sm:$0xff]
    %v3148 = vld [vmem:[#allocation11 + $0xd80] sm:$0xff]
    %v3149 = vld [vmem:[#allocation11 + $0xd88] sm:$0xff]
    %v3150 = vld [vmem:[#allocation11 + $0xd90] sm:$0xff]
    %v3151 = vld [vmem:[#allocation11 + $0xd98] sm:$0xff]
    %v3152 = vld [vmem:[#allocation11 + $0xda0] sm:$0xff]
    %v3153 = vld [vmem:[#allocation11 + $0xda8] sm:$0xff]
    %v3154 = vld [vmem:[#allocation11 + $0xdb0] sm:$0xff]
    %v3155 = vld [vmem:[#allocation11 + $0xdb8] sm:$0xff]
    %v3156 = vld [vmem:[#allocation11 + $0xdc0] sm:$0xff]
    %v3157 = vld [vmem:[#allocation11 + $0xdc8] sm:$0xff]
    %v3158 = vld [vmem:[#allocation11 + $0xdd0] sm:$0xff]
    %v3159 = vld [vmem:[#allocation11 + $0xdd8] sm:$0xff]
    %v3160 = vld [vmem:[#allocation11 + $0xde0] sm:$0xff]
    %v3161 = vld [vmem:[#allocation11 + $0xde8] sm:$0xff]
    %v3162 = vld [vmem:[#allocation11 + $0xdf0] sm:$0xff]
    %v3163 = vld [vmem:[#allocation11 + $0xdf8] sm:$0xff]
    %v3164 = vld [vmem:[#allocation11 + $0xe00] sm:$0xff]
    %v3165 = vld [vmem:[#allocation11 + $0xe08] sm:$0xff]
    %v3166 = vld [vmem:[#allocation11 + $0xe10] sm:$0xff]
    %v3167 = vld [vmem:[#allocation11 + $0xe18] sm:$0xff]
    %v3168 = vld [vmem:[#allocation11 + $0xe20] sm:$0xff]
    %v3169 = vld [vmem:[#allocation11 + $0xe28] sm:$0xff]
    %v3170 = vld [vmem:[#allocation11 + $0xe30] sm:$0xff]
    %v3171 = vld [vmem:[#allocation11 + $0xe38] sm:$0xff]
    %v3172 = vld [vmem:[#allocation11 + $0xe40] sm:$0xff]
    %v3173 = vld [vmem:[#allocation11 + $0xe48] sm:$0xff]
    %v3174 = vld [vmem:[#allocation11 + $0xe50] sm:$0xff]
    %v3175 = vld [vmem:[#allocation11 + $0xe58] sm:$0xff]
    %v3176 = vld [vmem:[#allocation11 + $0xe60] sm:$0xff]
    %v3177 = vld [vmem:[#allocation11 + $0xe68] sm:$0xff]
    %v3178 = vld [vmem:[#allocation11 + $0xe70] sm:$0xff]
    %v3179 = vld [vmem:[#allocation11 + $0xe78] sm:$0xff]
    %v3180 = vld [vmem:[#allocation11 + $0xe80] sm:$0xff]
    %v3181 = vld [vmem:[#allocation11 + $0xe88] sm:$0xff]
    %v3182 = vld [vmem:[#allocation11 + $0xe90] sm:$0xff]
    %v3183 = vld [vmem:[#allocation11 + $0xe98] sm:$0xff]
    %v3184 = vld [vmem:[#allocation11 + $0xea0] sm:$0xff]
    %v3185 = vld [vmem:[#allocation11 + $0xea8] sm:$0xff]
    %v3186 = vld [vmem:[#allocation11 + $0xeb0] sm:$0xff]
    %v3187 = vld [vmem:[#allocation11 + $0xeb8] sm:$0xff]
    %v3188 = vld [vmem:[#allocation11 + $0xec0] sm:$0xff]
    %v3189 = vld [vmem:[#allocation11 + $0xec8] sm:$0xff]
    %v3190 = vld [vmem:[#allocation11 + $0xed0] sm:$0xff]
    %v3191 = vld [vmem:[#allocation11 + $0xed8] sm:$0xff]
    %v3192 = vld [vmem:[#allocation11 + $0xee0] sm:$0xff]
    %v3193 = vld [vmem:[#allocation11 + $0xee8] sm:$0xff]
    %v3194 = vld [vmem:[#allocation11 + $0xef0] sm:$0xff]
    %v3195 = vld [vmem:[#allocation11 + $0xef8] sm:$0xff]
    %v3196 = vld [vmem:[#allocation11 + $0xf00] sm:$0xff]
    %v3197 = vld [vmem:[#allocation11 + $0xf08] sm:$0xff]
    %v3198 = vld [vmem:[#allocation11 + $0xf10] sm:$0xff]
    %v3199 = vld [vmem:[#allocation11 + $0xf18] sm:$0xff]
    %v3200 = vld [vmem:[#allocation11 + $0xf20] sm:$0xff]
    %v3201 = vld [vmem:[#allocation11 + $0xf28] sm:$0xff]
    %v3202 = vld [vmem:[#allocation11 + $0xf30] sm:$0xff]
    %v3203 = vld [vmem:[#allocation11 + $0xf38] sm:$0xff]
    %v3204 = vld [vmem:[#allocation11 + $0xf40] sm:$0xff]
    %v3205 = vld [vmem:[#allocation11 + $0xf48] sm:$0xff]
    %v3206 = vld [vmem:[#allocation11 + $0xf50] sm:$0xff]
    %v3207 = vld [vmem:[#allocation11 + $0xf58] sm:$0xff]
    %v3208 = vld [vmem:[#allocation11 + $0xf60] sm:$0xff]
    %v3209 = vld [vmem:[#allocation11 + $0xf68] sm:$0xff]
    %v3210 = vld [vmem:[#allocation11 + $0xf70] sm:$0xff]
    %v3211 = vld [vmem:[#allocation11 + $0xf78] sm:$0xff]
    %v3212 = vld [vmem:[#allocation11 + $0xf80] sm:$0xff]
    %v3213 = vld [vmem:[#allocation11 + $0xf88] sm:$0xff]
    %v3214 = vld [vmem:[#allocation11 + $0xf90] sm:$0xff]
    %v3215 = vld [vmem:[#allocation11 + $0xf98] sm:$0xff]
    %v3216 = vld [vmem:[#allocation11 + $0xfa0] sm:$0xff]
    %v3217 = vld [vmem:[#allocation11 + $0xfa8] sm:$0xff]
    %v3218 = vld [vmem:[#allocation11 + $0xfb0] sm:$0xff]
    %v3219 = vld [vmem:[#allocation11 + $0xfb8] sm:$0xff]
    %v3220 = vld [vmem:[#allocation11 + $0xfc0] sm:$0xff]
    %v3221 = vld [vmem:[#allocation11 + $0xfc8] sm:$0xff]
    %v3222 = vld [vmem:[#allocation11 + $0xfd0] sm:$0xff]
    %v3223 = vld [vmem:[#allocation11 + $0xfd8] sm:$0xff]
    %v3224 = vld [vmem:[#allocation11 + $0xfe0] sm:$0xff]
    %v3225 = vld [vmem:[#allocation11 + $0xfe8] sm:$0xff]
    %v3226 = vld [vmem:[#allocation11 + $0xff0] sm:$0xff]
    %v3227 = vld [vmem:[#allocation11 + $0xff8] sm:$0xff]
    %v3228 = vld [vmem:[#allocation11 + $0x1000] sm:$0xff]
    %v3229 = vld [vmem:[#allocation11 + $0x1008] sm:$0xff]
    %v3230 = vld [vmem:[#allocation11 + $0x1010] sm:$0xff]
    %v3231 = vld [vmem:[#allocation11 + $0x1018] sm:$0xff]
    %v3232 = vld [vmem:[#allocation11 + $0x1020] sm:$0xff]
    %v3233 = vld [vmem:[#allocation11 + $0x1028] sm:$0xff]
    %v3234 = vld [vmem:[#allocation11 + $0x1030] sm:$0xff]
    %v3235 = vld [vmem:[#allocation11 + $0x1038] sm:$0xff]
    %v3236 = vld [vmem:[#allocation11 + $0x1040] sm:$0xff]
    %v3237 = vld [vmem:[#allocation11 + $0x1048] sm:$0xff]
    %v3238 = vld [vmem:[#allocation11 + $0x1050] sm:$0xff]
    %v3239 = vld [vmem:[#allocation11 + $0x1058] sm:$0xff]
    %v3240 = vld [vmem:[#allocation11 + $0x1060] sm:$0xff]
    %v3241 = vld [vmem:[#allocation11 + $0x1068] sm:$0xff]
    %v3242 = vld [vmem:[#allocation11 + $0x1070] sm:$0xff]
    %v3243 = vld [vmem:[#allocation11 + $0x1078] sm:$0xff]
    %v3244 = vld [vmem:[#allocation11 + $0x1080] sm:$0xff]
    %v3245 = vld [vmem:[#allocation11 + $0x1088] sm:$0xff]
    %v3246 = vld [vmem:[#allocation11 + $0x1090] sm:$0xff]
    %v3247 = vld [vmem:[#allocation11 + $0x1098] sm:$0xff]
    %v3248 = vld [vmem:[#allocation11 + $0x10a0] sm:$0xff]
    %v3249 = vld [vmem:[#allocation11 + $0x10a8] sm:$0xff]
    %v3250 = vld [vmem:[#allocation11 + $0x10b0] sm:$0xff]
    %v3251 = vld [vmem:[#allocation11 + $0x10b8] sm:$0xff]
    %v3252 = vld [vmem:[#allocation11 + $0x10c0] sm:$0xff]
    %v3253 = vld [vmem:[#allocation11 + $0x10c8] sm:$0xff]
    %v3254 = vld [vmem:[#allocation11 + $0x10d0] sm:$0xff]
    %v3255 = vld [vmem:[#allocation11 + $0x10d8] sm:$0xff]
    %v3256 = vld [vmem:[#allocation11 + $0x10e0] sm:$0xff]
    %v3257 = vld [vmem:[#allocation11 + $0x10e8] sm:$0xff]
    %v3258 = vld [vmem:[#allocation11 + $0x10f0] sm:$0xff]
    %v3259 = vld [vmem:[#allocation11 + $0x10f8] sm:$0xff]
    %v3260 = vld [vmem:[#allocation11 + $0x1100] sm:$0xff]
    %v3261 = vld [vmem:[#allocation11 + $0x1108] sm:$0xff]
    %v3262 = vld [vmem:[#allocation11 + $0x1110] sm:$0xff]
    %v3263 = vld [vmem:[#allocation11 + $0x1118] sm:$0xff]
    %v3264 = vld [vmem:[#allocation11 + $0x1120] sm:$0xff]
    %v3265 = vld [vmem:[#allocation11 + $0x1128] sm:$0xff]
    %v3266 = vld [vmem:[#allocation11 + $0x1130] sm:$0xff]
    %v3267 = vld [vmem:[#allocation11 + $0x1138] sm:$0xff]
    %v3268 = vld [vmem:[#allocation11 + $0x1140] sm:$0xff]
    %v3269 = vld [vmem:[#allocation11 + $0x1148] sm:$0xff]
    %v3270 = vld [vmem:[#allocation11 + $0x1150] sm:$0xff]
    %v3271 = vld [vmem:[#allocation11 + $0x1158] sm:$0xff]
    %v3272 = vld [vmem:[#allocation11 + $0x1160] sm:$0xff]
    %v3273 = vld [vmem:[#allocation11 + $0x1168] sm:$0xff]
    %v3274 = vld [vmem:[#allocation11 + $0x1170] sm:$0xff]
    %v3275 = vld [vmem:[#allocation11 + $0x1178] sm:$0xff]
    %v3276 = vld [vmem:[#allocation11 + $0x1180] sm:$0xff]
    %v3277 = vld [vmem:[#allocation11 + $0x1188] sm:$0xff]
    %v3278 = vld [vmem:[#allocation11 + $0x1190] sm:$0xff]
    %v3279 = vld [vmem:[#allocation11 + $0x1198] sm:$0xff]
    %v3280 = vld [vmem:[#allocation11 + $0x11a0] sm:$0xff]
    %v3281 = vld [vmem:[#allocation11 + $0x11a8] sm:$0xff]
    %v3282 = vld [vmem:[#allocation11 + $0x11b0] sm:$0xff]
    %v3283 = vld [vmem:[#allocation11 + $0x11b8] sm:$0xff]
    %v3284 = vld [vmem:[#allocation11 + $0x11c0] sm:$0xff]
    %v3285 = vld [vmem:[#allocation11 + $0x11c8] sm:$0xff]
    %v3286 = vld [vmem:[#allocation11 + $0x11d0] sm:$0xff]
    %v3287 = vld [vmem:[#allocation11 + $0x11d8] sm:$0xff]
    %v3288 = vld [vmem:[#allocation11 + $0x11e0] sm:$0xff]
    %v3289 = vld [vmem:[#allocation11 + $0x11e8] sm:$0xff]
    %v3290 = vld [vmem:[#allocation11 + $0x11f0] sm:$0xff]
    %v3291 = vld [vmem:[#allocation11 + $0x11f8] sm:$0xff]
    %v3292 = vld [vmem:[#allocation11 + $0x1200] sm:$0xff]
    %v3293 = vld [vmem:[#allocation11 + $0x1208] sm:$0xff]
    %v3294 = vld [vmem:[#allocation11 + $0x1210] sm:$0xff]
    %v3295 = vld [vmem:[#allocation11 + $0x1218] sm:$0xff]
    %v3296 = vld [vmem:[#allocation11 + $0x1220] sm:$0xff]
    %v3297 = vld [vmem:[#allocation11 + $0x1228] sm:$0xff]
    %v3298 = vld [vmem:[#allocation11 + $0x1230] sm:$0xff]
    %v3299 = vld [vmem:[#allocation11 + $0x1238] sm:$0xff]
    %v3300 = vld [vmem:[#allocation11 + $0x1240] sm:$0xff]
    %v3301 = vld [vmem:[#allocation11 + $0x1248] sm:$0xff]
    %v3302 = vld [vmem:[#allocation11 + $0x1250] sm:$0xff]
    %v3303 = vld [vmem:[#allocation11 + $0x1258] sm:$0xff]
    %v3304 = vld [vmem:[#allocation11 + $0x1260] sm:$0xff]
    %v3305 = vld [vmem:[#allocation11 + $0x1268] sm:$0xff]
    %v3306 = vld [vmem:[#allocation11 + $0x1270] sm:$0xff]
    %v3307 = vld [vmem:[#allocation11 + $0x1278] sm:$0xff]
    %v3308 = vld [vmem:[#allocation11 + $0x1280] sm:$0xff]
    %v3309 = vld [vmem:[#allocation11 + $0x1288] sm:$0xff]
    %v3310 = vld [vmem:[#allocation11 + $0x1290] sm:$0xff]
    %v3311 = vld [vmem:[#allocation11 + $0x1298] sm:$0xff]
    %v3312 = vld [vmem:[#allocation11 + $0x12a0] sm:$0xff]
    %v3313 = vld [vmem:[#allocation11 + $0x12a8] sm:$0xff]
    %v3314 = vld [vmem:[#allocation11 + $0x12b0] sm:$0xff]
    %v3315 = vld [vmem:[#allocation11 + $0x12b8] sm:$0xff]
    %v3316 = vld [vmem:[#allocation11 + $0x12c0] sm:$0xff]
    %v3317 = vld [vmem:[#allocation11 + $0x12c8] sm:$0xff]
    %v3318 = vld [vmem:[#allocation11 + $0x12d0] sm:$0xff]
    %v3319 = vld [vmem:[#allocation11 + $0x12d8] sm:$0xff]
    %v3320 = vld [vmem:[#allocation11 + $0x12e0] sm:$0xff]
    %v3321 = vld [vmem:[#allocation11 + $0x12e8] sm:$0xff]
    %v3322 = vld [vmem:[#allocation11 + $0x12f0] sm:$0xff]
    %v3323 = vld [vmem:[#allocation11 + $0x12f8] sm:$0xff]
    %v3324 = vld [vmem:[#allocation11 + $0x1300] sm:$0xff]
    %v3325 = vld [vmem:[#allocation11 + $0x1308] sm:$0xff]
    %v3326 = vld [vmem:[#allocation11 + $0x1310] sm:$0xff]
    %v3327 = vld [vmem:[#allocation11 + $0x1318] sm:$0xff]
    %v3328 = vld [vmem:[#allocation11 + $0x1320] sm:$0xff]
    %v3329 = vld [vmem:[#allocation11 + $0x1328] sm:$0xff]
    %v3330 = vld [vmem:[#allocation11 + $0x1330] sm:$0xff]
    %v3331 = vld [vmem:[#allocation11 + $0x1338] sm:$0xff]
    %v3332 = vld [vmem:[#allocation11 + $0x1340] sm:$0xff]
    %v3333 = vld [vmem:[#allocation11 + $0x1348] sm:$0xff]
    %v3334 = vld [vmem:[#allocation11 + $0x1350] sm:$0xff]
    %v3335 = vld [vmem:[#allocation11 + $0x1358] sm:$0xff]
    %v3336 = vld [vmem:[#allocation11 + $0x1360] sm:$0xff]
    %v3337 = vld [vmem:[#allocation11 + $0x1368] sm:$0xff]
    %v3338 = vld [vmem:[#allocation11 + $0x1370] sm:$0xff]
    %v3339 = vld [vmem:[#allocation11 + $0x1378] sm:$0xff]
    %v3340 = vld [vmem:[#allocation11 + $0x1380] sm:$0xff]
    %v3341 = vld [vmem:[#allocation11 + $0x1388] sm:$0xff]
    %v3342 = vld [vmem:[#allocation11 + $0x1390] sm:$0xff]
    %v3343 = vld [vmem:[#allocation11 + $0x1398] sm:$0xff]
    %v3344 = vld [vmem:[#allocation11 + $0x13a0] sm:$0xff]
    %v3345 = vld [vmem:[#allocation11 + $0x13a8] sm:$0xff]
    %v3346 = vld [vmem:[#allocation11 + $0x13b0] sm:$0xff]
    %v3347 = vld [vmem:[#allocation11 + $0x13b8] sm:$0xff]
    %v3348 = vld [vmem:[#allocation11 + $0x13c0] sm:$0xff]
    %v3349 = vld [vmem:[#allocation11 + $0x13c8] sm:$0xff]
    %v3350 = vld [vmem:[#allocation11 + $0x13d0] sm:$0xff]
    %v3351 = vld [vmem:[#allocation11 + $0x13d8] sm:$0xff]
    %v3352 = vld [vmem:[#allocation11 + $0x13e0] sm:$0xff]
    %v3353 = vld [vmem:[#allocation11 + $0x13e8] sm:$0xff]
    %v3354 = vld [vmem:[#allocation11 + $0x13f0] sm:$0xff]
    %v3355 = vld [vmem:[#allocation11 + $0x13f8] sm:$0xff]
    %v3356 = vld [vmem:[#allocation11 + $0x1400] sm:$0xff]
    %v3357 = vld [vmem:[#allocation11 + $0x1408] sm:$0xff]
    %v3358 = vld [vmem:[#allocation11 + $0x1410] sm:$0xff]
    %v3359 = vld [vmem:[#allocation11 + $0x1418] sm:$0xff]
    %v3360 = vld [vmem:[#allocation11 + $0x1420] sm:$0xff]
    %v3361 = vld [vmem:[#allocation11 + $0x1428] sm:$0xff]
    %v3362 = vld [vmem:[#allocation11 + $0x1430] sm:$0xff]
    %v3363 = vld [vmem:[#allocation11 + $0x1438] sm:$0xff]
    %v3364 = vld [vmem:[#allocation11 + $0x1440] sm:$0xff]
    %v3365 = vld [vmem:[#allocation11 + $0x1448] sm:$0xff]
    %v3366 = vld [vmem:[#allocation11 + $0x1450] sm:$0xff]
    %v3367 = vld [vmem:[#allocation11 + $0x1458] sm:$0xff]
    %v3368 = vld [vmem:[#allocation11 + $0x1460] sm:$0xff]
    %v3369 = vld [vmem:[#allocation11 + $0x1468] sm:$0xff]
    %v3370 = vld [vmem:[#allocation11 + $0x1470] sm:$0xff]
    %v3371 = vld [vmem:[#allocation11 + $0x1478] sm:$0xff]
    %v3372 = vld [vmem:[#allocation11 + $0x1480] sm:$0xff]
    %v3373 = vld [vmem:[#allocation11 + $0x1488] sm:$0xff]
    %v3374 = vld [vmem:[#allocation11 + $0x1490] sm:$0xff]
    %v3375 = vld [vmem:[#allocation11 + $0x1498] sm:$0xff]
    %v3376 = vld [vmem:[#allocation11 + $0x14a0] sm:$0xff]
    %v3377 = vld [vmem:[#allocation11 + $0x14a8] sm:$0xff]
    %v3378 = vld [vmem:[#allocation11 + $0x14b0] sm:$0xff]
    %v3379 = vld [vmem:[#allocation11 + $0x14b8] sm:$0xff]
    %v3380 = vld [vmem:[#allocation11 + $0x14c0] sm:$0xff]
    %v3381 = vld [vmem:[#allocation11 + $0x14c8] sm:$0xff]
    %v3382 = vld [vmem:[#allocation11 + $0x14d0] sm:$0xff]
    %v3383 = vld [vmem:[#allocation11 + $0x14d8] sm:$0xff]
    %v3384 = vld [vmem:[#allocation11 + $0x14e0] sm:$0xff]
    %v3385 = vld [vmem:[#allocation11 + $0x14e8] sm:$0xff]
    %v3386 = vld [vmem:[#allocation11 + $0x14f0] sm:$0xff]
    %v3387 = vld [vmem:[#allocation11 + $0x14f8] sm:$0xff]
    %v3388 = vld [vmem:[#allocation11 + $0x1500] sm:$0xff]
    %v3389 = vld [vmem:[#allocation11 + $0x1508] sm:$0xff]
    %v3390 = vld [vmem:[#allocation11 + $0x1510] sm:$0xff]
    %v3391 = vld [vmem:[#allocation11 + $0x1518] sm:$0xff]
    %v3392 = vld [vmem:[#allocation11 + $0x1520] sm:$0xff]
    %v3393 = vld [vmem:[#allocation11 + $0x1528] sm:$0xff]
    %v3394 = vld [vmem:[#allocation11 + $0x1530] sm:$0xff]
    %v3395 = vld [vmem:[#allocation11 + $0x1538] sm:$0xff]
    %v3396 = vld [vmem:[#allocation11 + $0x1540] sm:$0xff]
    %v3397 = vld [vmem:[#allocation11 + $0x1548] sm:$0xff]
    %v3398 = vld [vmem:[#allocation11 + $0x1550] sm:$0xff]
    %v3399 = vld [vmem:[#allocation11 + $0x1558] sm:$0xff]
    %v3400 = vld [vmem:[#allocation11 + $0x1560] sm:$0xff]
    %v3401 = vld [vmem:[#allocation11 + $0x1568] sm:$0xff]
    %v3402 = vld [vmem:[#allocation11 + $0x1570] sm:$0xff]
    %v3403 = vld [vmem:[#allocation11 + $0x1578] sm:$0xff]
    %v3404 = vld [vmem:[#allocation11 + $0x1580] sm:$0xff]
    %v3405 = vld [vmem:[#allocation11 + $0x1588] sm:$0xff]
    %v3406 = vld [vmem:[#allocation11 + $0x1590] sm:$0xff]
    %v3407 = vld [vmem:[#allocation11 + $0x1598] sm:$0xff]
    %v3408 = vld [vmem:[#allocation11 + $0x15a0] sm:$0xff]
    %v3409 = vld [vmem:[#allocation11 + $0x15a8] sm:$0xff]
    %v3410 = vld [vmem:[#allocation11 + $0x15b0] sm:$0xff]
    %v3411 = vld [vmem:[#allocation11 + $0x15b8] sm:$0xff]
    %v3412 = vld [vmem:[#allocation11 + $0x15c0] sm:$0xff]
    %v3413 = vld [vmem:[#allocation11 + $0x15c8] sm:$0xff]
    %v3414 = vld [vmem:[#allocation11 + $0x15d0] sm:$0xff]
    %v3415 = vld [vmem:[#allocation11 + $0x15d8] sm:$0xff]
    %v3416 = vld [vmem:[#allocation11 + $0x15e0] sm:$0xff]
    %v3417 = vld [vmem:[#allocation11 + $0x15e8] sm:$0xff]
    %v3418 = vld [vmem:[#allocation11 + $0x15f0] sm:$0xff]
    %v3419 = vld [vmem:[#allocation11 + $0x15f8] sm:$0xff]
    %v3420 = vld [vmem:[#allocation11 + $0x1600] sm:$0xff]
    %v3421 = vld [vmem:[#allocation11 + $0x1608] sm:$0xff]
    %v3422 = vld [vmem:[#allocation11 + $0x1610] sm:$0xff]
    %v3423 = vld [vmem:[#allocation11 + $0x1618] sm:$0xff]
    %v3424 = vld [vmem:[#allocation11 + $0x1620] sm:$0xff]
    %v3425 = vld [vmem:[#allocation11 + $0x1628] sm:$0xff]
    %v3426 = vld [vmem:[#allocation11 + $0x1630] sm:$0xff]
    %v3427 = vld [vmem:[#allocation11 + $0x1638] sm:$0xff]
    %v3428 = vld [vmem:[#allocation11 + $0x1640] sm:$0xff]
    %v3429 = vld [vmem:[#allocation11 + $0x1648] sm:$0xff]
    %v3430 = vld [vmem:[#allocation11 + $0x1650] sm:$0xff]
    %v3431 = vld [vmem:[#allocation11 + $0x1658] sm:$0xff]
    %v3432 = vld [vmem:[#allocation11 + $0x1660] sm:$0xff]
    %v3433 = vld [vmem:[#allocation11 + $0x1668] sm:$0xff]
    %v3434 = vld [vmem:[#allocation11 + $0x1670] sm:$0xff]
    %v3435 = vld [vmem:[#allocation11 + $0x1678] sm:$0xff]
    %v3436 = vld [vmem:[#allocation11 + $0x1680] sm:$0xff]
    %v3437 = vld [vmem:[#allocation11 + $0x1688] sm:$0xff]
    %v3438 = vld [vmem:[#allocation11 + $0x1690] sm:$0xff]
    %v3439 = vld [vmem:[#allocation11 + $0x1698] sm:$0xff]
    %v3440 = vld [vmem:[#allocation11 + $0x16a0] sm:$0xff]
    %v3441 = vld [vmem:[#allocation11 + $0x16a8] sm:$0xff]
    %v3442 = vld [vmem:[#allocation11 + $0x16b0] sm:$0xff]
    %v3443 = vld [vmem:[#allocation11 + $0x16b8] sm:$0xff]
    %v3444 = vld [vmem:[#allocation11 + $0x16c0] sm:$0xff]
    %v3445 = vld [vmem:[#allocation11 + $0x16c8] sm:$0xff]
    %v3446 = vld [vmem:[#allocation11 + $0x16d0] sm:$0xff]
    %v3447 = vld [vmem:[#allocation11 + $0x16d8] sm:$0xff]
    %v3448 = vld [vmem:[#allocation11 + $0x16e0] sm:$0xff]
    %v3449 = vld [vmem:[#allocation11 + $0x16e8] sm:$0xff]
    %v3450 = vld [vmem:[#allocation11 + $0x16f0] sm:$0xff]
    %v3451 = vld [vmem:[#allocation11 + $0x16f8] sm:$0xff]
    %v3452 = vld [vmem:[#allocation11 + $0x1700] sm:$0xff]
    %v3453 = vld [vmem:[#allocation11 + $0x1708] sm:$0xff]
    %v3454 = vld [vmem:[#allocation11 + $0x1710] sm:$0xff]
    %v3455 = vld [vmem:[#allocation11 + $0x1718] sm:$0xff]
    %v3456 = vld [vmem:[#allocation11 + $0x1720] sm:$0xff]
    %v3457 = vld [vmem:[#allocation11 + $0x1728] sm:$0xff]
    %v3458 = vld [vmem:[#allocation11 + $0x1730] sm:$0xff]
    %v3459 = vld [vmem:[#allocation11 + $0x1738] sm:$0xff]
    %v3460 = vld [vmem:[#allocation11 + $0x1740] sm:$0xff]
    %v3461 = vld [vmem:[#allocation11 + $0x1748] sm:$0xff]
    %v3462 = vld [vmem:[#allocation11 + $0x1750] sm:$0xff]
    %v3463 = vld [vmem:[#allocation11 + $0x1758] sm:$0xff]
    %v3464 = vld [vmem:[#allocation11 + $0x1760] sm:$0xff]
    %v3465 = vld [vmem:[#allocation11 + $0x1768] sm:$0xff]
    %v3466 = vld [vmem:[#allocation11 + $0x1770] sm:$0xff]
    %v3467 = vld [vmem:[#allocation11 + $0x1778] sm:$0xff]
    %v3468 = vld [vmem:[#allocation11 + $0x1780] sm:$0xff]
    %v3469 = vld [vmem:[#allocation11 + $0x1788] sm:$0xff]
    %v3470 = vld [vmem:[#allocation11 + $0x1790] sm:$0xff]
    %v3471 = vld [vmem:[#allocation11 + $0x1798] sm:$0xff]
    %v3472 = vld [vmem:[#allocation11 + $0x17a0] sm:$0xff]
    %v3473 = vld [vmem:[#allocation11 + $0x17a8] sm:$0xff]
    %v3474 = vld [vmem:[#allocation11 + $0x17b0] sm:$0xff]
    %v3475 = vld [vmem:[#allocation11 + $0x17b8] sm:$0xff]
    %v3476 = vld [vmem:[#allocation11 + $0x17c0] sm:$0xff]
    %v3477 = vld [vmem:[#allocation11 + $0x17c8] sm:$0xff]
    %v3478 = vld [vmem:[#allocation11 + $0x17d0] sm:$0xff]
    %v3479 = vld [vmem:[#allocation11 + $0x17d8] sm:$0xff]
    %v3480 = vld [vmem:[#allocation11 + $0x17e0] sm:$0xff]
    %v3481 = vld [vmem:[#allocation11 + $0x17e8] sm:$0xff]
    %v3482 = vld [vmem:[#allocation11 + $0x17f0] sm:$0xff]
    %v3483 = vld [vmem:[#allocation11 + $0x17f8] sm:$0xff]
    %v3484 = vld [vmem:[#allocation11 + $0x1800] sm:$0xff]
    %v3485 = vld [vmem:[#allocation11 + $0x1808] sm:$0xff]
    %v3486 = vld [vmem:[#allocation11 + $0x1810] sm:$0xff]
    %v3487 = vld [vmem:[#allocation11 + $0x1818] sm:$0xff]
    %v3488 = vld [vmem:[#allocation11 + $0x1820] sm:$0xff]
    %v3489 = vld [vmem:[#allocation11 + $0x1828] sm:$0xff]
    %v3490 = vld [vmem:[#allocation11 + $0x1830] sm:$0xff]
    %v3491 = vld [vmem:[#allocation11 + $0x1838] sm:$0xff]
    %v3492 = vld [vmem:[#allocation11 + $0x1840] sm:$0xff]
    %v3493 = vld [vmem:[#allocation11 + $0x1848] sm:$0xff]
    %v3494 = vld [vmem:[#allocation11 + $0x1850] sm:$0xff]
    %v3495 = vld [vmem:[#allocation11 + $0x1858] sm:$0xff]
    %v3496 = vld [vmem:[#allocation11 + $0x1860] sm:$0xff]
    %v3497 = vld [vmem:[#allocation11 + $0x1868] sm:$0xff]
    %v3498 = vld [vmem:[#allocation11 + $0x1870] sm:$0xff]
    %v3499 = vld [vmem:[#allocation11 + $0x1878] sm:$0xff]
    %v3500 = vld [vmem:[#allocation11 + $0x1880] sm:$0xff]
    %v3501 = vld [vmem:[#allocation11 + $0x1888] sm:$0xff]
    %v3502 = vld [vmem:[#allocation11 + $0x1890] sm:$0xff]
    %v3503 = vld [vmem:[#allocation11 + $0x1898] sm:$0xff]
    %v3504 = vld [vmem:[#allocation11 + $0x18a0] sm:$0xff]
    %v3505 = vld [vmem:[#allocation11 + $0x18a8] sm:$0xff]
    %v3506 = vld [vmem:[#allocation11 + $0x18b0] sm:$0xff]
    %v3507 = vld [vmem:[#allocation11 + $0x18b8] sm:$0xff]
    %v3508 = vld [vmem:[#allocation11 + $0x18c0] sm:$0xff]
    %v3509 = vld [vmem:[#allocation11 + $0x18c8] sm:$0xff]
    %v3510 = vld [vmem:[#allocation11 + $0x18d0] sm:$0xff]
    %v3511 = vld [vmem:[#allocation11 + $0x18d8] sm:$0xff]
    %v3512 = vld [vmem:[#allocation11 + $0x18e0] sm:$0xff]
    %v3513 = vld [vmem:[#allocation11 + $0x18e8] sm:$0xff]
    %v3514 = vld [vmem:[#allocation11 + $0x18f0] sm:$0xff]
    %v3515 = vld [vmem:[#allocation11 + $0x18f8] sm:$0xff]
    %v3516 = vld [vmem:[#allocation11 + $0x1900] sm:$0xff]
    %v3517 = vld [vmem:[#allocation11 + $0x1908] sm:$0xff]
    %v3518 = vld [vmem:[#allocation11 + $0x1910] sm:$0xff]
    %v3519 = vld [vmem:[#allocation11 + $0x1918] sm:$0xff]
    %v3520 = vld [vmem:[#allocation11 + $0x1920] sm:$0xff]
    %v3521 = vld [vmem:[#allocation11 + $0x1928] sm:$0xff]
    %v3522 = vld [vmem:[#allocation11 + $0x1930] sm:$0xff]
    %v3523 = vld [vmem:[#allocation11 + $0x1938] sm:$0xff]
    %v3524 = vld [vmem:[#allocation11 + $0x1940] sm:$0xff]
    %v3525 = vld [vmem:[#allocation11 + $0x1948] sm:$0xff]
    %v3526 = vld [vmem:[#allocation11 + $0x1950] sm:$0xff]
    %v3527 = vld [vmem:[#allocation11 + $0x1958] sm:$0xff]
    %v3528 = vld [vmem:[#allocation11 + $0x1960] sm:$0xff]
    %v3529 = vld [vmem:[#allocation11 + $0x1968] sm:$0xff]
    %v3530 = vld [vmem:[#allocation11 + $0x1970] sm:$0xff]
    %v3531 = vld [vmem:[#allocation11 + $0x1978] sm:$0xff]
    %v3532 = vld [vmem:[#allocation11 + $0x1980] sm:$0xff]
    %v3533 = vld [vmem:[#allocation11 + $0x1988] sm:$0xff]
    %v3534 = vld [vmem:[#allocation11 + $0x1990] sm:$0xff]
    %v3535 = vld [vmem:[#allocation11 + $0x1998] sm:$0xff]
    %v3536 = vld [vmem:[#allocation11 + $0x19a0] sm:$0xff]
    %v3537 = vld [vmem:[#allocation11 + $0x19a8] sm:$0xff]
    %v3538 = vld [vmem:[#allocation11 + $0x19b0] sm:$0xff]
    %v3539 = vld [vmem:[#allocation11 + $0x19b8] sm:$0xff]
    %v3540 = vld [vmem:[#allocation11 + $0x19c0] sm:$0xff]
    %v3541 = vld [vmem:[#allocation11 + $0x19c8] sm:$0xff]
    %v3542 = vld [vmem:[#allocation11 + $0x19d0] sm:$0xff]
    %v3543 = vld [vmem:[#allocation11 + $0x19d8] sm:$0xff]
    %v3544 = vld [vmem:[#allocation11 + $0x19e0] sm:$0xff]
    %v3545 = vld [vmem:[#allocation11 + $0x19e8] sm:$0xff]
    %v3546 = vld [vmem:[#allocation11 + $0x19f0] sm:$0xff]
    %v3547 = vld [vmem:[#allocation11 + $0x19f8] sm:$0xff]
    %v3548 = vld [vmem:[#allocation11 + $0x1a00] sm:$0xff]
    %v3549 = vld [vmem:[#allocation11 + $0x1a08] sm:$0xff]
    %v3550 = vld [vmem:[#allocation11 + $0x1a10] sm:$0xff]
    %v3551 = vld [vmem:[#allocation11 + $0x1a18] sm:$0xff]
    %v3552 = vld [vmem:[#allocation11 + $0x1a20] sm:$0xff]
    %v3553 = vld [vmem:[#allocation11 + $0x1a28] sm:$0xff]
    %v3554 = vld [vmem:[#allocation11 + $0x1a30] sm:$0xff]
    %v3555 = vld [vmem:[#allocation11 + $0x1a38] sm:$0xff]
    %v3556 = vld [vmem:[#allocation11 + $0x1a40] sm:$0xff]
    %v3557 = vld [vmem:[#allocation11 + $0x1a48] sm:$0xff]
    %v3558 = vld [vmem:[#allocation11 + $0x1a50] sm:$0xff]
    %v3559 = vld [vmem:[#allocation11 + $0x1a58] sm:$0xff]
    %v3560 = vld [vmem:[#allocation11 + $0x1a60] sm:$0xff]
    %v3561 = vld [vmem:[#allocation11 + $0x1a68] sm:$0xff]
    %v3562 = vld [vmem:[#allocation11 + $0x1a70] sm:$0xff]
    %v3563 = vld [vmem:[#allocation11 + $0x1a78] sm:$0xff]
    %v3564 = vld [vmem:[#allocation11 + $0x1a80] sm:$0xff]
    %v3565 = vld [vmem:[#allocation11 + $0x1a88] sm:$0xff]
    %v3566 = vld [vmem:[#allocation11 + $0x1a90] sm:$0xff]
    %v3567 = vld [vmem:[#allocation11 + $0x1a98] sm:$0xff]
    %v3568 = vld [vmem:[#allocation11 + $0x1aa0] sm:$0xff]
    %v3569 = vld [vmem:[#allocation11 + $0x1aa8] sm:$0xff]
    %v3570 = vld [vmem:[#allocation11 + $0x1ab0] sm:$0xff]
    %v3571 = vld [vmem:[#allocation11 + $0x1ab8] sm:$0xff]
    %v3572 = vld [vmem:[#allocation11 + $0x1ac0] sm:$0xff]
    %v3573 = vld [vmem:[#allocation11 + $0x1ac8] sm:$0xff]
    %v3574 = vld [vmem:[#allocation11 + $0x1ad0] sm:$0xff]
    %v3575 = vld [vmem:[#allocation11 + $0x1ad8] sm:$0xff]
    %v3576 = vld [vmem:[#allocation11 + $0x1ae0] sm:$0xff]
    %v3577 = vld [vmem:[#allocation11 + $0x1ae8] sm:$0xff]
    %v3578 = vld [vmem:[#allocation11 + $0x1af0] sm:$0xff]
    %v3579 = vld [vmem:[#allocation11 + $0x1af8] sm:$0xff]
    %v3580 = vld [vmem:[#allocation11 + $0x1b00] sm:$0xff]
    %v3581 = vld [vmem:[#allocation11 + $0x1b08] sm:$0xff]
    %v3582 = vld [vmem:[#allocation11 + $0x1b10] sm:$0xff]
    %v3583 = vld [vmem:[#allocation11 + $0x1b18] sm:$0xff]
    %v3584 = vld [vmem:[#allocation11 + $0x1b20] sm:$0xff]
    %v3585 = vld [vmem:[#allocation11 + $0x1b28] sm:$0xff]
    %v3586 = vld [vmem:[#allocation11 + $0x1b30] sm:$0xff]
    %v3587 = vld [vmem:[#allocation11 + $0x1b38] sm:$0xff]
    %v3588 = vld [vmem:[#allocation11 + $0x1b40] sm:$0xff]
    %v3589 = vld [vmem:[#allocation11 + $0x1b48] sm:$0xff]
    %v3590 = vld [vmem:[#allocation11 + $0x1b50] sm:$0xff]
    %v3591 = vld [vmem:[#allocation11 + $0x1b58] sm:$0xff]
    %v3592 = vld [vmem:[#allocation11 + $0x1b60] sm:$0xff]
    %v3593 = vld [vmem:[#allocation11 + $0x1b68] sm:$0xff]
    %v3594 = vld [vmem:[#allocation11 + $0x1b70] sm:$0xff]
    %v3595 = vld [vmem:[#allocation11 + $0x1b78] sm:$0xff]
    %v3596 = vld [vmem:[#allocation11 + $0x1b80] sm:$0xff]
    %v3597 = vld [vmem:[#allocation11 + $0x1b88] sm:$0xff]
    %v3598 = vld [vmem:[#allocation11 + $0x1b90] sm:$0xff]
    %v3599 = vld [vmem:[#allocation11 + $0x1b98] sm:$0xff]
    %v3600 = vld [vmem:[#allocation11 + $0x1ba0] sm:$0xff]
    %v3601 = vld [vmem:[#allocation11 + $0x1ba8] sm:$0xff]
    %v3602 = vld [vmem:[#allocation11 + $0x1bb0] sm:$0xff]
    %v3603 = vld [vmem:[#allocation11 + $0x1bb8] sm:$0xff]
    %v3604 = vld [vmem:[#allocation11 + $0x1bc0] sm:$0xff]
    %v3605 = vld [vmem:[#allocation11 + $0x1bc8] sm:$0xff]
    %v3606 = vld [vmem:[#allocation11 + $0x1bd0] sm:$0xff]
    %v3607 = vld [vmem:[#allocation11 + $0x1bd8] sm:$0xff]
    %v3608 = vld [vmem:[#allocation11 + $0x1be0] sm:$0xff]
    %v3609 = vld [vmem:[#allocation11 + $0x1be8] sm:$0xff]
    %v3610 = vld [vmem:[#allocation11 + $0x1bf0] sm:$0xff]
    %v3611 = vld [vmem:[#allocation11 + $0x1bf8] sm:$0xff]
    %v3612 = vld [vmem:[#allocation11 + $0x1c00] sm:$0xff]
    %v3613 = vld [vmem:[#allocation11 + $0x1c08] sm:$0xff]
    %v3614 = vld [vmem:[#allocation11 + $0x1c10] sm:$0xff]
    %v3615 = vld [vmem:[#allocation11 + $0x1c18] sm:$0xff]
    %v3616 = vld [vmem:[#allocation11 + $0x1c20] sm:$0xff]
    %v3617 = vld [vmem:[#allocation11 + $0x1c28] sm:$0xff]
    %v3618 = vld [vmem:[#allocation11 + $0x1c30] sm:$0xff]
    %v3619 = vld [vmem:[#allocation11 + $0x1c38] sm:$0xff]
    %v3620 = vld [vmem:[#allocation11 + $0x1c40] sm:$0xff]
    %v3621 = vld [vmem:[#allocation11 + $0x1c48] sm:$0xff]
    %v3622 = vld [vmem:[#allocation11 + $0x1c50] sm:$0xff]
    %v3623 = vld [vmem:[#allocation11 + $0x1c58] sm:$0xff]
    %v3624 = vld [vmem:[#allocation11 + $0x1c60] sm:$0xff]
    %v3625 = vld [vmem:[#allocation11 + $0x1c68] sm:$0xff]
    %v3626 = vld [vmem:[#allocation11 + $0x1c70] sm:$0xff]
    %v3627 = vld [vmem:[#allocation11 + $0x1c78] sm:$0xff]
    %v3628 = vld [vmem:[#allocation11 + $0x1c80] sm:$0xff]
    %v3629 = vld [vmem:[#allocation11 + $0x1c88] sm:$0xff]
    %v3630 = vld [vmem:[#allocation11 + $0x1c90] sm:$0xff]
    %v3631 = vld [vmem:[#allocation11 + $0x1c98] sm:$0xff]
    %v3632 = vld [vmem:[#allocation11 + $0x1ca0] sm:$0xff]
    %v3633 = vld [vmem:[#allocation11 + $0x1ca8] sm:$0xff]
    %v3634 = vld [vmem:[#allocation11 + $0x1cb0] sm:$0xff]
    %v3635 = vld [vmem:[#allocation11 + $0x1cb8] sm:$0xff]
    %v3636 = vld [vmem:[#allocation11 + $0x1cc0] sm:$0xff]
    %v3637 = vld [vmem:[#allocation11 + $0x1cc8] sm:$0xff]
    %v3638 = vld [vmem:[#allocation11 + $0x1cd0] sm:$0xff]
    %v3639 = vld [vmem:[#allocation11 + $0x1cd8] sm:$0xff]
    %v3640 = vld [vmem:[#allocation11 + $0x1ce0] sm:$0xff]
    %v3641 = vld [vmem:[#allocation11 + $0x1ce8] sm:$0xff]
    %v3642 = vld [vmem:[#allocation11 + $0x1cf0] sm:$0xff]
    %v3643 = vld [vmem:[#allocation11 + $0x1cf8] sm:$0xff]
    %v3644 = vld [vmem:[#allocation11 + $0x1d00] sm:$0xff]
    %v3645 = vld [vmem:[#allocation11 + $0x1d08] sm:$0xff]
    %v3646 = vld [vmem:[#allocation11 + $0x1d10] sm:$0xff]
    %v3647 = vld [vmem:[#allocation11 + $0x1d18] sm:$0xff]
    %v3648 = vld [vmem:[#allocation11 + $0x1d20] sm:$0xff]
    %v3649 = vld [vmem:[#allocation11 + $0x1d28] sm:$0xff]
    %v3650 = vld [vmem:[#allocation11 + $0x1d30] sm:$0xff]
    %v3651 = vld [vmem:[#allocation11 + $0x1d38] sm:$0xff]
    %v3652 = vld [vmem:[#allocation11 + $0x1d40] sm:$0xff]
    %v3653 = vld [vmem:[#allocation11 + $0x1d48] sm:$0xff]
    %v3654 = vld [vmem:[#allocation11 + $0x1d50] sm:$0xff]
    %v3655 = vld [vmem:[#allocation11 + $0x1d58] sm:$0xff]
    %v3656 = vld [vmem:[#allocation11 + $0x1d60] sm:$0xff]
    %v3657 = vld [vmem:[#allocation11 + $0x1d68] sm:$0xff]
    %v3658 = vld [vmem:[#allocation11 + $0x1d70] sm:$0xff]
    %v3659 = vld [vmem:[#allocation11 + $0x1d78] sm:$0xff]
    %v3660 = vld [vmem:[#allocation11 + $0x1d80] sm:$0xff]
    %v3661 = vld [vmem:[#allocation11 + $0x1d88] sm:$0xff]
    %v3662 = vld [vmem:[#allocation11 + $0x1d90] sm:$0xff]
    %v3663 = vld [vmem:[#allocation11 + $0x1d98] sm:$0xff]
    %v3664 = vld [vmem:[#allocation11 + $0x1da0] sm:$0xff]
    %v3665 = vld [vmem:[#allocation11 + $0x1da8] sm:$0xff]
    %v3666 = vld [vmem:[#allocation11 + $0x1db0] sm:$0xff]
    %v3667 = vld [vmem:[#allocation11 + $0x1db8] sm:$0xff]
    %v3668 = vld [vmem:[#allocation11 + $0x1dc0] sm:$0xff]
    %v3669 = vld [vmem:[#allocation11 + $0x1dc8] sm:$0xff]
    %v3670 = vld [vmem:[#allocation11 + $0x1dd0] sm:$0xff]
    %v3671 = vld [vmem:[#allocation11 + $0x1dd8] sm:$0xff]
    %v3672 = vld [vmem:[#allocation11 + $0x1de0] sm:$0xff]
    %v3673 = vld [vmem:[#allocation11 + $0x1de8] sm:$0xff]
    %v3674 = vld [vmem:[#allocation11 + $0x1df0] sm:$0xff]
    %v3675 = vld [vmem:[#allocation11 + $0x1df8] sm:$0xff]
    %v3676 = vld [vmem:[#allocation11 + $0x1e00] sm:$0xff]
    %v3677 = vld [vmem:[#allocation11 + $0x1e08] sm:$0xff]
    %v3678 = vld [vmem:[#allocation11 + $0x1e10] sm:$0xff]
    %v3679 = vld [vmem:[#allocation11 + $0x1e18] sm:$0xff]
    %v3680 = vld [vmem:[#allocation11 + $0x1e20] sm:$0xff]
    %v3681 = vld [vmem:[#allocation11 + $0x1e28] sm:$0xff]
    %v3682 = vld [vmem:[#allocation11 + $0x1e30] sm:$0xff]
    %v3683 = vld [vmem:[#allocation11 + $0x1e38] sm:$0xff]
    %v3684 = vld [vmem:[#allocation11 + $0x1e40] sm:$0xff]
    %v3685 = vld [vmem:[#allocation11 + $0x1e48] sm:$0xff]
    %v3686 = vld [vmem:[#allocation11 + $0x1e50] sm:$0xff]
    %v3687 = vld [vmem:[#allocation11 + $0x1e58] sm:$0xff]
    %v3688 = vld [vmem:[#allocation11 + $0x1e60] sm:$0xff]
    %v3689 = vld [vmem:[#allocation11 + $0x1e68] sm:$0xff]
    %v3690 = vld [vmem:[#allocation11 + $0x1e70] sm:$0xff]
    %v3691 = vld [vmem:[#allocation11 + $0x1e78] sm:$0xff]
    %v3692 = vld [vmem:[#allocation11 + $0x1e80] sm:$0xff]
    %v3693 = vld [vmem:[#allocation11 + $0x1e88] sm:$0xff]
    %v3694 = vld [vmem:[#allocation11 + $0x1e90] sm:$0xff]
    %v3695 = vld [vmem:[#allocation11 + $0x1e98] sm:$0xff]
    %v3696 = vld [vmem:[#allocation11 + $0x1ea0] sm:$0xff]
    %v3697 = vld [vmem:[#allocation11 + $0x1ea8] sm:$0xff]
    %v3698 = vld [vmem:[#allocation11 + $0x1eb0] sm:$0xff]
    %v3699 = vld [vmem:[#allocation11 + $0x1eb8] sm:$0xff]
    %v3700 = vld [vmem:[#allocation11 + $0x1ec0] sm:$0xff]
    %v3701 = vld [vmem:[#allocation11 + $0x1ec8] sm:$0xff]
    %v3702 = vld [vmem:[#allocation11 + $0x1ed0] sm:$0xff]
    %v3703 = vld [vmem:[#allocation11 + $0x1ed8] sm:$0xff]
    %v3704 = vld [vmem:[#allocation11 + $0x1ee0] sm:$0xff]
    %v3705 = vld [vmem:[#allocation11 + $0x1ee8] sm:$0xff]
    %v3706 = vld [vmem:[#allocation11 + $0x1ef0] sm:$0xff]
    %v3707 = vld [vmem:[#allocation11 + $0x1ef8] sm:$0xff]
    %v3708 = vld [vmem:[#allocation11 + $0x1f00] sm:$0xff]
    %v3709 = vld [vmem:[#allocation11 + $0x1f08] sm:$0xff]
    %v3710 = vld [vmem:[#allocation11 + $0x1f10] sm:$0xff]
    %v3711 = vld [vmem:[#allocation11 + $0x1f18] sm:$0xff]
    %v3712 = vld [vmem:[#allocation11 + $0x1f20] sm:$0xff]
    %v3713 = vld [vmem:[#allocation11 + $0x1f28] sm:$0xff]
    %v3714 = vld [vmem:[#allocation11 + $0x1f30] sm:$0xff]
    %v3715 = vld [vmem:[#allocation11 + $0x1f38] sm:$0xff]
    %v3716 = vld [vmem:[#allocation11 + $0x1f40] sm:$0xff]
    %v3717 = vld [vmem:[#allocation11 + $0x1f48] sm:$0xff]
    %v3718 = vld [vmem:[#allocation11 + $0x1f50] sm:$0xff]
    %v3719 = vld [vmem:[#allocation11 + $0x1f58] sm:$0xff]
    %v3720 = vld [vmem:[#allocation11 + $0x1f60] sm:$0xff]
    %v3721 = vld [vmem:[#allocation11 + $0x1f68] sm:$0xff]
    %v3722 = vld [vmem:[#allocation11 + $0x1f70] sm:$0xff]
    %v3723 = vld [vmem:[#allocation11 + $0x1f78] sm:$0xff]
    %v3724 = vld [vmem:[#allocation11 + $0x1f80] sm:$0xff]
    %v3725 = vld [vmem:[#allocation11 + $0x1f88] sm:$0xff]
    %v3726 = vld [vmem:[#allocation11 + $0x1f90] sm:$0xff]
    %v3727 = vld [vmem:[#allocation11 + $0x1f98] sm:$0xff]
    %v3728 = vld [vmem:[#allocation11 + $0x1fa0] sm:$0xff]
    %v3729 = vld [vmem:[#allocation11 + $0x1fa8] sm:$0xff]
    %v3730 = vld [vmem:[#allocation11 + $0x1fb0] sm:$0xff]
    %v3731 = vld [vmem:[#allocation11 + $0x1fb8] sm:$0xff]
    %v3732 = vld [vmem:[#allocation11 + $0x1fc0] sm:$0xff]
    %v3733 = vld [vmem:[#allocation11 + $0x1fc8] sm:$0xff]
    %v3734 = vld [vmem:[#allocation11 + $0x1fd0] sm:$0xff]
    %v3735 = vld [vmem:[#allocation11 + $0x1fd8] sm:$0xff]
    %v3736 = vld [vmem:[#allocation11 + $0x1fe0] sm:$0xff]
    %v3737 = vld [vmem:[#allocation11 + $0x1fe8] sm:$0xff]
    %v3738 = vld [vmem:[#allocation11 + $0x1ff0] sm:$0xff]
    %v3739 = vld [vmem:[#allocation11 + $0x1ff8] sm:$0xff]
    %v3740 = vld [vmem:[#allocation13] sm:$0xff]
    %v3742 = vperm.slane %v3740, 0
    %v3743 = vperm.slane %v3740, 1
    %v3744 = vperm.slane %v3740, 2
    %v3745 = vperm.slane %v3740, 3
    %v3746 = vperm.slane %v3740, 4
    %v3747 = vperm.slane %v3740, 5
    %v3748 = vperm.slane %v3740, 6
    %v3749 = vperm.slane %v3740, 7
    %3758 = vmatpush.msra.mxu0 %v2836
    %3759 = vmatpush.msra.mxu0 %v2828
    %3760 = vmatpush.msra.mxu0 %v2820
    %3761 = vmatpush.msra.mxu0 %v2812
    %3762 = vmatpush.msra.mxu0 %v2804
    %3763 = vmatpush.msra.mxu0 %v2796
    %3764 = vmatpush.msra.mxu0 %v2788
    %3765 = vmatpush.msra.mxu0 %v2780
    %3766 = vmatpush.msra.mxu0 %v2772
    %3767 = vmatpush.msra.mxu0 %v2764
    %3768 = vmatpush.msra.mxu0 %v2756
    %3769 = vmatpush.msra.mxu0 %v2748
    %3770 = vmatpush.msra.mxu0 %v2740
    %3771 = vmatpush.msra.mxu0 %v2732
    %3772 = vmatpush.msra.mxu0 %v2724
    %3773 = vmatpush.msra.mxu0 %v2716
    %3774 = vmatmul.f32.gmra.mxu0 %v2708
    %v3775 = vpop.f32.mrf.mxu0
    %v3776 = vadd.f32 %v3742, %v3775
    %3777 = vdwg.mxu0
    %3778 = vmatpush.msra.mxu0 %v2964
    %3779 = vmatpush.msra.mxu0 %v2956
    %3780 = vmatpush.msra.mxu0 %v2948
    %3781 = vmatpush.msra.mxu0 %v2940
    %3782 = vmatpush.msra.mxu0 %v2932
    %3783 = vmatpush.msra.mxu0 %v2924
    %3784 = vmatpush.msra.mxu0 %v2916
    %3785 = vmatpush.msra.mxu0 %v2908
    %3786 = vmatpush.msra.mxu0 %v2900
    %3787 = vmatpush.msra.mxu0 %v2892
    %3788 = vmatpush.msra.mxu0 %v2884
    %3789 = vmatpush.msra.mxu0 %v2876
    %3790 = vmatpush.msra.mxu0 %v2868
    %3791 = vmatpush.msra.mxu0 %v2860
    %3792 = vmatpush.msra.mxu0 %v2852
    %3793 = vmatpush.msra.mxu0 %v2844
    %3794 = vmatmul.f32.gmra.mxu0 %v2709
    %v3795 = vpop.f32.mrf.mxu0
    %v3796 = vadd.f32 %v3776, %v3795
    %3797 = vdwg.mxu0
    %3798 = vmatpush.msra.mxu0 %v3092
    %3799 = vmatpush.msra.mxu0 %v3084
    %3800 = vmatpush.msra.mxu0 %v3076
    %3801 = vmatpush.msra.mxu0 %v3068
    %3802 = vmatpush.msra.mxu0 %v3060
    %3803 = vmatpush.msra.mxu0 %v3052
    %3804 = vmatpush.msra.mxu0 %v3044
    %3805 = vmatpush.msra.mxu0 %v3036
    %3806 = vmatpush.msra.mxu0 %v3028
    %3807 = vmatpush.msra.mxu0 %v3020
    %3808 = vmatpush.msra.mxu0 %v3012
    %3809 = vmatpush.msra.mxu0 %v3004
    %3810 = vmatpush.msra.mxu0 %v2996
    %3811 = vmatpush.msra.mxu0 %v2988
    %3812 = vmatpush.msra.mxu0 %v2980
    %3813 = vmatpush.msra.mxu0 %v2972
    %3814 = vmatmul.f32.gmra.mxu0 %v2710
    %v3815 = vpop.f32.mrf.mxu0
    %v3816 = vadd.f32 %v3796, %v3815
    %3817 = vdwg.mxu0
    %3818 = vmatpush.msra.mxu0 %v3220
    %3819 = vmatpush.msra.mxu0 %v3212
    %3820 = vmatpush.msra.mxu0 %v3204
    %3821 = vmatpush.msra.mxu0 %v3196
    %3822 = vmatpush.msra.mxu0 %v3188
    %3823 = vmatpush.msra.mxu0 %v3180
    %3824 = vmatpush.msra.mxu0 %v3172
    %3825 = vmatpush.msra.mxu0 %v3164
    %3826 = vmatpush.msra.mxu0 %v3156
    %3827 = vmatpush.msra.mxu0 %v3148
    %3828 = vmatpush.msra.mxu0 %v3140
    %3829 = vmatpush.msra.mxu0 %v3132
    %3830 = vmatpush.msra.mxu0 %v3124
    %3831 = vmatpush.msra.mxu0 %v3116
    %3832 = vmatpush.msra.mxu0 %v3108
    %3833 = vmatpush.msra.mxu0 %v3100
    %3834 = vmatmul.f32.gmra.mxu0 %v2711
    %v3835 = vpop.f32.mrf.mxu0
    %v3836 = vadd.f32 %v3816, %v3835
    %3837 = vdwg.mxu0
    %3838 = vmatpush.msra.mxu0 %v3348
    %3839 = vmatpush.msra.mxu0 %v3340
    %3840 = vmatpush.msra.mxu0 %v3332
    %3841 = vmatpush.msra.mxu0 %v3324
    %3842 = vmatpush.msra.mxu0 %v3316
    %3843 = vmatpush.msra.mxu0 %v3308
    %3844 = vmatpush.msra.mxu0 %v3300
    %3845 = vmatpush.msra.mxu0 %v3292
    %3846 = vmatpush.msra.mxu0 %v3284
    %3847 = vmatpush.msra.mxu0 %v3276
    %3848 = vmatpush.msra.mxu0 %v3268
    %3849 = vmatpush.msra.mxu0 %v3260
    %3850 = vmatpush.msra.mxu0 %v3252
    %3851 = vmatpush.msra.mxu0 %v3244
    %3852 = vmatpush.msra.mxu0 %v3236
    %3853 = vmatpush.msra.mxu0 %v3228
    %3854 = vmatmul.f32.gmra.mxu0 %v2712
    %v3855 = vpop.f32.mrf.mxu0
    %v3856 = vadd.f32 %v3836, %v3855
    %3857 = vdwg.mxu0
    %3858 = vmatpush.msra.mxu0 %v3476
    %3859 = vmatpush.msra.mxu0 %v3468
    %3860 = vmatpush.msra.mxu0 %v3460
    %3861 = vmatpush.msra.mxu0 %v3452
    %3862 = vmatpush.msra.mxu0 %v3444
    %3863 = vmatpush.msra.mxu0 %v3436
    %3864 = vmatpush.msra.mxu0 %v3428
    %3865 = vmatpush.msra.mxu0 %v3420
    %3866 = vmatpush.msra.mxu0 %v3412
    %3867 = vmatpush.msra.mxu0 %v3404
    %3868 = vmatpush.msra.mxu0 %v3396
    %3869 = vmatpush.msra.mxu0 %v3388
    %3870 = vmatpush.msra.mxu0 %v3380
    %3871 = vmatpush.msra.mxu0 %v3372
    %3872 = vmatpush.msra.mxu0 %v3364
    %3873 = vmatpush.msra.mxu0 %v3356
    %3874 = vmatmul.f32.gmra.mxu0 %v2713
    %v3875 = vpop.f32.mrf.mxu0
    %v3876 = vadd.f32 %v3856, %v3875
    %3877 = vdwg.mxu0
    %3878 = vmatpush.msra.mxu0 %v3604
    %3879 = vmatpush.msra.mxu0 %v3596
    %3880 = vmatpush.msra.mxu0 %v3588
    %3881 = vmatpush.msra.mxu0 %v3580
    %3882 = vmatpush.msra.mxu0 %v3572
    %3883 = vmatpush.msra.mxu0 %v3564
    %3884 = vmatpush.msra.mxu0 %v3556
    %3885 = vmatpush.msra.mxu0 %v3548
    %3886 = vmatpush.msra.mxu0 %v3540
    %3887 = vmatpush.msra.mxu0 %v3532
    %3888 = vmatpush.msra.mxu0 %v3524
    %3889 = vmatpush.msra.mxu0 %v3516
    %3890 = vmatpush.msra.mxu0 %v3508
    %3891 = vmatpush.msra.mxu0 %v3500
    %3892 = vmatpush.msra.mxu0 %v3492
    %3893 = vmatpush.msra.mxu0 %v3484
    %3894 = vmatmul.f32.gmra.mxu0 %v2714
    %v3895 = vpop.f32.mrf.mxu0
    %v3896 = vadd.f32 %v3876, %v3895
    %3897 = vdwg.mxu0
    %3898 = vmatpush.msra.mxu0 %v3732
    %3899 = vmatpush.msra.mxu0 %v3724
    %3900 = vmatpush.msra.mxu0 %v3716
    %3901 = vmatpush.msra.mxu0 %v3708
    %3902 = vmatpush.msra.mxu0 %v3700
    %3903 = vmatpush.msra.mxu0 %v3692
    %3904 = vmatpush.msra.mxu0 %v3684
    %3905 = vmatpush.msra.mxu0 %v3676
    %3906 = vmatpush.msra.mxu0 %v3668
    %3907 = vmatpush.msra.mxu0 %v3660
    %3908 = vmatpush.msra.mxu0 %v3652
    %3909 = vmatpush.msra.mxu0 %v3644
    %3910 = vmatpush.msra.mxu0 %v3636
    %3911 = vmatpush.msra.mxu0 %v3628
    %3912 = vmatpush.msra.mxu0 %v3620
    %3913 = vmatpush.msra.mxu0 %v3612
    %3914 = vmatmul.f32.gmra.mxu0 %v2715
    %v3915 = vpop.f32.mrf.mxu0
    %v3916 = vadd.f32 %v3896, %v3915
    %3917 = vdwg.mxu0
    %3918 = vmatpush.msra.mxu0 %v2837
    %3919 = vmatpush.msra.mxu0 %v2829
    %3920 = vmatpush.msra.mxu0 %v2821
    %3921 = vmatpush.msra.mxu0 %v2813
    %3922 = vmatpush.msra.mxu0 %v2805
    %3923 = vmatpush.msra.mxu0 %v2797
    %3924 = vmatpush.msra.mxu0 %v2789
    %3925 = vmatpush.msra.mxu0 %v2781
    %3926 = vmatpush.msra.mxu0 %v2773
    %3927 = vmatpush.msra.mxu0 %v2765
    %3928 = vmatpush.msra.mxu0 %v2757
    %3929 = vmatpush.msra.mxu0 %v2749
    %3930 = vmatpush.msra.mxu0 %v2741
    %3931 = vmatpush.msra.mxu0 %v2733
    %3932 = vmatpush.msra.mxu0 %v2725
    %3933 = vmatpush.msra.mxu0 %v2717
    %3934 = vmatmul.f32.gmra.mxu0 %v2708
    %v3935 = vpop.f32.mrf.mxu0
    %v3936 = vadd.f32 %v3743, %v3935
    %3937 = vdwg.mxu0
    %3938 = vmatpush.msra.mxu0 %v2965
    %3939 = vmatpush.msra.mxu0 %v2957
    %3940 = vmatpush.msra.mxu0 %v2949
    %3941 = vmatpush.msra.mxu0 %v2941
    %3942 = vmatpush.msra.mxu0 %v2933
    %3943 = vmatpush.msra.mxu0 %v2925
    %3944 = vmatpush.msra.mxu0 %v2917
    %3945 = vmatpush.msra.mxu0 %v2909
    %3946 = vmatpush.msra.mxu0 %v2901
    %3947 = vmatpush.msra.mxu0 %v2893
    %3948 = vmatpush.msra.mxu0 %v2885
    %3949 = vmatpush.msra.mxu0 %v2877
    %3950 = vmatpush.msra.mxu0 %v2869
    %3951 = vmatpush.msra.mxu0 %v2861
    %3952 = vmatpush.msra.mxu0 %v2853
    %3953 = vmatpush.msra.mxu0 %v2845
    %3954 = vmatmul.f32.gmra.mxu0 %v2709
    %v3955 = vpop.f32.mrf.mxu0
    %v3956 = vadd.f32 %v3936, %v3955
    %3957 = vdwg.mxu0
    %3958 = vmatpush.msra.mxu0 %v3093
    %3959 = vmatpush.msra.mxu0 %v3085
    %3960 = vmatpush.msra.mxu0 %v3077
    %3961 = vmatpush.msra.mxu0 %v3069
    %3962 = vmatpush.msra.mxu0 %v3061
    %3963 = vmatpush.msra.mxu0 %v3053
    %3964 = vmatpush.msra.mxu0 %v3045
    %3965 = vmatpush.msra.mxu0 %v3037
    %3966 = vmatpush.msra.mxu0 %v3029
    %3967 = vmatpush.msra.mxu0 %v3021
    %3968 = vmatpush.msra.mxu0 %v3013
    %3969 = vmatpush.msra.mxu0 %v3005
    %3970 = vmatpush.msra.mxu0 %v2997
    %3971 = vmatpush.msra.mxu0 %v2989
    %3972 = vmatpush.msra.mxu0 %v2981
    %3973 = vmatpush.msra.mxu0 %v2973
    %3974 = vmatmul.f32.gmra.mxu0 %v2710
    %v3975 = vpop.f32.mrf.mxu0
    %v3976 = vadd.f32 %v3956, %v3975
    %3977 = vdwg.mxu0
    %3978 = vmatpush.msra.mxu0 %v3221
    %3979 = vmatpush.msra.mxu0 %v3213
    %3980 = vmatpush.msra.mxu0 %v3205
    %3981 = vmatpush.msra.mxu0 %v3197
    %3982 = vmatpush.msra.mxu0 %v3189
    %3983 = vmatpush.msra.mxu0 %v3181
    %3984 = vmatpush.msra.mxu0 %v3173
    %3985 = vmatpush.msra.mxu0 %v3165
    %3986 = vmatpush.msra.mxu0 %v3157
    %3987 = vmatpush.msra.mxu0 %v3149
    %3988 = vmatpush.msra.mxu0 %v3141
    %3989 = vmatpush.msra.mxu0 %v3133
    %3990 = vmatpush.msra.mxu0 %v3125
    %3991 = vmatpush.msra.mxu0 %v3117
    %3992 = vmatpush.msra.mxu0 %v3109
    %3993 = vmatpush.msra.mxu0 %v3101
    %3994 = vmatmul.f32.gmra.mxu0 %v2711
    %v3995 = vpop.f32.mrf.mxu0
    %v3996 = vadd.f32 %v3976, %v3995
    %3997 = vdwg.mxu0
    %3998 = vmatpush.msra.mxu0 %v3349
    %3999 = vmatpush.msra.mxu0 %v3341
    %4000 = vmatpush.msra.mxu0 %v3333
    %4001 = vmatpush.msra.mxu0 %v3325
    %4002 = vmatpush.msra.mxu0 %v3317
    %4003 = vmatpush.msra.mxu0 %v3309
    %4004 = vmatpush.msra.mxu0 %v3301
    %4005 = vmatpush.msra.mxu0 %v3293
    %4006 = vmatpush.msra.mxu0 %v3285
    %4007 = vmatpush.msra.mxu0 %v3277
    %4008 = vmatpush.msra.mxu0 %v3269
    %4009 = vmatpush.msra.mxu0 %v3261
    %4010 = vmatpush.msra.mxu0 %v3253
    %4011 = vmatpush.msra.mxu0 %v3245
    %4012 = vmatpush.msra.mxu0 %v3237
    %4013 = vmatpush.msra.mxu0 %v3229
    %4014 = vmatmul.f32.gmra.mxu0 %v2712
    %v4015 = vpop.f32.mrf.mxu0
    %v4016 = vadd.f32 %v3996, %v4015
    %4017 = vdwg.mxu0
    %4018 = vmatpush.msra.mxu0 %v3477
    %4019 = vmatpush.msra.mxu0 %v3469
    %4020 = vmatpush.msra.mxu0 %v3461
    %4021 = vmatpush.msra.mxu0 %v3453
    %4022 = vmatpush.msra.mxu0 %v3445
    %4023 = vmatpush.msra.mxu0 %v3437
    %4024 = vmatpush.msra.mxu0 %v3429
    %4025 = vmatpush.msra.mxu0 %v3421
    %4026 = vmatpush.msra.mxu0 %v3413
    %4027 = vmatpush.msra.mxu0 %v3405
    %4028 = vmatpush.msra.mxu0 %v3397
    %4029 = vmatpush.msra.mxu0 %v3389
    %4030 = vmatpush.msra.mxu0 %v3381
    %4031 = vmatpush.msra.mxu0 %v3373
    %4032 = vmatpush.msra.mxu0 %v3365
    %4033 = vmatpush.msra.mxu0 %v3357
    %4034 = vmatmul.f32.gmra.mxu0 %v2713
    %v4035 = vpop.f32.mrf.mxu0
    %v4036 = vadd.f32 %v4016, %v4035
    %4037 = vdwg.mxu0
    %4038 = vmatpush.msra.mxu0 %v3605
    %4039 = vmatpush.msra.mxu0 %v3597
    %4040 = vmatpush.msra.mxu0 %v3589
    %4041 = vmatpush.msra.mxu0 %v3581
    %4042 = vmatpush.msra.mxu0 %v3573
    %4043 = vmatpush.msra.mxu0 %v3565
    %4044 = vmatpush.msra.mxu0 %v3557
    %4045 = vmatpush.msra.mxu0 %v3549
    %4046 = vmatpush.msra.mxu0 %v3541
    %4047 = vmatpush.msra.mxu0 %v3533
    %4048 = vmatpush.msra.mxu0 %v3525
    %4049 = vmatpush.msra.mxu0 %v3517
    %4050 = vmatpush.msra.mxu0 %v3509
    %4051 = vmatpush.msra.mxu0 %v3501
    %4052 = vmatpush.msra.mxu0 %v3493
    %4053 = vmatpush.msra.mxu0 %v3485
    %4054 = vmatmul.f32.gmra.mxu0 %v2714
    %v4055 = vpop.f32.mrf.mxu0
    %v4056 = vadd.f32 %v4036, %v4055
    %4057 = vdwg.mxu0
    %4058 = vmatpush.msra.mxu0 %v3733
    %4059 = vmatpush.msra.mxu0 %v3725
    %4060 = vmatpush.msra.mxu0 %v3717
    %4061 = vmatpush.msra.mxu0 %v3709
    %4062 = vmatpush.msra.mxu0 %v3701
    %4063 = vmatpush.msra.mxu0 %v3693
    %4064 = vmatpush.msra.mxu0 %v3685
    %4065 = vmatpush.msra.mxu0 %v3677
    %4066 = vmatpush.msra.mxu0 %v3669
    %4067 = vmatpush.msra.mxu0 %v3661
    %4068 = vmatpush.msra.mxu0 %v3653
    %4069 = vmatpush.msra.mxu0 %v3645
    %4070 = vmatpush.msra.mxu0 %v3637
    %4071 = vmatpush.msra.mxu0 %v3629
    %4072 = vmatpush.msra.mxu0 %v3621
    %4073 = vmatpush.msra.mxu0 %v3613
    %4074 = vmatmul.f32.gmra.mxu0 %v2715
    %v4075 = vpop.f32.mrf.mxu0
    %v4076 = vadd.f32 %v4056, %v4075
    %4077 = vdwg.mxu0
    %4078 = vmatpush.msra.mxu0 %v2838
    %4079 = vmatpush.msra.mxu0 %v2830
    %4080 = vmatpush.msra.mxu0 %v2822
    %4081 = vmatpush.msra.mxu0 %v2814
    %4082 = vmatpush.msra.mxu0 %v2806
    %4083 = vmatpush.msra.mxu0 %v2798
    %4084 = vmatpush.msra.mxu0 %v2790
    %4085 = vmatpush.msra.mxu0 %v2782
    %4086 = vmatpush.msra.mxu0 %v2774
    %4087 = vmatpush.msra.mxu0 %v2766
    %4088 = vmatpush.msra.mxu0 %v2758
    %4089 = vmatpush.msra.mxu0 %v2750
    %4090 = vmatpush.msra.mxu0 %v2742
    %4091 = vmatpush.msra.mxu0 %v2734
    %4092 = vmatpush.msra.mxu0 %v2726
    %4093 = vmatpush.msra.mxu0 %v2718
    %4094 = vmatmul.f32.gmra.mxu0 %v2708
    %v4095 = vpop.f32.mrf.mxu0
    %v4096 = vadd.f32 %v3744, %v4095
    %4097 = vdwg.mxu0
    %4098 = vmatpush.msra.mxu0 %v2966
    %4099 = vmatpush.msra.mxu0 %v2958
    %4100 = vmatpush.msra.mxu0 %v2950
    %4101 = vmatpush.msra.mxu0 %v2942
    %4102 = vmatpush.msra.mxu0 %v2934
    %4103 = vmatpush.msra.mxu0 %v2926
    %4104 = vmatpush.msra.mxu0 %v2918
    %4105 = vmatpush.msra.mxu0 %v2910
    %4106 = vmatpush.msra.mxu0 %v2902
    %4107 = vmatpush.msra.mxu0 %v2894
    %4108 = vmatpush.msra.mxu0 %v2886
    %4109 = vmatpush.msra.mxu0 %v2878
    %4110 = vmatpush.msra.mxu0 %v2870
    %4111 = vmatpush.msra.mxu0 %v2862
    %4112 = vmatpush.msra.mxu0 %v2854
    %4113 = vmatpush.msra.mxu0 %v2846
    %4114 = vmatmul.f32.gmra.mxu0 %v2709
    %v4115 = vpop.f32.mrf.mxu0
    %v4116 = vadd.f32 %v4096, %v4115
    %4117 = vdwg.mxu0
    %4118 = vmatpush.msra.mxu0 %v3094
    %4119 = vmatpush.msra.mxu0 %v3086
    %4120 = vmatpush.msra.mxu0 %v3078
    %4121 = vmatpush.msra.mxu0 %v3070
    %4122 = vmatpush.msra.mxu0 %v3062
    %4123 = vmatpush.msra.mxu0 %v3054
    %4124 = vmatpush.msra.mxu0 %v3046
    %4125 = vmatpush.msra.mxu0 %v3038
    %4126 = vmatpush.msra.mxu0 %v3030
    %4127 = vmatpush.msra.mxu0 %v3022
    %4128 = vmatpush.msra.mxu0 %v3014
    %4129 = vmatpush.msra.mxu0 %v3006
    %4130 = vmatpush.msra.mxu0 %v2998
    %4131 = vmatpush.msra.mxu0 %v2990
    %4132 = vmatpush.msra.mxu0 %v2982
    %4133 = vmatpush.msra.mxu0 %v2974
    %4134 = vmatmul.f32.gmra.mxu0 %v2710
    %v4135 = vpop.f32.mrf.mxu0
    %v4136 = vadd.f32 %v4116, %v4135
    %4137 = vdwg.mxu0
    %4138 = vmatpush.msra.mxu0 %v3222
    %4139 = vmatpush.msra.mxu0 %v3214
    %4140 = vmatpush.msra.mxu0 %v3206
    %4141 = vmatpush.msra.mxu0 %v3198
    %4142 = vmatpush.msra.mxu0 %v3190
    %4143 = vmatpush.msra.mxu0 %v3182
    %4144 = vmatpush.msra.mxu0 %v3174
    %4145 = vmatpush.msra.mxu0 %v3166
    %4146 = vmatpush.msra.mxu0 %v3158
    %4147 = vmatpush.msra.mxu0 %v3150
    %4148 = vmatpush.msra.mxu0 %v3142
    %4149 = vmatpush.msra.mxu0 %v3134
    %4150 = vmatpush.msra.mxu0 %v3126
    %4151 = vmatpush.msra.mxu0 %v3118
    %4152 = vmatpush.msra.mxu0 %v3110
    %4153 = vmatpush.msra.mxu0 %v3102
    %4154 = vmatmul.f32.gmra.mxu0 %v2711
    %v4155 = vpop.f32.mrf.mxu0
    %v4156 = vadd.f32 %v4136, %v4155
    %4157 = vdwg.mxu0
    %4158 = vmatpush.msra.mxu0 %v3350
    %4159 = vmatpush.msra.mxu0 %v3342
    %4160 = vmatpush.msra.mxu0 %v3334
    %4161 = vmatpush.msra.mxu0 %v3326
    %4162 = vmatpush.msra.mxu0 %v3318
    %4163 = vmatpush.msra.mxu0 %v3310
    %4164 = vmatpush.msra.mxu0 %v3302
    %4165 = vmatpush.msra.mxu0 %v3294
    %4166 = vmatpush.msra.mxu0 %v3286
    %4167 = vmatpush.msra.mxu0 %v3278
    %4168 = vmatpush.msra.mxu0 %v3270
    %4169 = vmatpush.msra.mxu0 %v3262
    %4170 = vmatpush.msra.mxu0 %v3254
    %4171 = vmatpush.msra.mxu0 %v3246
    %4172 = vmatpush.msra.mxu0 %v3238
    %4173 = vmatpush.msra.mxu0 %v3230
    %4174 = vmatmul.f32.gmra.mxu0 %v2712
    %v4175 = vpop.f32.mrf.mxu0
    %v4176 = vadd.f32 %v4156, %v4175
    %4177 = vdwg.mxu0
    %4178 = vmatpush.msra.mxu0 %v3478
    %4179 = vmatpush.msra.mxu0 %v3470
    %4180 = vmatpush.msra.mxu0 %v3462
    %4181 = vmatpush.msra.mxu0 %v3454
    %4182 = vmatpush.msra.mxu0 %v3446
    %4183 = vmatpush.msra.mxu0 %v3438
    %4184 = vmatpush.msra.mxu0 %v3430
    %4185 = vmatpush.msra.mxu0 %v3422
    %4186 = vmatpush.msra.mxu0 %v3414
    %4187 = vmatpush.msra.mxu0 %v3406
    %4188 = vmatpush.msra.mxu0 %v3398
    %4189 = vmatpush.msra.mxu0 %v3390
    %4190 = vmatpush.msra.mxu0 %v3382
    %4191 = vmatpush.msra.mxu0 %v3374
    %4192 = vmatpush.msra.mxu0 %v3366
    %4193 = vmatpush.msra.mxu0 %v3358
    %4194 = vmatmul.f32.gmra.mxu0 %v2713
    %v4195 = vpop.f32.mrf.mxu0
    %v4196 = vadd.f32 %v4176, %v4195
    %4197 = vdwg.mxu0
    %4198 = vmatpush.msra.mxu0 %v3606
    %4199 = vmatpush.msra.mxu0 %v3598
    %4200 = vmatpush.msra.mxu0 %v3590
    %4201 = vmatpush.msra.mxu0 %v3582
    %4202 = vmatpush.msra.mxu0 %v3574
    %4203 = vmatpush.msra.mxu0 %v3566
    %4204 = vmatpush.msra.mxu0 %v3558
    %4205 = vmatpush.msra.mxu0 %v3550
    %4206 = vmatpush.msra.mxu0 %v3542
    %4207 = vmatpush.msra.mxu0 %v3534
    %4208 = vmatpush.msra.mxu0 %v3526
    %4209 = vmatpush.msra.mxu0 %v3518
    %4210 = vmatpush.msra.mxu0 %v3510
    %4211 = vmatpush.msra.mxu0 %v3502
    %4212 = vmatpush.msra.mxu0 %v3494
    %4213 = vmatpush.msra.mxu0 %v3486
    %4214 = vmatmul.f32.gmra.mxu0 %v2714
    %v4215 = vpop.f32.mrf.mxu0
    %v4216 = vadd.f32 %v4196, %v4215
    %4217 = vdwg.mxu0
    %4218 = vmatpush.msra.mxu0 %v3734
    %4219 = vmatpush.msra.mxu0 %v3726
    %4220 = vmatpush.msra.mxu0 %v3718
    %4221 = vmatpush.msra.mxu0 %v3710
    %4222 = vmatpush.msra.mxu0 %v3702
    %4223 = vmatpush.msra.mxu0 %v3694
    %4224 = vmatpush.msra.mxu0 %v3686
    %4225 = vmatpush.msra.mxu0 %v3678
    %4226 = vmatpush.msra.mxu0 %v3670
    %4227 = vmatpush.msra.mxu0 %v3662
    %4228 = vmatpush.msra.mxu0 %v3654
    %4229 = vmatpush.msra.mxu0 %v3646
    %4230 = vmatpush.msra.mxu0 %v3638
    %4231 = vmatpush.msra.mxu0 %v3630
    %4232 = vmatpush.msra.mxu0 %v3622
    %4233 = vmatpush.msra.mxu0 %v3614
    %4234 = vmatmul.f32.gmra.mxu0 %v2715
    %v4235 = vpop.f32.mrf.mxu0
    %v4236 = vadd.f32 %v4216, %v4235
    %4237 = vdwg.mxu0
    %4238 = vmatpush.msra.mxu0 %v2839
    %4239 = vmatpush.msra.mxu0 %v2831
    %4240 = vmatpush.msra.mxu0 %v2823
    %4241 = vmatpush.msra.mxu0 %v2815
    %4242 = vmatpush.msra.mxu0 %v2807
    %4243 = vmatpush.msra.mxu0 %v2799
    %4244 = vmatpush.msra.mxu0 %v2791
    %4245 = vmatpush.msra.mxu0 %v2783
    %4246 = vmatpush.msra.mxu0 %v2775
    %4247 = vmatpush.msra.mxu0 %v2767
    %4248 = vmatpush.msra.mxu0 %v2759
    %4249 = vmatpush.msra.mxu0 %v2751
    %4250 = vmatpush.msra.mxu0 %v2743
    %4251 = vmatpush.msra.mxu0 %v2735
    %4252 = vmatpush.msra.mxu0 %v2727
    %4253 = vmatpush.msra.mxu0 %v2719
    %4254 = vmatmul.f32.gmra.mxu0 %v2708
    %v4255 = vpop.f32.mrf.mxu0
    %v4256 = vadd.f32 %v3745, %v4255
    %4257 = vdwg.mxu0
    %4258 = vmatpush.msra.mxu0 %v2967
    %4259 = vmatpush.msra.mxu0 %v2959
    %4260 = vmatpush.msra.mxu0 %v2951
    %4261 = vmatpush.msra.mxu0 %v2943
    %4262 = vmatpush.msra.mxu0 %v2935
    %4263 = vmatpush.msra.mxu0 %v2927
    %4264 = vmatpush.msra.mxu0 %v2919
    %4265 = vmatpush.msra.mxu0 %v2911
    %4266 = vmatpush.msra.mxu0 %v2903
    %4267 = vmatpush.msra.mxu0 %v2895
    %4268 = vmatpush.msra.mxu0 %v2887
    %4269 = vmatpush.msra.mxu0 %v2879
    %4270 = vmatpush.msra.mxu0 %v2871
    %4271 = vmatpush.msra.mxu0 %v2863
    %4272 = vmatpush.msra.mxu0 %v2855
    %4273 = vmatpush.msra.mxu0 %v2847
    %4274 = vmatmul.f32.gmra.mxu0 %v2709
    %v4275 = vpop.f32.mrf.mxu0
    %v4276 = vadd.f32 %v4256, %v4275
    %4277 = vdwg.mxu0
    %4278 = vmatpush.msra.mxu0 %v3095
    %4279 = vmatpush.msra.mxu0 %v3087
    %4280 = vmatpush.msra.mxu0 %v3079
    %4281 = vmatpush.msra.mxu0 %v3071
    %4282 = vmatpush.msra.mxu0 %v3063
    %4283 = vmatpush.msra.mxu0 %v3055
    %4284 = vmatpush.msra.mxu0 %v3047
    %4285 = vmatpush.msra.mxu0 %v3039
    %4286 = vmatpush.msra.mxu0 %v3031
    %4287 = vmatpush.msra.mxu0 %v3023
    %4288 = vmatpush.msra.mxu0 %v3015
    %4289 = vmatpush.msra.mxu0 %v3007
    %4290 = vmatpush.msra.mxu0 %v2999
    %4291 = vmatpush.msra.mxu0 %v2991
    %4292 = vmatpush.msra.mxu0 %v2983
    %4293 = vmatpush.msra.mxu0 %v2975
    %4294 = vmatmul.f32.gmra.mxu0 %v2710
    %v4295 = vpop.f32.mrf.mxu0
    %v4296 = vadd.f32 %v4276, %v4295
    %4297 = vdwg.mxu0
    %4298 = vmatpush.msra.mxu0 %v3223
    %4299 = vmatpush.msra.mxu0 %v3215
    %4300 = vmatpush.msra.mxu0 %v3207
    %4301 = vmatpush.msra.mxu0 %v3199
    %4302 = vmatpush.msra.mxu0 %v3191
    %4303 = vmatpush.msra.mxu0 %v3183
    %4304 = vmatpush.msra.mxu0 %v3175
    %4305 = vmatpush.msra.mxu0 %v3167
    %4306 = vmatpush.msra.mxu0 %v3159
    %4307 = vmatpush.msra.mxu0 %v3151
    %4308 = vmatpush.msra.mxu0 %v3143
    %4309 = vmatpush.msra.mxu0 %v3135
    %4310 = vmatpush.msra.mxu0 %v3127
    %4311 = vmatpush.msra.mxu0 %v3119
    %4312 = vmatpush.msra.mxu0 %v3111
    %4313 = vmatpush.msra.mxu0 %v3103
    %4314 = vmatmul.f32.gmra.mxu0 %v2711
    %v4315 = vpop.f32.mrf.mxu0
    %v4316 = vadd.f32 %v4296, %v4315
    %4317 = vdwg.mxu0
    %4318 = vmatpush.msra.mxu0 %v3351
    %4319 = vmatpush.msra.mxu0 %v3343
    %4320 = vmatpush.msra.mxu0 %v3335
    %4321 = vmatpush.msra.mxu0 %v3327
    %4322 = vmatpush.msra.mxu0 %v3319
    %4323 = vmatpush.msra.mxu0 %v3311
    %4324 = vmatpush.msra.mxu0 %v3303
    %4325 = vmatpush.msra.mxu0 %v3295
    %4326 = vmatpush.msra.mxu0 %v3287
    %4327 = vmatpush.msra.mxu0 %v3279
    %4328 = vmatpush.msra.mxu0 %v3271
    %4329 = vmatpush.msra.mxu0 %v3263
    %4330 = vmatpush.msra.mxu0 %v3255
    %4331 = vmatpush.msra.mxu0 %v3247
    %4332 = vmatpush.msra.mxu0 %v3239
    %4333 = vmatpush.msra.mxu0 %v3231
    %4334 = vmatmul.f32.gmra.mxu0 %v2712
    %v4335 = vpop.f32.mrf.mxu0
    %v4336 = vadd.f32 %v4316, %v4335
    %4337 = vdwg.mxu0
    %4338 = vmatpush.msra.mxu0 %v3479
    %4339 = vmatpush.msra.mxu0 %v3471
    %4340 = vmatpush.msra.mxu0 %v3463
    %4341 = vmatpush.msra.mxu0 %v3455
    %4342 = vmatpush.msra.mxu0 %v3447
    %4343 = vmatpush.msra.mxu0 %v3439
    %4344 = vmatpush.msra.mxu0 %v3431
    %4345 = vmatpush.msra.mxu0 %v3423
    %4346 = vmatpush.msra.mxu0 %v3415
    %4347 = vmatpush.msra.mxu0 %v3407
    %4348 = vmatpush.msra.mxu0 %v3399
    %4349 = vmatpush.msra.mxu0 %v3391
    %4350 = vmatpush.msra.mxu0 %v3383
    %4351 = vmatpush.msra.mxu0 %v3375
    %4352 = vmatpush.msra.mxu0 %v3367
    %4353 = vmatpush.msra.mxu0 %v3359
    %4354 = vmatmul.f32.gmra.mxu0 %v2713
    %v4355 = vpop.f32.mrf.mxu0
    %v4356 = vadd.f32 %v4336, %v4355
    %4357 = vdwg.mxu0
    %4358 = vmatpush.msra.mxu0 %v3607
    %4359 = vmatpush.msra.mxu0 %v3599
    %4360 = vmatpush.msra.mxu0 %v3591
    %4361 = vmatpush.msra.mxu0 %v3583
    %4362 = vmatpush.msra.mxu0 %v3575
    %4363 = vmatpush.msra.mxu0 %v3567
    %4364 = vmatpush.msra.mxu0 %v3559
    %4365 = vmatpush.msra.mxu0 %v3551
    %4366 = vmatpush.msra.mxu0 %v3543
    %4367 = vmatpush.msra.mxu0 %v3535
    %4368 = vmatpush.msra.mxu0 %v3527
    %4369 = vmatpush.msra.mxu0 %v3519
    %4370 = vmatpush.msra.mxu0 %v3511
    %4371 = vmatpush.msra.mxu0 %v3503
    %4372 = vmatpush.msra.mxu0 %v3495
    %4373 = vmatpush.msra.mxu0 %v3487
    %4374 = vmatmul.f32.gmra.mxu0 %v2714
    %v4375 = vpop.f32.mrf.mxu0
    %v4376 = vadd.f32 %v4356, %v4375
    %4377 = vdwg.mxu0
    %4378 = vmatpush.msra.mxu0 %v3735
    %4379 = vmatpush.msra.mxu0 %v3727
    %4380 = vmatpush.msra.mxu0 %v3719
    %4381 = vmatpush.msra.mxu0 %v3711
    %4382 = vmatpush.msra.mxu0 %v3703
    %4383 = vmatpush.msra.mxu0 %v3695
    %4384 = vmatpush.msra.mxu0 %v3687
    %4385 = vmatpush.msra.mxu0 %v3679
    %4386 = vmatpush.msra.mxu0 %v3671
    %4387 = vmatpush.msra.mxu0 %v3663
    %4388 = vmatpush.msra.mxu0 %v3655
    %4389 = vmatpush.msra.mxu0 %v3647
    %4390 = vmatpush.msra.mxu0 %v3639
    %4391 = vmatpush.msra.mxu0 %v3631
    %4392 = vmatpush.msra.mxu0 %v3623
    %4393 = vmatpush.msra.mxu0 %v3615
    %4394 = vmatmul.f32.gmra.mxu0 %v2715
    %v4395 = vpop.f32.mrf.mxu0
    %v4396 = vadd.f32 %v4376, %v4395
    %4397 = vdwg.mxu0
    %4398 = vmatpush.msra.mxu0 %v2840
    %4399 = vmatpush.msra.mxu0 %v2832
    %4400 = vmatpush.msra.mxu0 %v2824
    %4401 = vmatpush.msra.mxu0 %v2816
    %4402 = vmatpush.msra.mxu0 %v2808
    %4403 = vmatpush.msra.mxu0 %v2800
    %4404 = vmatpush.msra.mxu0 %v2792
    %4405 = vmatpush.msra.mxu0 %v2784
    %4406 = vmatpush.msra.mxu0 %v2776
    %4407 = vmatpush.msra.mxu0 %v2768
    %4408 = vmatpush.msra.mxu0 %v2760
    %4409 = vmatpush.msra.mxu0 %v2752
    %4410 = vmatpush.msra.mxu0 %v2744
    %4411 = vmatpush.msra.mxu0 %v2736
    %4412 = vmatpush.msra.mxu0 %v2728
    %4413 = vmatpush.msra.mxu0 %v2720
    %4414 = vmatmul.f32.gmra.mxu0 %v2708
    %v4415 = vpop.f32.mrf.mxu0
    %v4416 = vadd.f32 %v3746, %v4415
    %4417 = vdwg.mxu0
    %4418 = vmatpush.msra.mxu0 %v2968
    %4419 = vmatpush.msra.mxu0 %v2960
    %4420 = vmatpush.msra.mxu0 %v2952
    %4421 = vmatpush.msra.mxu0 %v2944
    %4422 = vmatpush.msra.mxu0 %v2936
    %4423 = vmatpush.msra.mxu0 %v2928
    %4424 = vmatpush.msra.mxu0 %v2920
    %4425 = vmatpush.msra.mxu0 %v2912
    %4426 = vmatpush.msra.mxu0 %v2904
    %4427 = vmatpush.msra.mxu0 %v2896
    %4428 = vmatpush.msra.mxu0 %v2888
    %4429 = vmatpush.msra.mxu0 %v2880
    %4430 = vmatpush.msra.mxu0 %v2872
    %4431 = vmatpush.msra.mxu0 %v2864
    %4432 = vmatpush.msra.mxu0 %v2856
    %4433 = vmatpush.msra.mxu0 %v2848
    %4434 = vmatmul.f32.gmra.mxu0 %v2709
    %v4435 = vpop.f32.mrf.mxu0
    %v4436 = vadd.f32 %v4416, %v4435
    %4437 = vdwg.mxu0
    %4438 = vmatpush.msra.mxu0 %v3096
    %4439 = vmatpush.msra.mxu0 %v3088
    %4440 = vmatpush.msra.mxu0 %v3080
    %4441 = vmatpush.msra.mxu0 %v3072
    %4442 = vmatpush.msra.mxu0 %v3064
    %4443 = vmatpush.msra.mxu0 %v3056
    %4444 = vmatpush.msra.mxu0 %v3048
    %4445 = vmatpush.msra.mxu0 %v3040
    %4446 = vmatpush.msra.mxu0 %v3032
    %4447 = vmatpush.msra.mxu0 %v3024
    %4448 = vmatpush.msra.mxu0 %v3016
    %4449 = vmatpush.msra.mxu0 %v3008
    %4450 = vmatpush.msra.mxu0 %v3000
    %4451 = vmatpush.msra.mxu0 %v2992
    %4452 = vmatpush.msra.mxu0 %v2984
    %4453 = vmatpush.msra.mxu0 %v2976
    %4454 = vmatmul.f32.gmra.mxu0 %v2710
    %v4455 = vpop.f32.mrf.mxu0
    %v4456 = vadd.f32 %v4436, %v4455
    %4457 = vdwg.mxu0
    %4458 = vmatpush.msra.mxu0 %v3224
    %4459 = vmatpush.msra.mxu0 %v3216
    %4460 = vmatpush.msra.mxu0 %v3208
    %4461 = vmatpush.msra.mxu0 %v3200
    %4462 = vmatpush.msra.mxu0 %v3192
    %4463 = vmatpush.msra.mxu0 %v3184
    %4464 = vmatpush.msra.mxu0 %v3176
    %4465 = vmatpush.msra.mxu0 %v3168
    %4466 = vmatpush.msra.mxu0 %v3160
    %4467 = vmatpush.msra.mxu0 %v3152
    %4468 = vmatpush.msra.mxu0 %v3144
    %4469 = vmatpush.msra.mxu0 %v3136
    %4470 = vmatpush.msra.mxu0 %v3128
    %4471 = vmatpush.msra.mxu0 %v3120
    %4472 = vmatpush.msra.mxu0 %v3112
    %4473 = vmatpush.msra.mxu0 %v3104
    %4474 = vmatmul.f32.gmra.mxu0 %v2711
    %v4475 = vpop.f32.mrf.mxu0
    %v4476 = vadd.f32 %v4456, %v4475
    %4477 = vdwg.mxu0
    %4478 = vmatpush.msra.mxu0 %v3352
    %4479 = vmatpush.msra.mxu0 %v3344
    %4480 = vmatpush.msra.mxu0 %v3336
    %4481 = vmatpush.msra.mxu0 %v3328
    %4482 = vmatpush.msra.mxu0 %v3320
    %4483 = vmatpush.msra.mxu0 %v3312
    %4484 = vmatpush.msra.mxu0 %v3304
    %4485 = vmatpush.msra.mxu0 %v3296
    %4486 = vmatpush.msra.mxu0 %v3288
    %4487 = vmatpush.msra.mxu0 %v3280
    %4488 = vmatpush.msra.mxu0 %v3272
    %4489 = vmatpush.msra.mxu0 %v3264
    %4490 = vmatpush.msra.mxu0 %v3256
    %4491 = vmatpush.msra.mxu0 %v3248
    %4492 = vmatpush.msra.mxu0 %v3240
    %4493 = vmatpush.msra.mxu0 %v3232
    %4494 = vmatmul.f32.gmra.mxu0 %v2712
    %v4495 = vpop.f32.mrf.mxu0
    %v4496 = vadd.f32 %v4476, %v4495
    %4497 = vdwg.mxu0
    %4498 = vmatpush.msra.mxu0 %v3480
    %4499 = vmatpush.msra.mxu0 %v3472
    %4500 = vmatpush.msra.mxu0 %v3464
    %4501 = vmatpush.msra.mxu0 %v3456
    %4502 = vmatpush.msra.mxu0 %v3448
    %4503 = vmatpush.msra.mxu0 %v3440
    %4504 = vmatpush.msra.mxu0 %v3432
    %4505 = vmatpush.msra.mxu0 %v3424
    %4506 = vmatpush.msra.mxu0 %v3416
    %4507 = vmatpush.msra.mxu0 %v3408
    %4508 = vmatpush.msra.mxu0 %v3400
    %4509 = vmatpush.msra.mxu0 %v3392
    %4510 = vmatpush.msra.mxu0 %v3384
    %4511 = vmatpush.msra.mxu0 %v3376
    %4512 = vmatpush.msra.mxu0 %v3368
    %4513 = vmatpush.msra.mxu0 %v3360
    %4514 = vmatmul.f32.gmra.mxu0 %v2713
    %v4515 = vpop.f32.mrf.mxu0
    %v4516 = vadd.f32 %v4496, %v4515
    %4517 = vdwg.mxu0
    %4518 = vmatpush.msra.mxu0 %v3608
    %4519 = vmatpush.msra.mxu0 %v3600
    %4520 = vmatpush.msra.mxu0 %v3592
    %4521 = vmatpush.msra.mxu0 %v3584
    %4522 = vmatpush.msra.mxu0 %v3576
    %4523 = vmatpush.msra.mxu0 %v3568
    %4524 = vmatpush.msra.mxu0 %v3560
    %4525 = vmatpush.msra.mxu0 %v3552
    %4526 = vmatpush.msra.mxu0 %v3544
    %4527 = vmatpush.msra.mxu0 %v3536
    %4528 = vmatpush.msra.mxu0 %v3528
    %4529 = vmatpush.msra.mxu0 %v3520
    %4530 = vmatpush.msra.mxu0 %v3512
    %4531 = vmatpush.msra.mxu0 %v3504
    %4532 = vmatpush.msra.mxu0 %v3496
    %4533 = vmatpush.msra.mxu0 %v3488
    %4534 = vmatmul.f32.gmra.mxu0 %v2714
    %v4535 = vpop.f32.mrf.mxu0
    %v4536 = vadd.f32 %v4516, %v4535
    %4537 = vdwg.mxu0
    %4538 = vmatpush.msra.mxu0 %v3736
    %4539 = vmatpush.msra.mxu0 %v3728
    %4540 = vmatpush.msra.mxu0 %v3720
    %4541 = vmatpush.msra.mxu0 %v3712
    %4542 = vmatpush.msra.mxu0 %v3704
    %4543 = vmatpush.msra.mxu0 %v3696
    %4544 = vmatpush.msra.mxu0 %v3688
    %4545 = vmatpush.msra.mxu0 %v3680
    %4546 = vmatpush.msra.mxu0 %v3672
    %4547 = vmatpush.msra.mxu0 %v3664
    %4548 = vmatpush.msra.mxu0 %v3656
    %4549 = vmatpush.msra.mxu0 %v3648
    %4550 = vmatpush.msra.mxu0 %v3640
    %4551 = vmatpush.msra.mxu0 %v3632
    %4552 = vmatpush.msra.mxu0 %v3624
    %4553 = vmatpush.msra.mxu0 %v3616
    %4554 = vmatmul.f32.gmra.mxu0 %v2715
    %v4555 = vpop.f32.mrf.mxu0
    %v4556 = vadd.f32 %v4536, %v4555
    %4557 = vdwg.mxu0
    %4558 = vmatpush.msra.mxu0 %v2841
    %4559 = vmatpush.msra.mxu0 %v2833
    %4560 = vmatpush.msra.mxu0 %v2825
    %4561 = vmatpush.msra.mxu0 %v2817
    %4562 = vmatpush.msra.mxu0 %v2809
    %4563 = vmatpush.msra.mxu0 %v2801
    %4564 = vmatpush.msra.mxu0 %v2793
    %4565 = vmatpush.msra.mxu0 %v2785
    %4566 = vmatpush.msra.mxu0 %v2777
    %4567 = vmatpush.msra.mxu0 %v2769
    %4568 = vmatpush.msra.mxu0 %v2761
    %4569 = vmatpush.msra.mxu0 %v2753
    %4570 = vmatpush.msra.mxu0 %v2745
    %4571 = vmatpush.msra.mxu0 %v2737
    %4572 = vmatpush.msra.mxu0 %v2729
    %4573 = vmatpush.msra.mxu0 %v2721
    %4574 = vmatmul.f32.gmra.mxu0 %v2708
    %v4575 = vpop.f32.mrf.mxu0
    %v4576 = vadd.f32 %v3747, %v4575
    %4577 = vdwg.mxu0
    %4578 = vmatpush.msra.mxu0 %v2969
    %4579 = vmatpush.msra.mxu0 %v2961
    %4580 = vmatpush.msra.mxu0 %v2953
    %4581 = vmatpush.msra.mxu0 %v2945
    %4582 = vmatpush.msra.mxu0 %v2937
    %4583 = vmatpush.msra.mxu0 %v2929
    %4584 = vmatpush.msra.mxu0 %v2921
    %4585 = vmatpush.msra.mxu0 %v2913
    %4586 = vmatpush.msra.mxu0 %v2905
    %4587 = vmatpush.msra.mxu0 %v2897
    %4588 = vmatpush.msra.mxu0 %v2889
    %4589 = vmatpush.msra.mxu0 %v2881
    %4590 = vmatpush.msra.mxu0 %v2873
    %4591 = vmatpush.msra.mxu0 %v2865
    %4592 = vmatpush.msra.mxu0 %v2857
    %4593 = vmatpush.msra.mxu0 %v2849
    %4594 = vmatmul.f32.gmra.mxu0 %v2709
    %v4595 = vpop.f32.mrf.mxu0
    %v4596 = vadd.f32 %v4576, %v4595
    %4597 = vdwg.mxu0
    %4598 = vmatpush.msra.mxu0 %v3097
    %4599 = vmatpush.msra.mxu0 %v3089
    %4600 = vmatpush.msra.mxu0 %v3081
    %4601 = vmatpush.msra.mxu0 %v3073
    %4602 = vmatpush.msra.mxu0 %v3065
    %4603 = vmatpush.msra.mxu0 %v3057
    %4604 = vmatpush.msra.mxu0 %v3049
    %4605 = vmatpush.msra.mxu0 %v3041
    %4606 = vmatpush.msra.mxu0 %v3033
    %4607 = vmatpush.msra.mxu0 %v3025
    %4608 = vmatpush.msra.mxu0 %v3017
    %4609 = vmatpush.msra.mxu0 %v3009
    %4610 = vmatpush.msra.mxu0 %v3001
    %4611 = vmatpush.msra.mxu0 %v2993
    %4612 = vmatpush.msra.mxu0 %v2985
    %4613 = vmatpush.msra.mxu0 %v2977
    %4614 = vmatmul.f32.gmra.mxu0 %v2710
    %v4615 = vpop.f32.mrf.mxu0
    %v4616 = vadd.f32 %v4596, %v4615
    %4617 = vdwg.mxu0
    %4618 = vmatpush.msra.mxu0 %v3225
    %4619 = vmatpush.msra.mxu0 %v3217
    %4620 = vmatpush.msra.mxu0 %v3209
    %4621 = vmatpush.msra.mxu0 %v3201
    %4622 = vmatpush.msra.mxu0 %v3193
    %4623 = vmatpush.msra.mxu0 %v3185
    %4624 = vmatpush.msra.mxu0 %v3177
    %4625 = vmatpush.msra.mxu0 %v3169
    %4626 = vmatpush.msra.mxu0 %v3161
    %4627 = vmatpush.msra.mxu0 %v3153
    %4628 = vmatpush.msra.mxu0 %v3145
    %4629 = vmatpush.msra.mxu0 %v3137
    %4630 = vmatpush.msra.mxu0 %v3129
    %4631 = vmatpush.msra.mxu0 %v3121
    %4632 = vmatpush.msra.mxu0 %v3113
    %4633 = vmatpush.msra.mxu0 %v3105
    %4634 = vmatmul.f32.gmra.mxu0 %v2711
    %v4635 = vpop.f32.mrf.mxu0
    %v4636 = vadd.f32 %v4616, %v4635
    %4637 = vdwg.mxu0
    %4638 = vmatpush.msra.mxu0 %v3353
    %4639 = vmatpush.msra.mxu0 %v3345
    %4640 = vmatpush.msra.mxu0 %v3337
    %4641 = vmatpush.msra.mxu0 %v3329
    %4642 = vmatpush.msra.mxu0 %v3321
    %4643 = vmatpush.msra.mxu0 %v3313
    %4644 = vmatpush.msra.mxu0 %v3305
    %4645 = vmatpush.msra.mxu0 %v3297
    %4646 = vmatpush.msra.mxu0 %v3289
    %4647 = vmatpush.msra.mxu0 %v3281
    %4648 = vmatpush.msra.mxu0 %v3273
    %4649 = vmatpush.msra.mxu0 %v3265
    %4650 = vmatpush.msra.mxu0 %v3257
    %4651 = vmatpush.msra.mxu0 %v3249
    %4652 = vmatpush.msra.mxu0 %v3241
    %4653 = vmatpush.msra.mxu0 %v3233
    %4654 = vmatmul.f32.gmra.mxu0 %v2712
    %v4655 = vpop.f32.mrf.mxu0
    %v4656 = vadd.f32 %v4636, %v4655
    %4657 = vdwg.mxu0
    %4658 = vmatpush.msra.mxu0 %v3481
    %4659 = vmatpush.msra.mxu0 %v3473
    %4660 = vmatpush.msra.mxu0 %v3465
    %4661 = vmatpush.msra.mxu0 %v3457
    %4662 = vmatpush.msra.mxu0 %v3449
    %4663 = vmatpush.msra.mxu0 %v3441
    %4664 = vmatpush.msra.mxu0 %v3433
    %4665 = vmatpush.msra.mxu0 %v3425
    %4666 = vmatpush.msra.mxu0 %v3417
    %4667 = vmatpush.msra.mxu0 %v3409
    %4668 = vmatpush.msra.mxu0 %v3401
    %4669 = vmatpush.msra.mxu0 %v3393
    %4670 = vmatpush.msra.mxu0 %v3385
    %4671 = vmatpush.msra.mxu0 %v3377
    %4672 = vmatpush.msra.mxu0 %v3369
    %4673 = vmatpush.msra.mxu0 %v3361
    %4674 = vmatmul.f32.gmra.mxu0 %v2713
    %v4675 = vpop.f32.mrf.mxu0
    %v4676 = vadd.f32 %v4656, %v4675
    %4677 = vdwg.mxu0
    %4678 = vmatpush.msra.mxu0 %v3609
    %4679 = vmatpush.msra.mxu0 %v3601
    %4680 = vmatpush.msra.mxu0 %v3593
    %4681 = vmatpush.msra.mxu0 %v3585
    %4682 = vmatpush.msra.mxu0 %v3577
    %4683 = vmatpush.msra.mxu0 %v3569
    %4684 = vmatpush.msra.mxu0 %v3561
    %4685 = vmatpush.msra.mxu0 %v3553
    %4686 = vmatpush.msra.mxu0 %v3545
    %4687 = vmatpush.msra.mxu0 %v3537
    %4688 = vmatpush.msra.mxu0 %v3529
    %4689 = vmatpush.msra.mxu0 %v3521
    %4690 = vmatpush.msra.mxu0 %v3513
    %4691 = vmatpush.msra.mxu0 %v3505
    %4692 = vmatpush.msra.mxu0 %v3497
    %4693 = vmatpush.msra.mxu0 %v3489
    %4694 = vmatmul.f32.gmra.mxu0 %v2714
    %v4695 = vpop.f32.mrf.mxu0
    %v4696 = vadd.f32 %v4676, %v4695
    %4697 = vdwg.mxu0
    %4698 = vmatpush.msra.mxu0 %v3737
    %4699 = vmatpush.msra.mxu0 %v3729
    %4700 = vmatpush.msra.mxu0 %v3721
    %4701 = vmatpush.msra.mxu0 %v3713
    %4702 = vmatpush.msra.mxu0 %v3705
    %4703 = vmatpush.msra.mxu0 %v3697
    %4704 = vmatpush.msra.mxu0 %v3689
    %4705 = vmatpush.msra.mxu0 %v3681
    %4706 = vmatpush.msra.mxu0 %v3673
    %4707 = vmatpush.msra.mxu0 %v3665
    %4708 = vmatpush.msra.mxu0 %v3657
    %4709 = vmatpush.msra.mxu0 %v3649
    %4710 = vmatpush.msra.mxu0 %v3641
    %4711 = vmatpush.msra.mxu0 %v3633
    %4712 = vmatpush.msra.mxu0 %v3625
    %4713 = vmatpush.msra.mxu0 %v3617
    %4714 = vmatmul.f32.gmra.mxu0 %v2715
    %v4715 = vpop.f32.mrf.mxu0
    %v4716 = vadd.f32 %v4696, %v4715
    %4717 = vdwg.mxu0
    %4718 = vmatpush.msra.mxu0 %v2842
    %4719 = vmatpush.msra.mxu0 %v2834
    %4720 = vmatpush.msra.mxu0 %v2826
    %4721 = vmatpush.msra.mxu0 %v2818
    %4722 = vmatpush.msra.mxu0 %v2810
    %4723 = vmatpush.msra.mxu0 %v2802
    %4724 = vmatpush.msra.mxu0 %v2794
    %4725 = vmatpush.msra.mxu0 %v2786
    %4726 = vmatpush.msra.mxu0 %v2778
    %4727 = vmatpush.msra.mxu0 %v2770
    %4728 = vmatpush.msra.mxu0 %v2762
    %4729 = vmatpush.msra.mxu0 %v2754
    %4730 = vmatpush.msra.mxu0 %v2746
    %4731 = vmatpush.msra.mxu0 %v2738
    %4732 = vmatpush.msra.mxu0 %v2730
    %4733 = vmatpush.msra.mxu0 %v2722
    %4734 = vmatmul.f32.gmra.mxu0 %v2708
    %v4735 = vpop.f32.mrf.mxu0
    %v4736 = vadd.f32 %v3748, %v4735
    %4737 = vdwg.mxu0
    %4738 = vmatpush.msra.mxu0 %v2970
    %4739 = vmatpush.msra.mxu0 %v2962
    %4740 = vmatpush.msra.mxu0 %v2954
    %4741 = vmatpush.msra.mxu0 %v2946
    %4742 = vmatpush.msra.mxu0 %v2938
    %4743 = vmatpush.msra.mxu0 %v2930
    %4744 = vmatpush.msra.mxu0 %v2922
    %4745 = vmatpush.msra.mxu0 %v2914
    %4746 = vmatpush.msra.mxu0 %v2906
    %4747 = vmatpush.msra.mxu0 %v2898
    %4748 = vmatpush.msra.mxu0 %v2890
    %4749 = vmatpush.msra.mxu0 %v2882
    %4750 = vmatpush.msra.mxu0 %v2874
    %4751 = vmatpush.msra.mxu0 %v2866
    %4752 = vmatpush.msra.mxu0 %v2858
    %4753 = vmatpush.msra.mxu0 %v2850
    %4754 = vmatmul.f32.gmra.mxu0 %v2709
    %v4755 = vpop.f32.mrf.mxu0
    %v4756 = vadd.f32 %v4736, %v4755
    %4757 = vdwg.mxu0
    %4758 = vmatpush.msra.mxu0 %v3098
    %4759 = vmatpush.msra.mxu0 %v3090
    %4760 = vmatpush.msra.mxu0 %v3082
    %4761 = vmatpush.msra.mxu0 %v3074
    %4762 = vmatpush.msra.mxu0 %v3066
    %4763 = vmatpush.msra.mxu0 %v3058
    %4764 = vmatpush.msra.mxu0 %v3050
    %4765 = vmatpush.msra.mxu0 %v3042
    %4766 = vmatpush.msra.mxu0 %v3034
    %4767 = vmatpush.msra.mxu0 %v3026
    %4768 = vmatpush.msra.mxu0 %v3018
    %4769 = vmatpush.msra.mxu0 %v3010
    %4770 = vmatpush.msra.mxu0 %v3002
    %4771 = vmatpush.msra.mxu0 %v2994
    %4772 = vmatpush.msra.mxu0 %v2986
    %4773 = vmatpush.msra.mxu0 %v2978
    %4774 = vmatmul.f32.gmra.mxu0 %v2710
    %v4775 = vpop.f32.mrf.mxu0
    %v4776 = vadd.f32 %v4756, %v4775
    %4777 = vdwg.mxu0
    %4778 = vmatpush.msra.mxu0 %v3226
    %4779 = vmatpush.msra.mxu0 %v3218
    %4780 = vmatpush.msra.mxu0 %v3210
    %4781 = vmatpush.msra.mxu0 %v3202
    %4782 = vmatpush.msra.mxu0 %v3194
    %4783 = vmatpush.msra.mxu0 %v3186
    %4784 = vmatpush.msra.mxu0 %v3178
    %4785 = vmatpush.msra.mxu0 %v3170
    %4786 = vmatpush.msra.mxu0 %v3162
    %4787 = vmatpush.msra.mxu0 %v3154
    %4788 = vmatpush.msra.mxu0 %v3146
    %4789 = vmatpush.msra.mxu0 %v3138
    %4790 = vmatpush.msra.mxu0 %v3130
    %4791 = vmatpush.msra.mxu0 %v3122
    %4792 = vmatpush.msra.mxu0 %v3114
    %4793 = vmatpush.msra.mxu0 %v3106
    %4794 = vmatmul.f32.gmra.mxu0 %v2711
    %v4795 = vpop.f32.mrf.mxu0
    %v4796 = vadd.f32 %v4776, %v4795
    %4797 = vdwg.mxu0
    %4798 = vmatpush.msra.mxu0 %v3354
    %4799 = vmatpush.msra.mxu0 %v3346
    %4800 = vmatpush.msra.mxu0 %v3338
    %4801 = vmatpush.msra.mxu0 %v3330
    %4802 = vmatpush.msra.mxu0 %v3322
    %4803 = vmatpush.msra.mxu0 %v3314
    %4804 = vmatpush.msra.mxu0 %v3306
    %4805 = vmatpush.msra.mxu0 %v3298
    %4806 = vmatpush.msra.mxu0 %v3290
    %4807 = vmatpush.msra.mxu0 %v3282
    %4808 = vmatpush.msra.mxu0 %v3274
    %4809 = vmatpush.msra.mxu0 %v3266
    %4810 = vmatpush.msra.mxu0 %v3258
    %4811 = vmatpush.msra.mxu0 %v3250
    %4812 = vmatpush.msra.mxu0 %v3242
    %4813 = vmatpush.msra.mxu0 %v3234
    %4814 = vmatmul.f32.gmra.mxu0 %v2712
    %v4815 = vpop.f32.mrf.mxu0
    %v4816 = vadd.f32 %v4796, %v4815
    %4817 = vdwg.mxu0
    %4818 = vmatpush.msra.mxu0 %v3482
    %4819 = vmatpush.msra.mxu0 %v3474
    %4820 = vmatpush.msra.mxu0 %v3466
    %4821 = vmatpush.msra.mxu0 %v3458
    %4822 = vmatpush.msra.mxu0 %v3450
    %4823 = vmatpush.msra.mxu0 %v3442
    %4824 = vmatpush.msra.mxu0 %v3434
    %4825 = vmatpush.msra.mxu0 %v3426
    %4826 = vmatpush.msra.mxu0 %v3418
    %4827 = vmatpush.msra.mxu0 %v3410
    %4828 = vmatpush.msra.mxu0 %v3402
    %4829 = vmatpush.msra.mxu0 %v3394
    %4830 = vmatpush.msra.mxu0 %v3386
    %4831 = vmatpush.msra.mxu0 %v3378
    %4832 = vmatpush.msra.mxu0 %v3370
    %4833 = vmatpush.msra.mxu0 %v3362
    %4834 = vmatmul.f32.gmra.mxu0 %v2713
    %v4835 = vpop.f32.mrf.mxu0
    %v4836 = vadd.f32 %v4816, %v4835
    %4837 = vdwg.mxu0
    %4838 = vmatpush.msra.mxu0 %v3610
    %4839 = vmatpush.msra.mxu0 %v3602
    %4840 = vmatpush.msra.mxu0 %v3594
    %4841 = vmatpush.msra.mxu0 %v3586
    %4842 = vmatpush.msra.mxu0 %v3578
    %4843 = vmatpush.msra.mxu0 %v3570
    %4844 = vmatpush.msra.mxu0 %v3562
    %4845 = vmatpush.msra.mxu0 %v3554
    %4846 = vmatpush.msra.mxu0 %v3546
    %4847 = vmatpush.msra.mxu0 %v3538
    %4848 = vmatpush.msra.mxu0 %v3530
    %4849 = vmatpush.msra.mxu0 %v3522
    %4850 = vmatpush.msra.mxu0 %v3514
    %4851 = vmatpush.msra.mxu0 %v3506
    %4852 = vmatpush.msra.mxu0 %v3498
    %4853 = vmatpush.msra.mxu0 %v3490
    %4854 = vmatmul.f32.gmra.mxu0 %v2714
    %v4855 = vpop.f32.mrf.mxu0
    %v4856 = vadd.f32 %v4836, %v4855
    %4857 = vdwg.mxu0
    %4858 = vmatpush.msra.mxu0 %v3738
    %4859 = vmatpush.msra.mxu0 %v3730
    %4860 = vmatpush.msra.mxu0 %v3722
    %4861 = vmatpush.msra.mxu0 %v3714
    %4862 = vmatpush.msra.mxu0 %v3706
    %4863 = vmatpush.msra.mxu0 %v3698
    %4864 = vmatpush.msra.mxu0 %v3690
    %4865 = vmatpush.msra.mxu0 %v3682
    %4866 = vmatpush.msra.mxu0 %v3674
    %4867 = vmatpush.msra.mxu0 %v3666
    %4868 = vmatpush.msra.mxu0 %v3658
    %4869 = vmatpush.msra.mxu0 %v3650
    %4870 = vmatpush.msra.mxu0 %v3642
    %4871 = vmatpush.msra.mxu0 %v3634
    %4872 = vmatpush.msra.mxu0 %v3626
    %4873 = vmatpush.msra.mxu0 %v3618
    %4874 = vmatmul.f32.gmra.mxu0 %v2715
    %v4875 = vpop.f32.mrf.mxu0
    %v4876 = vadd.f32 %v4856, %v4875
    %4877 = vdwg.mxu0
    %4878 = vmatpush.msra.mxu0 %v2843
    %4879 = vmatpush.msra.mxu0 %v2835
    %4880 = vmatpush.msra.mxu0 %v2827
    %4881 = vmatpush.msra.mxu0 %v2819
    %4882 = vmatpush.msra.mxu0 %v2811
    %4883 = vmatpush.msra.mxu0 %v2803
    %4884 = vmatpush.msra.mxu0 %v2795
    %4885 = vmatpush.msra.mxu0 %v2787
    %4886 = vmatpush.msra.mxu0 %v2779
    %4887 = vmatpush.msra.mxu0 %v2771
    %4888 = vmatpush.msra.mxu0 %v2763
    %4889 = vmatpush.msra.mxu0 %v2755
    %4890 = vmatpush.msra.mxu0 %v2747
    %4891 = vmatpush.msra.mxu0 %v2739
    %4892 = vmatpush.msra.mxu0 %v2731
    %4893 = vmatpush.msra.mxu0 %v2723
    %4894 = vmatmul.f32.gmra.mxu0 %v2708
    %v4895 = vpop.f32.mrf.mxu0
    %v4896 = vadd.f32 %v3749, %v4895
    %4897 = vdwg.mxu0
    %4898 = vmatpush.msra.mxu0 %v2971
    %4899 = vmatpush.msra.mxu0 %v2963
    %4900 = vmatpush.msra.mxu0 %v2955
    %4901 = vmatpush.msra.mxu0 %v2947
    %4902 = vmatpush.msra.mxu0 %v2939
    %4903 = vmatpush.msra.mxu0 %v2931
    %4904 = vmatpush.msra.mxu0 %v2923
    %4905 = vmatpush.msra.mxu0 %v2915
    %4906 = vmatpush.msra.mxu0 %v2907
    %4907 = vmatpush.msra.mxu0 %v2899
    %4908 = vmatpush.msra.mxu0 %v2891
    %4909 = vmatpush.msra.mxu0 %v2883
    %4910 = vmatpush.msra.mxu0 %v2875
    %4911 = vmatpush.msra.mxu0 %v2867
    %4912 = vmatpush.msra.mxu0 %v2859
    %4913 = vmatpush.msra.mxu0 %v2851
    %4914 = vmatmul.f32.gmra.mxu0 %v2709
    %v4915 = vpop.f32.mrf.mxu0
    %v4916 = vadd.f32 %v4896, %v4915
    %4917 = vdwg.mxu0
    %4918 = vmatpush.msra.mxu0 %v3099
    %4919 = vmatpush.msra.mxu0 %v3091
    %4920 = vmatpush.msra.mxu0 %v3083
    %4921 = vmatpush.msra.mxu0 %v3075
    %4922 = vmatpush.msra.mxu0 %v3067
    %4923 = vmatpush.msra.mxu0 %v3059
    %4924 = vmatpush.msra.mxu0 %v3051
    %4925 = vmatpush.msra.mxu0 %v3043
    %4926 = vmatpush.msra.mxu0 %v3035
    %4927 = vmatpush.msra.mxu0 %v3027
    %4928 = vmatpush.msra.mxu0 %v3019
    %4929 = vmatpush.msra.mxu0 %v3011
    %4930 = vmatpush.msra.mxu0 %v3003
    %4931 = vmatpush.msra.mxu0 %v2995
    %4932 = vmatpush.msra.mxu0 %v2987
    %4933 = vmatpush.msra.mxu0 %v2979
    %4934 = vmatmul.f32.gmra.mxu0 %v2710
    %v4935 = vpop.f32.mrf.mxu0
    %v4936 = vadd.f32 %v4916, %v4935
    %4937 = vdwg.mxu0
    %4938 = vmatpush.msra.mxu0 %v3227
    %4939 = vmatpush.msra.mxu0 %v3219
    %4940 = vmatpush.msra.mxu0 %v3211
    %4941 = vmatpush.msra.mxu0 %v3203
    %4942 = vmatpush.msra.mxu0 %v3195
    %4943 = vmatpush.msra.mxu0 %v3187
    %4944 = vmatpush.msra.mxu0 %v3179
    %4945 = vmatpush.msra.mxu0 %v3171
    %4946 = vmatpush.msra.mxu0 %v3163
    %4947 = vmatpush.msra.mxu0 %v3155
    %4948 = vmatpush.msra.mxu0 %v3147
    %4949 = vmatpush.msra.mxu0 %v3139
    %4950 = vmatpush.msra.mxu0 %v3131
    %4951 = vmatpush.msra.mxu0 %v3123
    %4952 = vmatpush.msra.mxu0 %v3115
    %4953 = vmatpush.msra.mxu0 %v3107
    %4954 = vmatmul.f32.gmra.mxu0 %v2711
    %v4955 = vpop.f32.mrf.mxu0
    %v4956 = vadd.f32 %v4936, %v4955
    %4957 = vdwg.mxu0
    %4958 = vmatpush.msra.mxu0 %v3355
    %4959 = vmatpush.msra.mxu0 %v3347
    %4960 = vmatpush.msra.mxu0 %v3339
    %4961 = vmatpush.msra.mxu0 %v3331
    %4962 = vmatpush.msra.mxu0 %v3323
    %4963 = vmatpush.msra.mxu0 %v3315
    %4964 = vmatpush.msra.mxu0 %v3307
    %4965 = vmatpush.msra.mxu0 %v3299
    %4966 = vmatpush.msra.mxu0 %v3291
    %4967 = vmatpush.msra.mxu0 %v3283
    %4968 = vmatpush.msra.mxu0 %v3275
    %4969 = vmatpush.msra.mxu0 %v3267
    %4970 = vmatpush.msra.mxu0 %v3259
    %4971 = vmatpush.msra.mxu0 %v3251
    %4972 = vmatpush.msra.mxu0 %v3243
    %4973 = vmatpush.msra.mxu0 %v3235
    %4974 = vmatmul.f32.gmra.mxu0 %v2712
    %v4975 = vpop.f32.mrf.mxu0
    %v4976 = vadd.f32 %v4956, %v4975
    %4977 = vdwg.mxu0
    %4978 = vmatpush.msra.mxu0 %v3483
    %4979 = vmatpush.msra.mxu0 %v3475
    %4980 = vmatpush.msra.mxu0 %v3467
    %4981 = vmatpush.msra.mxu0 %v3459
    %4982 = vmatpush.msra.mxu0 %v3451
    %4983 = vmatpush.msra.mxu0 %v3443
    %4984 = vmatpush.msra.mxu0 %v3435
    %4985 = vmatpush.msra.mxu0 %v3427
    %4986 = vmatpush.msra.mxu0 %v3419
    %4987 = vmatpush.msra.mxu0 %v3411
    %4988 = vmatpush.msra.mxu0 %v3403
    %4989 = vmatpush.msra.mxu0 %v3395
    %4990 = vmatpush.msra.mxu0 %v3387
    %4991 = vmatpush.msra.mxu0 %v3379
    %4992 = vmatpush.msra.mxu0 %v3371
    %4993 = vmatpush.msra.mxu0 %v3363
    %4994 = vmatmul.f32.gmra.mxu0 %v2713
    %v4995 = vpop.f32.mrf.mxu0
    %v4996 = vadd.f32 %v4976, %v4995
    %4997 = vdwg.mxu0
    %4998 = vmatpush.msra.mxu0 %v3611
    %4999 = vmatpush.msra.mxu0 %v3603
    %5000 = vmatpush.msra.mxu0 %v3595
    %5001 = vmatpush.msra.mxu0 %v3587
    %5002 = vmatpush.msra.mxu0 %v3579
    %5003 = vmatpush.msra.mxu0 %v3571
    %5004 = vmatpush.msra.mxu0 %v3563
    %5005 = vmatpush.msra.mxu0 %v3555
    %5006 = vmatpush.msra.mxu0 %v3547
    %5007 = vmatpush.msra.mxu0 %v3539
    %5008 = vmatpush.msra.mxu0 %v3531
    %5009 = vmatpush.msra.mxu0 %v3523
    %5010 = vmatpush.msra.mxu0 %v3515
    %5011 = vmatpush.msra.mxu0 %v3507
    %5012 = vmatpush.msra.mxu0 %v3499
    %5013 = vmatpush.msra.mxu0 %v3491
    %5014 = vmatmul.f32.gmra.mxu0 %v2714
    %v5015 = vpop.f32.mrf.mxu0
    %v5016 = vadd.f32 %v4996, %v5015
    %5017 = vdwg.mxu0
    %5018 = vmatpush.msra.mxu0 %v3739
    %5019 = vmatpush.msra.mxu0 %v3731
    %5020 = vmatpush.msra.mxu0 %v3723
    %5021 = vmatpush.msra.mxu0 %v3715
    %5022 = vmatpush.msra.mxu0 %v3707
    %5023 = vmatpush.msra.mxu0 %v3699
    %5024 = vmatpush.msra.mxu0 %v3691
    %5025 = vmatpush.msra.mxu0 %v3683
    %5026 = vmatpush.msra.mxu0 %v3675
    %5027 = vmatpush.msra.mxu0 %v3667
    %5028 = vmatpush.msra.mxu0 %v3659
    %5029 = vmatpush.msra.mxu0 %v3651
    %5030 = vmatpush.msra.mxu0 %v3643
    %5031 = vmatpush.msra.mxu0 %v3635
    %5032 = vmatpush.msra.mxu0 %v3627
    %5033 = vmatpush.msra.mxu0 %v3619
    %5034 = vmatmul.f32.gmra.mxu0 %v2715
    %v5035 = vpop.f32.mrf.mxu0
    %v5036 = vadd.f32 %v5016, %v5035
    %5037 = vdwg.mxu0
    %v5038 = vld [vmem:[#allocation14] sm:$0xff]
    %v5039 = vld [vmem:[#allocation14 + $0x8] sm:$0xff]
    %v5040 = vld [vmem:[#allocation14 + $0x10] sm:$0xff]
    %v5041 = vld [vmem:[#allocation14 + $0x18] sm:$0xff]
    %v5042 = vld [vmem:[#allocation14 + $0x20] sm:$0xff]
    %v5043 = vld [vmem:[#allocation14 + $0x28] sm:$0xff]
    %v5044 = vld [vmem:[#allocation14 + $0x30] sm:$0xff]
    %v5045 = vld [vmem:[#allocation14 + $0x38] sm:$0xff]
    %v5046 = vld [vmem:[#allocation14 + $0x40] sm:$0xff]
    %v5047 = vld [vmem:[#allocation14 + $0x48] sm:$0xff]
    %v5048 = vld [vmem:[#allocation14 + $0x50] sm:$0xff]
    %v5049 = vld [vmem:[#allocation14 + $0x58] sm:$0xff]
    %v5050 = vld [vmem:[#allocation14 + $0x60] sm:$0xff]
    %v5051 = vld [vmem:[#allocation14 + $0x68] sm:$0xff]
    %v5052 = vld [vmem:[#allocation14 + $0x70] sm:$0xff]
    %v5053 = vld [vmem:[#allocation14 + $0x78] sm:$0xff]
    %v5054 = vld [vmem:[#allocation14 + $0x80] sm:$0xff]
    %v5055 = vld [vmem:[#allocation14 + $0x88] sm:$0xff]
    %v5056 = vld [vmem:[#allocation14 + $0x90] sm:$0xff]
    %v5057 = vld [vmem:[#allocation14 + $0x98] sm:$0xff]
    %v5058 = vld [vmem:[#allocation14 + $0xa0] sm:$0xff]
    %v5059 = vld [vmem:[#allocation14 + $0xa8] sm:$0xff]
    %v5060 = vld [vmem:[#allocation14 + $0xb0] sm:$0xff]
    %v5061 = vld [vmem:[#allocation14 + $0xb8] sm:$0xff]
    %v5062 = vld [vmem:[#allocation14 + $0xc0] sm:$0xff]
    %v5063 = vld [vmem:[#allocation14 + $0xc8] sm:$0xff]
    %v5064 = vld [vmem:[#allocation14 + $0xd0] sm:$0xff]
    %v5065 = vld [vmem:[#allocation14 + $0xd8] sm:$0xff]
    %v5066 = vld [vmem:[#allocation14 + $0xe0] sm:$0xff]
    %v5067 = vld [vmem:[#allocation14 + $0xe8] sm:$0xff]
    %v5068 = vld [vmem:[#allocation14 + $0xf0] sm:$0xff]
    %v5069 = vld [vmem:[#allocation14 + $0xf8] sm:$0xff]
    %v5070 = vld [vmem:[#allocation14 + $0x100] sm:$0xff]
    %v5071 = vld [vmem:[#allocation14 + $0x108] sm:$0xff]
    %v5072 = vld [vmem:[#allocation14 + $0x110] sm:$0xff]
    %v5073 = vld [vmem:[#allocation14 + $0x118] sm:$0xff]
    %v5074 = vld [vmem:[#allocation14 + $0x120] sm:$0xff]
    %v5075 = vld [vmem:[#allocation14 + $0x128] sm:$0xff]
    %v5076 = vld [vmem:[#allocation14 + $0x130] sm:$0xff]
    %v5077 = vld [vmem:[#allocation14 + $0x138] sm:$0xff]
    %v5078 = vld [vmem:[#allocation14 + $0x140] sm:$0xff]
    %v5079 = vld [vmem:[#allocation14 + $0x148] sm:$0xff]
    %v5080 = vld [vmem:[#allocation14 + $0x150] sm:$0xff]
    %v5081 = vld [vmem:[#allocation14 + $0x158] sm:$0xff]
    %v5082 = vld [vmem:[#allocation14 + $0x160] sm:$0xff]
    %v5083 = vld [vmem:[#allocation14 + $0x168] sm:$0xff]
    %v5084 = vld [vmem:[#allocation14 + $0x170] sm:$0xff]
    %v5085 = vld [vmem:[#allocation14 + $0x178] sm:$0xff]
    %v5086 = vld [vmem:[#allocation14 + $0x180] sm:$0xff]
    %v5087 = vld [vmem:[#allocation14 + $0x188] sm:$0xff]
    %v5088 = vld [vmem:[#allocation14 + $0x190] sm:$0xff]
    %v5089 = vld [vmem:[#allocation14 + $0x198] sm:$0xff]
    %v5090 = vld [vmem:[#allocation14 + $0x1a0] sm:$0xff]
    %v5091 = vld [vmem:[#allocation14 + $0x1a8] sm:$0xff]
    %v5092 = vld [vmem:[#allocation14 + $0x1b0] sm:$0xff]
    %v5093 = vld [vmem:[#allocation14 + $0x1b8] sm:$0xff]
    %v5094 = vld [vmem:[#allocation14 + $0x1c0] sm:$0xff]
    %v5095 = vld [vmem:[#allocation14 + $0x1c8] sm:$0xff]
    %v5096 = vld [vmem:[#allocation14 + $0x1d0] sm:$0xff]
    %v5097 = vld [vmem:[#allocation14 + $0x1d8] sm:$0xff]
    %v5098 = vld [vmem:[#allocation14 + $0x1e0] sm:$0xff]
    %v5099 = vld [vmem:[#allocation14 + $0x1e8] sm:$0xff]
    %v5100 = vld [vmem:[#allocation14 + $0x1f0] sm:$0xff]
    %v5101 = vld [vmem:[#allocation14 + $0x1f8] sm:$0xff]
    %v5102 = vld [vmem:[#allocation14 + $0x200] sm:$0xff]
    %v5103 = vld [vmem:[#allocation14 + $0x208] sm:$0xff]
    %v5104 = vld [vmem:[#allocation14 + $0x210] sm:$0xff]
    %v5105 = vld [vmem:[#allocation14 + $0x218] sm:$0xff]
    %v5106 = vld [vmem:[#allocation14 + $0x220] sm:$0xff]
    %v5107 = vld [vmem:[#allocation14 + $0x228] sm:$0xff]
    %v5108 = vld [vmem:[#allocation14 + $0x230] sm:$0xff]
    %v5109 = vld [vmem:[#allocation14 + $0x238] sm:$0xff]
    %v5110 = vld [vmem:[#allocation14 + $0x240] sm:$0xff]
    %v5111 = vld [vmem:[#allocation14 + $0x248] sm:$0xff]
    %v5112 = vld [vmem:[#allocation14 + $0x250] sm:$0xff]
    %v5113 = vld [vmem:[#allocation14 + $0x258] sm:$0xff]
    %v5114 = vld [vmem:[#allocation14 + $0x260] sm:$0xff]
    %v5115 = vld [vmem:[#allocation14 + $0x268] sm:$0xff]
    %v5116 = vld [vmem:[#allocation14 + $0x270] sm:$0xff]
    %v5117 = vld [vmem:[#allocation14 + $0x278] sm:$0xff]
    %v5118 = vld [vmem:[#allocation14 + $0x280] sm:$0xff]
    %v5119 = vld [vmem:[#allocation14 + $0x288] sm:$0xff]
    %v5120 = vld [vmem:[#allocation14 + $0x290] sm:$0xff]
    %v5121 = vld [vmem:[#allocation14 + $0x298] sm:$0xff]
    %v5122 = vld [vmem:[#allocation14 + $0x2a0] sm:$0xff]
    %v5123 = vld [vmem:[#allocation14 + $0x2a8] sm:$0xff]
    %v5124 = vld [vmem:[#allocation14 + $0x2b0] sm:$0xff]
    %v5125 = vld [vmem:[#allocation14 + $0x2b8] sm:$0xff]
    %v5126 = vld [vmem:[#allocation14 + $0x2c0] sm:$0xff]
    %v5127 = vld [vmem:[#allocation14 + $0x2c8] sm:$0xff]
    %v5128 = vld [vmem:[#allocation14 + $0x2d0] sm:$0xff]
    %v5129 = vld [vmem:[#allocation14 + $0x2d8] sm:$0xff]
    %v5130 = vld [vmem:[#allocation14 + $0x2e0] sm:$0xff]
    %v5131 = vld [vmem:[#allocation14 + $0x2e8] sm:$0xff]
    %v5132 = vld [vmem:[#allocation14 + $0x2f0] sm:$0xff]
    %v5133 = vld [vmem:[#allocation14 + $0x2f8] sm:$0xff]
    %v5134 = vld [vmem:[#allocation14 + $0x300] sm:$0xff]
    %v5135 = vld [vmem:[#allocation14 + $0x308] sm:$0xff]
    %v5136 = vld [vmem:[#allocation14 + $0x310] sm:$0xff]
    %v5137 = vld [vmem:[#allocation14 + $0x318] sm:$0xff]
    %v5138 = vld [vmem:[#allocation14 + $0x320] sm:$0xff]
    %v5139 = vld [vmem:[#allocation14 + $0x328] sm:$0xff]
    %v5140 = vld [vmem:[#allocation14 + $0x330] sm:$0xff]
    %v5141 = vld [vmem:[#allocation14 + $0x338] sm:$0xff]
    %v5142 = vld [vmem:[#allocation14 + $0x340] sm:$0xff]
    %v5143 = vld [vmem:[#allocation14 + $0x348] sm:$0xff]
    %v5144 = vld [vmem:[#allocation14 + $0x350] sm:$0xff]
    %v5145 = vld [vmem:[#allocation14 + $0x358] sm:$0xff]
    %v5146 = vld [vmem:[#allocation14 + $0x360] sm:$0xff]
    %v5147 = vld [vmem:[#allocation14 + $0x368] sm:$0xff]
    %v5148 = vld [vmem:[#allocation14 + $0x370] sm:$0xff]
    %v5149 = vld [vmem:[#allocation14 + $0x378] sm:$0xff]
    %v5150 = vld [vmem:[#allocation14 + $0x380] sm:$0xff]
    %v5151 = vld [vmem:[#allocation14 + $0x388] sm:$0xff]
    %v5152 = vld [vmem:[#allocation14 + $0x390] sm:$0xff]
    %v5153 = vld [vmem:[#allocation14 + $0x398] sm:$0xff]
    %v5154 = vld [vmem:[#allocation14 + $0x3a0] sm:$0xff]
    %v5155 = vld [vmem:[#allocation14 + $0x3a8] sm:$0xff]
    %v5156 = vld [vmem:[#allocation14 + $0x3b0] sm:$0xff]
    %v5157 = vld [vmem:[#allocation14 + $0x3b8] sm:$0xff]
    %v5158 = vld [vmem:[#allocation14 + $0x3c0] sm:$0xff]
    %v5159 = vld [vmem:[#allocation14 + $0x3c8] sm:$0xff]
    %v5160 = vld [vmem:[#allocation14 + $0x3d0] sm:$0xff]
    %v5161 = vld [vmem:[#allocation14 + $0x3d8] sm:$0xff]
    %v5162 = vld [vmem:[#allocation14 + $0x3e0] sm:$0xff]
    %v5163 = vld [vmem:[#allocation14 + $0x3e8] sm:$0xff]
    %v5164 = vld [vmem:[#allocation14 + $0x3f0] sm:$0xff]
    %v5165 = vld [vmem:[#allocation14 + $0x3f8] sm:$0xff]
    %v5166 = vld [vmem:[#allocation16] sm:$0x1]
    %v5168 = vperm.slane %v5166, 0
    %5170 = vmatpush.msra.mxu0 %v5053
    %5171 = vmatpush.msra.mxu0 %v5052
    %5172 = vmatpush.msra.mxu0 %v5051
    %5173 = vmatpush.msra.mxu0 %v5050
    %5174 = vmatpush.msra.mxu0 %v5049
    %5175 = vmatpush.msra.mxu0 %v5048
    %5176 = vmatpush.msra.mxu0 %v5047
    %5177 = vmatpush.msra.mxu0 %v5046
    %5178 = vmatpush.msra.mxu0 %v5045
    %5179 = vmatpush.msra.mxu0 %v5044
    %5180 = vmatpush.msra.mxu0 %v5043
    %5181 = vmatpush.msra.mxu0 %v5042
    %5182 = vmatpush.msra.mxu0 %v5041
    %5183 = vmatpush.msra.mxu0 %v5040
    %5184 = vmatpush.msra.mxu0 %v5039
    %5185 = vmatpush.msra.mxu0 %v5038
    %5186 = vmatmul.f32.gmra.mxu0 %v3916
    %v5187 = vpop.f32.mrf.mxu0
    %v5188 = vadd.f32 %v5168, %v5187
    %5189 = vdwg.mxu0
    %5190 = vmatpush.msra.mxu0 %v5069
    %5191 = vmatpush.msra.mxu0 %v5068
    %5192 = vmatpush.msra.mxu0 %v5067
    %5193 = vmatpush.msra.mxu0 %v5066
    %5194 = vmatpush.msra.mxu0 %v5065
    %5195 = vmatpush.msra.mxu0 %v5064
    %5196 = vmatpush.msra.mxu0 %v5063
    %5197 = vmatpush.msra.mxu0 %v5062
    %5198 = vmatpush.msra.mxu0 %v5061
    %5199 = vmatpush.msra.mxu0 %v5060
    %5200 = vmatpush.msra.mxu0 %v5059
    %5201 = vmatpush.msra.mxu0 %v5058
    %5202 = vmatpush.msra.mxu0 %v5057
    %5203 = vmatpush.msra.mxu0 %v5056
    %5204 = vmatpush.msra.mxu0 %v5055
    %5205 = vmatpush.msra.mxu0 %v5054
    %5206 = vmatmul.f32.gmra.mxu0 %v4076
    %v5207 = vpop.f32.mrf.mxu0
    %v5208 = vadd.f32 %v5188, %v5207
    %5209 = vdwg.mxu0
    %5210 = vmatpush.msra.mxu0 %v5085
    %5211 = vmatpush.msra.mxu0 %v5084
    %5212 = vmatpush.msra.mxu0 %v5083
    %5213 = vmatpush.msra.mxu0 %v5082
    %5214 = vmatpush.msra.mxu0 %v5081
    %5215 = vmatpush.msra.mxu0 %v5080
    %5216 = vmatpush.msra.mxu0 %v5079
    %5217 = vmatpush.msra.mxu0 %v5078
    %5218 = vmatpush.msra.mxu0 %v5077
    %5219 = vmatpush.msra.mxu0 %v5076
    %5220 = vmatpush.msra.mxu0 %v5075
    %5221 = vmatpush.msra.mxu0 %v5074
    %5222 = vmatpush.msra.mxu0 %v5073
    %5223 = vmatpush.msra.mxu0 %v5072
    %5224 = vmatpush.msra.mxu0 %v5071
    %5225 = vmatpush.msra.mxu0 %v5070
    %5226 = vmatmul.f32.gmra.mxu0 %v4236
    %v5227 = vpop.f32.mrf.mxu0
    %v5228 = vadd.f32 %v5208, %v5227
    %5229 = vdwg.mxu0
    %5230 = vmatpush.msra.mxu0 %v5101
    %5231 = vmatpush.msra.mxu0 %v5100
    %5232 = vmatpush.msra.mxu0 %v5099
    %5233 = vmatpush.msra.mxu0 %v5098
    %5234 = vmatpush.msra.mxu0 %v5097
    %5235 = vmatpush.msra.mxu0 %v5096
    %5236 = vmatpush.msra.mxu0 %v5095
    %5237 = vmatpush.msra.mxu0 %v5094
    %5238 = vmatpush.msra.mxu0 %v5093
    %5239 = vmatpush.msra.mxu0 %v5092
    %5240 = vmatpush.msra.mxu0 %v5091
    %5241 = vmatpush.msra.mxu0 %v5090
    %5242 = vmatpush.msra.mxu0 %v5089
    %5243 = vmatpush.msra.mxu0 %v5088
    %5244 = vmatpush.msra.mxu0 %v5087
    %5245 = vmatpush.msra.mxu0 %v5086
    %5246 = vmatmul.f32.gmra.mxu0 %v4396
    %v5247 = vpop.f32.mrf.mxu0
    %v5248 = vadd.f32 %v5228, %v5247
    %5249 = vdwg.mxu0
    %5250 = vmatpush.msra.mxu0 %v5117
    %5251 = vmatpush.msra.mxu0 %v5116
    %5252 = vmatpush.msra.mxu0 %v5115
    %5253 = vmatpush.msra.mxu0 %v5114
    %5254 = vmatpush.msra.mxu0 %v5113
    %5255 = vmatpush.msra.mxu0 %v5112
    %5256 = vmatpush.msra.mxu0 %v5111
    %5257 = vmatpush.msra.mxu0 %v5110
    %5258 = vmatpush.msra.mxu0 %v5109
    %5259 = vmatpush.msra.mxu0 %v5108
    %5260 = vmatpush.msra.mxu0 %v5107
    %5261 = vmatpush.msra.mxu0 %v5106
    %5262 = vmatpush.msra.mxu0 %v5105
    %5263 = vmatpush.msra.mxu0 %v5104
    %5264 = vmatpush.msra.mxu0 %v5103
    %5265 = vmatpush.msra.mxu0 %v5102
    %5266 = vmatmul.f32.gmra.mxu0 %v4556
    %v5267 = vpop.f32.mrf.mxu0
    %v5268 = vadd.f32 %v5248, %v5267
    %5269 = vdwg.mxu0
    %5270 = vmatpush.msra.mxu0 %v5133
    %5271 = vmatpush.msra.mxu0 %v5132
    %5272 = vmatpush.msra.mxu0 %v5131
    %5273 = vmatpush.msra.mxu0 %v5130
    %5274 = vmatpush.msra.mxu0 %v5129
    %5275 = vmatpush.msra.mxu0 %v5128
    %5276 = vmatpush.msra.mxu0 %v5127
    %5277 = vmatpush.msra.mxu0 %v5126
    %5278 = vmatpush.msra.mxu0 %v5125
    %5279 = vmatpush.msra.mxu0 %v5124
    %5280 = vmatpush.msra.mxu0 %v5123
    %5281 = vmatpush.msra.mxu0 %v5122
    %5282 = vmatpush.msra.mxu0 %v5121
    %5283 = vmatpush.msra.mxu0 %v5120
    %5284 = vmatpush.msra.mxu0 %v5119
    %5285 = vmatpush.msra.mxu0 %v5118
    %5286 = vmatmul.f32.gmra.mxu0 %v4716
    %v5287 = vpop.f32.mrf.mxu0
    %v5288 = vadd.f32 %v5268, %v5287
    %5289 = vdwg.mxu0
    %5290 = vmatpush.msra.mxu0 %v5149
    %5291 = vmatpush.msra.mxu0 %v5148
    %5292 = vmatpush.msra.mxu0 %v5147
    %5293 = vmatpush.msra.mxu0 %v5146
    %5294 = vmatpush.msra.mxu0 %v5145
    %5295 = vmatpush.msra.mxu0 %v5144
    %5296 = vmatpush.msra.mxu0 %v5143
    %5297 = vmatpush.msra.mxu0 %v5142
    %5298 = vmatpush.msra.mxu0 %v5141
    %5299 = vmatpush.msra.mxu0 %v5140
    %5300 = vmatpush.msra.mxu0 %v5139
    %5301 = vmatpush.msra.mxu0 %v5138
    %5302 = vmatpush.msra.mxu0 %v5137
    %5303 = vmatpush.msra.mxu0 %v5136
    %5304 = vmatpush.msra.mxu0 %v5135
    %5305 = vmatpush.msra.mxu0 %v5134
    %5306 = vmatmul.f32.gmra.mxu0 %v4876
    %v5307 = vpop.f32.mrf.mxu0
    %v5308 = vadd.f32 %v5288, %v5307
    %5309 = vdwg.mxu0
    %5310 = vmatpush.msra.mxu0 %v5165
    %5311 = vmatpush.msra.mxu0 %v5164
    %5312 = vmatpush.msra.mxu0 %v5163
    %5313 = vmatpush.msra.mxu0 %v5162
    %5314 = vmatpush.msra.mxu0 %v5161
    %5315 = vmatpush.msra.mxu0 %v5160
    %5316 = vmatpush.msra.mxu0 %v5159
    %5317 = vmatpush.msra.mxu0 %v5158
    %5318 = vmatpush.msra.mxu0 %v5157
    %5319 = vmatpush.msra.mxu0 %v5156
    %5320 = vmatpush.msra.mxu0 %v5155
    %5321 = vmatpush.msra.mxu0 %v5154
    %5322 = vmatpush.msra.mxu0 %v5153
    %5323 = vmatpush.msra.mxu0 %v5152
    %5324 = vmatpush.msra.mxu0 %v5151
    %5325 = vmatpush.msra.mxu0 %v5150
    %5326 = vmatmul.f32.gmra.mxu0 %v5036
    %v5327 = vpop.f32.mrf.mxu0
    %v5328 = vadd.f32 %v5308, %v5327
    %5329 = vdwg.mxu0
    %5330 = vst [vmem:[#allocation17] sm:$0xff] %v5328
    // Predicated region
    $region74: #{tpu_custom_call.1} parent=1 // pred_check
      _
    $region75: #{tpu_custom_call.1} parent=1 // pred_check_branch
      %5332 = sbr.rel (0) target = $region77
    $region76: #{tpu_custom_call.1} parent=1 // pred_region
      %5334 = vsyncadd [#allocation4], 0
      %s5336 = sshll.u32 [#allocation17], 4
      %s5337 = int_to_ptr.vmem [resolvable:$true] %s5336
      %s5338 = sshll.u32 %s9, 4
      %s5339 = int_to_ptr.hbm [resolvable:$true] %s5338
      %5341 = dma.vmem_to_hbm [thread:$0]  %s5337, 128, %s5339, [#allocation4]
    $region77: #{tpu_custom_call.1} parent=1 // pred_fallthru
      _
    // Predicated region
    $region78: #{tpu_custom_call.1} parent=1 // pred_check
      _
    $region79: #{tpu_custom_call.1} parent=1 // pred_check_branch
      %5343 = sbr.rel (0) target = $region81
    $region80: #{tpu_custom_call.1} parent=1 // pred_region
      %5345 = dma.done [#allocation4], 128
    $region81: #{tpu_custom_call.1} parent=1 // pred_fallthru
      _
    %5346 = vsyncpa [#allocation3], 1
    %5347 = vsyncpa [#allocation6], 1
    %5348 = vsyncpa [#allocation9], 1
    %5349 = vsyncpa [#allocation12], 1
    %5350 = vsyncpa [#allocation15], 1
    %5351 = vsyncpa [#allocation4], 1

</llo_original>
